<compile_context>
chip_gen: v7x
topology: tpu7x:2x2x1
jax: 0.10.0
libtpu: 0.0.40
codegen_flags: <defaults>
</compile_context>

<pallas_src>
import functools

import jax
import jax.numpy as jnp
import numpy as np
from jax import lax
from jax.experimental import pallas as pl
from jax.experimental.pallas import tpu as pltpu

BN_EPS = 1e-5
COUT_PAD = 128  # lane-dense padded output channel count (num_classes + 4 <= 128)


# ----------------------------------------------------------------------------
# Small host-side helpers
# ----------------------------------------------------------------------------
def _vmem_limit_bytes():
    """Per-generation scoped-VMEM limit (the kernels only need a few MiB)."""
    try:
        cap = pltpu.get_tpu_info().vmem_capacity_bytes
    except Exception:  # pragma: no cover - conservative fallback
        cap = 64 * 1024 * 1024
    return int(min(cap // 2, 32 * 1024 * 1024))


def _pick_row_tile_h(H, W, target_rows=512):
    """Feature-map rows per kernel-1 grid step.

    Whole image when small (no halo row is ever read twice); otherwise the
    largest divisor of H keeping TH*W near `target_rows` so the MXU M dim is
    well filled while the (TH+2, W+2, Cin) bf16 window stays ~100 KB."""
    if H * W <= 2 * target_rows:
        return H
    cap = max(1, target_rows // max(W, 1))
    th = 1
    for d in range(1, min(H, cap) + 1):
        if H % d == 0:
            th = d
    return th


def _pick_out_rows(total_rows):
    """Kernel-2 row tile: 1024 for big problems, ~half the rows (multiple of 8)
    for small ones so both v7x TensorCores still get work."""
    if total_rows >= 2048:
        return 1024
    r = -(-total_rows // 2)                 # cdiv(total, 2)
    r = max(8, ((r + 7) // 8) * 8)
    return min(r, ((total_rows + 7) // 8) * 8)


# ----------------------------------------------------------------------------
# Kernel 1: fused 3x3 conv (bf16 im2col, one MXU dot) + BN partial statistics
# ----------------------------------------------------------------------------
def _conv3x3_stats_kernel(TH, W, Cin, a_ref, b0_ref, b1_ref, w_ref,
                          hid_ref, stats_ref, win_ref):
    """One row-tile of the fused 3x3 conv over all three heads.

    a_ref   : (1, TH, W+2, Cin)   bf16  body rows of the padded NHWC input
    b0_ref  : (1, 1, W+2, Cin)    bf16  bottom halo row 0
    b1_ref  : (1, 1, W+2, Cin)    bf16  bottom halo row 1
    w_ref   : (9*Cin, 3*hidden)   bf16  im2col-ordered 3x3 weights (all heads)
    hid_ref : (1, 1, TH*W, Ch)    bf16  conv output (pre-BN)
    stats_ref:(1, 1, 2, Ch)       f32   per-channel [sum, sum-of-squares]
    win_ref : (TH+2, W+2, Cin)    bf16  VMEM scratch halo window
    """
    # Assemble the contiguous halo window in VMEM (no HBM duplication).
    win_ref[0:TH] = a_ref[0]
    win_ref[TH] = b0_ref[0, 0]
    win_ref[TH + 1] = b1_ref[0, 0]

    # bf16 im2col patch: 9 shifted views -> (TH*W, 9*Cin), single MXU dot with
    # f32 accumulation (no VMEM accumulator round-trips, no f32 activation
    # casts).
    cols = []
    for dy in range(3):
        for dx in range(3):
            cols.append(win_ref[dy:dy + TH, dx:dx + W, :].reshape(TH * W, Cin))
    patch = jnp.concatenate(cols, axis=1)                       # (TH*W, 9*Cin) bf16

    acc = jnp.dot(patch, w_ref[...], preferred_element_type=jnp.float32)

    hid_ref[0, 0] = acc.astype(hid_ref.dtype)
    ssum = jnp.sum(acc, axis=0, keepdims=True)
    ssq = jnp.sum(acc * acc, axis=0, keepdims=True)
    stats_ref[0, 0] = jnp.concatenate([ssum, ssq], axis=0)


# ----------------------------------------------------------------------------
# Kernel 2: BN apply + ReLU + block-diagonal 1x1 conv (+ sigmoid on cls cols)
# ----------------------------------------------------------------------------
def _bn_relu_1x1_kernel(num_classes, hid_ref, scale_ref, shift_ref,
                        w1_ref, b1_ref, out_ref):
    """hid_ref : (R, Ch) bf16    pre-BN hidden from kernel 1
    scale/shift: (1, Ch) f32     folded BN affine
    w1_ref  : (Ch, 128)  bf16    block-diagonal 1x1 weights (all heads, padded)
    b1_ref  : (1, 128)   f32
    out_ref : (R, 128)   f32     lane-dense output slab
    """
    y = hid_ref[...].astype(jnp.float32) * scale_ref[...] + shift_ref[...]
    y = jnp.maximum(y, 0.0)
    out = jnp.dot(y.astype(jnp.bfloat16), w1_ref[...],
                  preferred_element_type=jnp.float32) + b1_ref[...]
    col = lax.broadcasted_iota(jnp.int32, out.shape, 1)
    out_ref[...] = jnp.where(col < num_classes, jax.nn.sigmoid(out), out)


# ----------------------------------------------------------------------------
# Fused forward: all three heads in two gridded pallas_calls
# ----------------------------------------------------------------------------
def efficientnet_head_forward(params, x):
    """x: (N, 64, H, W) NCHW f32. Returns (hm, wh, offset) in NCHW."""
    N, Cin, H, W = x.shape
    hid_ch = params["cls"]["w3"].shape[0]          # 64
    nc = params["cls"]["w1"].shape[0]              # num_classes
    Ch = 3 * hid_ch                                # 192 fused hidden channels
    assert nc + 4 <= COUT_PAD, "num_classes too large for the padded output slab"

    TH = _pick_row_tile_h(H, W)
    nH = H // TH
    rows_t = TH * W
    Wp = W + 2
    vmem_limit = _vmem_limit_bytes()

    # NCHW -> NHWC once, bf16, zero pad H and W by 1.  Overlapping conv windows
    # are read straight out of this array by the BlockSpecs below; no halo-tile
    # copy is materialized in HBM.
    xp = jnp.pad(jnp.transpose(x, (0, 2, 3, 1)).astype(jnp.bfloat16),
                 ((0, 0), (1, 1), (1, 1), (0, 0)))              # (N, H+2, W+2, Cin)

    # ---- fused weights ----
    heads = ("cls", "wh", "reg")
    w3_all = jnp.concatenate([params[h]["w3"] for h in heads], axis=0)   # (Ch,Cin,3,3)
    w3k = jnp.transpose(w3_all, (2, 3, 1, 0)).reshape(9 * Cin, Ch).astype(jnp.bfloat16)
    gamma = jnp.concatenate([params[h]["gamma"] for h in heads])
    beta = jnp.concatenate([params[h]["beta"] for h in heads])

    couts = (nc, 2, 2)
    w1 = jnp.zeros((Ch, COUT_PAD), jnp.float32)
    b1 = jnp.zeros((1, COUT_PAD), jnp.float32)
    col = 0
    for i, h in enumerate(heads):
        wi = params[h]["w1"].reshape(couts[i], hid_ch).T                 # (hid, cout_i)
        w1 = w1.at[i * hid_ch:(i + 1) * hid_ch, col:col + couts[i]].set(wi)
        b1 = b1.at[0, col:col + couts[i]].set(params[h]["b1"])
        col += couts[i]
    w1 = w1.astype(jnp.bfloat16)

    # ---- kernel 1: fused 3x3 conv + BN partial stats ----
    k1 = functools.partial(_conv3x3_stats_kernel, TH, W, Cin)
    hidden, stats = pl.pallas_call(
        k1,
        grid=(N, nH),
        in_specs=[
            # body rows [i*TH, i*TH+TH) of the padded image
            pl.BlockSpec((1, TH, Wp, Cin), lambda n, i: (n, i, 0, 0)),
            # the two extra halo rows just below the body block
            pl.BlockSpec((1, 1, Wp, Cin), lambda n, i: (n, (i + 1) * TH, 0, 0)),
            pl.BlockSpec((1, 1, Wp, Cin), lambda n, i: (n, (i + 1) * TH + 1, 0, 0)),
            pl.BlockSpec((9 * Cin, Ch), lambda n, i: (0, 0)),
        ],
        out_specs=(
            pl.BlockSpec((1, 1, rows_t, Ch), lambda n, i: (n, i, 0, 0)),
            pl.BlockSpec((1, 1, 2, Ch), lambda n, i: (n, i, 0, 0)),
        ),
        out_shape=(
            jax.ShapeDtypeStruct((N, nH, rows_t, Ch), jnp.bfloat16),
            jax.ShapeDtypeStruct((N, nH, 2, Ch), jnp.float32),
        ),
        scratch_shapes=[pltpu.VMEM((TH + 2, Wp, Cin), jnp.bfloat16)],
        compiler_params=pltpu.CompilerParams(
            dimension_semantics=("parallel", "parallel"),
            vmem_limit_bytes=vmem_limit),
    )(xp, xp, xp, w3k)

    # ---- BN statistics -> folded scale/shift (tiny, stays in XLA) ----
    count = float(N * H * W)
    ssum = jnp.sum(stats[:, :, 0, :], axis=(0, 1))
    ssq = jnp.sum(stats[:, :, 1, :], axis=(0, 1))
    mean = ssum / count
    var = jnp.maximum(ssq / count - mean * mean, 0.0)    # biased training-mode var
    inv = lax.rsqrt(var + BN_EPS)
    scale = (gamma * inv).reshape(1, Ch).astype(jnp.float32)
    shift = (beta - mean * gamma * inv).reshape(1, Ch).astype(jnp.float32)

    # ---- kernel 2: BN apply + ReLU + block-diag 1x1 (+ sigmoid on cls cols) ----
    total_rows = N * H * W
    hidden2d = hidden.reshape(total_rows, Ch)            # row order == (n, h, w)
    R = _pick_out_rows(total_rows)
    g2 = (total_rows + R - 1) // R                       # cdiv grid, masked tail
    k2 = functools.partial(_bn_relu_1x1_kernel, nc)
    out2d = pl.pallas_call(
        k2,
        grid=(g2,),
        in_specs=[
            pl.BlockSpec((R, Ch), lambda i: (i, 0)),
            pl.BlockSpec((1, Ch), lambda i: (0, 0)),
            pl.BlockSpec((1, Ch), lambda i: (0, 0)),
            pl.BlockSpec((Ch, COUT_PAD), lambda i: (0, 0)),
            pl.BlockSpec((1, COUT_PAD), lambda i: (0, 0)),
        ],
        out_specs=pl.BlockSpec((R, COUT_PAD), lambda i: (i, 0)),
        out_shape=jax.ShapeDtypeStruct((total_rows, COUT_PAD), jnp.float32),
        compiler_params=pltpu.CompilerParams(
            dimension_semantics=("parallel",),
            vmem_limit_bytes=vmem_limit),
    )(hidden2d, scale, shift, w1, b1)

    # ---- lane-dense slab -> NCHW heads ----
    out = jnp.transpose(out2d.reshape(N, H, W, COUT_PAD), (0, 3, 1, 2))
    hm = out[:, :nc]
    wh = out[:, nc:nc + 2]
    offset = out[:, nc + 2:nc + 4]
    return hm, wh, offset


# ----------------------------------------------------------------------------
# Parameter init (matches the PyTorch module layout)
# ----------------------------------------------------------------------------
def init_head_params(key, num_classes=80, hidden_channels=64, in_channels=64):
    def one_head(k, cout):
        k1, k2, k3 = jax.random.split(k, 3)
        return {
            "w3": 0.05 * jax.random.normal(k1, (hidden_channels, in_channels, 3, 3), jnp.float32),
            "gamma": jnp.ones((hidden_channels,), jnp.float32),
            "beta": jnp.zeros((hidden_channels,), jnp.float32),
            "w1": 0.05 * jax.random.normal(k2, (cout, hidden_channels, 1, 1), jnp.float32),
            "b1": 0.05 * jax.random.normal(k3, (cout,), jnp.float32),
        }

    kc, kw, kr = jax.random.split(key, 3)
    return {
        "cls": one_head(kc, num_classes),
        "wh": one_head(kw, 2),
        "reg": one_head(kr, 2),
    }


# ----------------------------------------------------------------------------
# Pure-JAX reference (f32, NCHW) for correctness checking
# ----------------------------------------------------------------------------
def _ref_head(x, p, apply_sigmoid):
    y = lax.conv_general_dilated(x, p["w3"], (1, 1), "SAME",
                                 dimension_numbers=("NCHW", "OIHW", "NCHW"),
                                 precision=lax.Precision.HIGHEST)
    mean = jnp.mean(y, axis=(0, 2, 3), keepdims=True)
    var = jnp.mean((y - mean) ** 2, axis=(0, 2, 3), keepdims=True)
    y = ((y - mean) * lax.rsqrt(var + BN_EPS) * p["gamma"].reshape(1, -1, 1, 1)
         + p["beta"].reshape(1, -1, 1, 1))
    y = jnp.maximum(y, 0.0)
    y = lax.conv_general_dilated(y, p["w1"], (1, 1), "VALID",
                                 dimension_numbers=("NCHW", "OIHW", "NCHW"),
                                 precision=lax.Precision.HIGHEST)
    y = y + p["b1"].reshape(1, -1, 1, 1)
    return jax.nn.sigmoid(y) if apply_sigmoid else y


if __name__ == "__main__":
    key = jax.random.PRNGKey(0)
    kx, kp = jax.random.split(key)

    # The module hard-wires 64 input channels; keep batch/spatial small.
    N, C, H, W = 2, 64, 16, 16
    num_classes = 80
    x = jax.random.normal(kx, (N, C, H, W), jnp.float32)
    params = init_head_params(kp, num_classes=num_classes, hidden_channels=64)

    fwd = jax.jit(efficientnet_head_forward)
    hm, wh, offset = fwd(params, x)
    jax.block_until_ready((hm, wh, offset))

    assert hm.shape == (N, num_classes, H, W)
    assert wh.shape == (N, 2, H, W)
    assert offset.shape == (N, 2, H, W)

    # Sanity-check against the pure-JAX f32 reference (bf16 MXU operands ->
    # relaxed tolerances).
    hm_r = _ref_head(x, params["cls"], True)
    wh_r = _ref_head(x, params["wh"], False)
    off_r = _ref_head(x, params["reg"], False)
    np.testing.assert_allclose(np.asarray(hm), np.asarray(hm_r), rtol=3e-2, atol=3e-2)
    np.testing.assert_allclose(np.asarray(wh), np.asarray(wh_r), rtol=3e-2, atol=3e-2)
    np.testing.assert_allclose(np.asarray(offset), np.asarray(off_r), rtol=3e-2, atol=3e-2)

    print("KERNEL_OK")
</pallas_src>

<mosaic_0001>
module attributes {stable_mosaic.version = 11 : i64} {
  func.func @_conv3x3_stats_kernel(%arg0: i32, %arg1: i32, %arg2: memref<1x16x18x64xbf16, #tpu.memory_space<vmem>>, %arg3: memref<1x1x18x64xbf16, #tpu.memory_space<vmem>>, %arg4: memref<1x1x18x64xbf16, #tpu.memory_space<vmem>>, %arg5: memref<576x192xbf16, #tpu.memory_space<vmem>>, %arg6: memref<1x1x256x192xbf16, #tpu.memory_space<vmem>>, %arg7: memref<1x1x2x192xf32, #tpu.memory_space<vmem>>, %arg8: memref<18x18x64xbf16, #tpu.memory_space<vmem>>) attributes {dimension_semantics = [#tpu.dimension_semantics<parallel>, #tpu.dimension_semantics<parallel>], iteration_bounds = array<i64: 2, 1>, scalar_prefetch = 0 : i64, scratch_operands = 1 : i64, tpu.core_type = #tpu.core_type<tc>, window_params = [{transform_indices = @transform_0, window_bounds = array<i64: 1, 16, 18, 64>}, {transform_indices = @transform_1, window_bounds = array<i64: 1, 1, 18, 64>}, {transform_indices = @transform_2, window_bounds = array<i64: 1, 1, 18, 64>}, {pipeline_mode = #tpu.pipeline_mode<synchronous>, transform_indices = @transform_3, window_bounds = array<i64: 576, 192>}, {transform_indices = @transform_4, window_bounds = array<i64: 1, 1, 256, 192>}, {transform_indices = @transform_5, window_bounds = array<i64: 1, 1, 2, 192>}]} {
    %c0 = arith.constant 0 : index
    %c0_0 = arith.constant 0 : index
    %c0_1 = arith.constant 0 : index
    %c0_2 = arith.constant 0 : index
    %0 = vector.load %arg2[%c0, %c0_0, %c0_1, %c0_2] : memref<1x16x18x64xbf16, #tpu.memory_space<vmem>>, vector<1x16x18x64xbf16>
    %1 = vector.shape_cast %0 : vector<1x16x18x64xbf16> to vector<16x18x64xbf16>
    %c0_3 = arith.constant 0 : index
    %c0_4 = arith.constant 0 : index
    %c0_5 = arith.constant 0 : index
    %2 = vector.load %arg8[%c0_3, %c0_4, %c0_5] : memref<18x18x64xbf16, #tpu.memory_space<vmem>>, vector<16x18x64xbf16>
    tpu.vector_store %arg8[%c0_3, %c0_4, %c0_5], %1 {strides = array<i32>} : memref<18x18x64xbf16, #tpu.memory_space<vmem>>, vector<16x18x64xbf16>,
    %c0_6 = arith.constant 0 : index
    %c0_7 = arith.constant 0 : index
    %c0_8 = arith.constant 0 : index
    %c0_9 = arith.constant 0 : index
    %3 = vector.load %arg3[%c0_6, %c0_7, %c0_8, %c0_9] : memref<1x1x18x64xbf16, #tpu.memory_space<vmem>>, vector<1x1x18x64xbf16>
    %4 = vector.shape_cast %3 : vector<1x1x18x64xbf16> to vector<18x64xbf16>
    %c16 = arith.constant 16 : index
    %c0_10 = arith.constant 0 : index
    %c0_11 = arith.constant 0 : index
    %5 = vector.load %arg8[%c16, %c0_10, %c0_11] : memref<18x18x64xbf16, #tpu.memory_space<vmem>>, vector<1x18x64xbf16>
    %6 = vector.shape_cast %5 : vector<1x18x64xbf16> to vector<18x64xbf16>
    %7 = vector.shape_cast %4 : vector<18x64xbf16> to vector<1x18x64xbf16>
    tpu.vector_store %arg8[%c16, %c0_10, %c0_11], %7 {strides = array<i32>} : memref<18x18x64xbf16, #tpu.memory_space<vmem>>, vector<1x18x64xbf16>,
    %c0_12 = arith.constant 0 : index
    %c0_13 = arith.constant 0 : index
    %c0_14 = arith.constant 0 : index
    %c0_15 = arith.constant 0 : index
    %8 = vector.load %arg4[%c0_12, %c0_13, %c0_14, %c0_15] : memref<1x1x18x64xbf16, #tpu.memory_space<vmem>>, vector<1x1x18x64xbf16>
    %9 = vector.shape_cast %8 : vector<1x1x18x64xbf16> to vector<18x64xbf16>
    %c17 = arith.constant 17 : index
    %c0_16 = arith.constant 0 : index
    %c0_17 = arith.constant 0 : index
    %10 = vector.load %arg8[%c17, %c0_16, %c0_17] : memref<18x18x64xbf16, #tpu.memory_space<vmem>>, vector<1x18x64xbf16>
    %11 = vector.shape_cast %10 : vector<1x18x64xbf16> to vector<18x64xbf16>
    %12 = vector.shape_cast %9 : vector<18x64xbf16> to vector<1x18x64xbf16>
    tpu.vector_store %arg8[%c17, %c0_16, %c0_17], %12 {strides = array<i32>} : memref<18x18x64xbf16, #tpu.memory_space<vmem>>, vector<1x18x64xbf16>,
    %c0_18 = arith.constant 0 : index
    %c0_19 = arith.constant 0 : index
    %c0_20 = arith.constant 0 : index
    %13 = vector.load %arg8[%c0_18, %c0_19, %c0_20] : memref<18x18x64xbf16, #tpu.memory_space<vmem>>, vector<16x16x64xbf16>
    %14 = vector.shape_cast %13 : vector<16x16x64xbf16> to vector<256x64xbf16>
    %c0_21 = arith.constant 0 : index
    %c1 = arith.constant 1 : index
    %c0_22 = arith.constant 0 : index
    %15 = vector.load %arg8[%c0_21, %c1, %c0_22] : memref<18x18x64xbf16, #tpu.memory_space<vmem>>, vector<16x16x64xbf16>
    %16 = vector.shape_cast %15 : vector<16x16x64xbf16> to vector<256x64xbf16>
    %c0_23 = arith.constant 0 : index
    %c2 = arith.constant 2 : index
    %c0_24 = arith.constant 0 : index
    %17 = vector.load %arg8[%c0_23, %c2, %c0_24] : memref<18x18x64xbf16, #tpu.memory_space<vmem>>, vector<16x16x64xbf16>
    %18 = vector.shape_cast %17 : vector<16x16x64xbf16> to vector<256x64xbf16>
    %c1_25 = arith.constant 1 : index
    %c0_26 = arith.constant 0 : index
    %c0_27 = arith.constant 0 : index
    %19 = vector.load %arg8[%c1_25, %c0_26, %c0_27] : memref<18x18x64xbf16, #tpu.memory_space<vmem>>, vector<16x16x64xbf16>
    %20 = vector.shape_cast %19 : vector<16x16x64xbf16> to vector<256x64xbf16>
    %c1_28 = arith.constant 1 : index
    %c1_29 = arith.constant 1 : index
    %c0_30 = arith.constant 0 : index
    %21 = vector.load %arg8[%c1_28, %c1_29, %c0_30] : memref<18x18x64xbf16, #tpu.memory_space<vmem>>, vector<16x16x64xbf16>
    %22 = vector.shape_cast %21 : vector<16x16x64xbf16> to vector<256x64xbf16>
    %c1_31 = arith.constant 1 : index
    %c2_32 = arith.constant 2 : index
    %c0_33 = arith.constant 0 : index
    %23 = vector.load %arg8[%c1_31, %c2_32, %c0_33] : memref<18x18x64xbf16, #tpu.memory_space<vmem>>, vector<16x16x64xbf16>
    %24 = vector.shape_cast %23 : vector<16x16x64xbf16> to vector<256x64xbf16>
    %c2_34 = arith.constant 2 : index
    %c0_35 = arith.constant 0 : index
    %c0_36 = arith.constant 0 : index
    %25 = vector.load %arg8[%c2_34, %c0_35, %c0_36] : memref<18x18x64xbf16, #tpu.memory_space<vmem>>, vector<16x16x64xbf16>
    %26 = vector.shape_cast %25 : vector<16x16x64xbf16> to vector<256x64xbf16>
    %c2_37 = arith.constant 2 : index
    %c1_38 = arith.constant 1 : index
    %c0_39 = arith.constant 0 : index
    %27 = vector.load %arg8[%c2_37, %c1_38, %c0_39] : memref<18x18x64xbf16, #tpu.memory_space<vmem>>, vector<16x16x64xbf16>
    %28 = vector.shape_cast %27 : vector<16x16x64xbf16> to vector<256x64xbf16>
    %c2_40 = arith.constant 2 : index
    %c2_41 = arith.constant 2 : index
    %c0_42 = arith.constant 0 : index
    %29 = vector.load %arg8[%c2_40, %c2_41, %c0_42] : memref<18x18x64xbf16, #tpu.memory_space<vmem>>, vector<16x16x64xbf16>
    %30 = vector.shape_cast %29 : vector<16x16x64xbf16> to vector<256x64xbf16>
    %31 = tpu.concatenate %14, %16, %18, %20, %22, %24, %26, %28, %30 in 1 : vector<256x64xbf16>, vector<256x64xbf16>, vector<256x64xbf16>, vector<256x64xbf16>, vector<256x64xbf16>, vector<256x64xbf16>, vector<256x64xbf16>, vector<256x64xbf16>, vector<256x64xbf16> -> vector<256x576xbf16>
    %c0_43 = arith.constant 0 : index
    %c0_44 = arith.constant 0 : index
    %32 = vector.load %arg5[%c0_43, %c0_44] : memref<576x192xbf16, #tpu.memory_space<vmem>>, vector<576x192xbf16>
    %cst = arith.constant dense<0.000000e+00> : vector<256x192xf32>
    %33 = tpu.matmul %31, %32, %cst {dimension_numbers = #tpu.dot_dimension_numbers<[1], [0], [0], [1], [0, 0, 1, 1], [], []>} : vector<256x576xbf16>, vector<576x192xbf16>, vector<256x192xf32> -> vector<256x192xf32>
    %34 = arith.truncf %33 : vector<256x192xf32> to vector<256x192xbf16>
    %c0_45 = arith.constant 0 : index
    %c0_46 = arith.constant 0 : index
    %c0_47 = arith.constant 0 : index
    %c0_48 = arith.constant 0 : index
    %35 = vector.load %arg6[%c0_45, %c0_46, %c0_47, %c0_48] : memref<1x1x256x192xbf16, #tpu.memory_space<vmem>>, vector<1x1x256x192xbf16>
    %36 = vector.shape_cast %35 : vector<1x1x256x192xbf16> to vector<256x192xbf16>
    %37 = vector.shape_cast %34 : vector<256x192xbf16> to vector<1x1x256x192xbf16>
    tpu.vector_store %arg6[%c0_45, %c0_46, %c0_47, %c0_48], %37 {strides = array<i32>} : memref<1x1x256x192xbf16, #tpu.memory_space<vmem>>, vector<1x1x256x192xbf16>,
    %cst_49 = arith.constant dense<0.000000e+00> : vector<192xf32>
    %38 = vector.multi_reduction <add>, %33, %cst_49 [0] : vector<256x192xf32> to vector<192xf32>
    %39 = vector.shape_cast %38 : vector<192xf32> to vector<1x192xf32>
    %40 = arith.mulf %33, %33 : vector<256x192xf32>
    %cst_50 = arith.constant dense<0.000000e+00> : vector<192xf32>
    %41 = vector.multi_reduction <add>, %40, %cst_50 [0] : vector<256x192xf32> to vector<192xf32>
    %42 = vector.shape_cast %41 : vector<192xf32> to vector<1x192xf32>
    %43 = tpu.concatenate %39, %42 in 0 : vector<1x192xf32>, vector<1x192xf32> -> vector<2x192xf32>
    %c0_51 = arith.constant 0 : index
    %c0_52 = arith.constant 0 : index
    %c0_53 = arith.constant 0 : index
    %c0_54 = arith.constant 0 : index
    %44 = vector.load %arg7[%c0_51, %c0_52, %c0_53, %c0_54] : memref<1x1x2x192xf32, #tpu.memory_space<vmem>>, vector<1x1x2x192xf32>
    %45 = vector.shape_cast %44 : vector<1x1x2x192xf32> to vector<2x192xf32>
    %46 = vector.shape_cast %43 : vector<2x192xf32> to vector<1x1x2x192xf32>
    tpu.vector_store %arg7[%c0_51, %c0_52, %c0_53, %c0_54], %46 {strides = array<i32>} : memref<1x1x2x192xf32, #tpu.memory_space<vmem>>, vector<1x1x2x192xf32>,
    return
  }
  func.func @transform_0(%arg0: i32, %arg1: i32) -> (i32, i32, i32, i32) {
    %c0_i32 = arith.constant 0 : i32
    %c0_i32_0 = arith.constant 0 : i32
    %c0_i32_1 = arith.constant 0 : i32
    return %arg0, %arg1, %c0_i32, %c0_i32_0 : i32, i32, i32, i32
  }
  func.func @transform_1(%arg0: i32, %arg1: i32) -> (i32, i32, i32, i32) {
    %c1_i32 = arith.constant 1 : i32
    %0 = arith.addi %arg1, %c1_i32 : i32
    %c16_i32 = arith.constant 16 : i32
    %1 = arith.muli %0, %c16_i32 : i32
    %c0_i32 = arith.constant 0 : i32
    %c0_i32_0 = arith.constant 0 : i32
    %c0_i32_1 = arith.constant 0 : i32
    return %arg0, %1, %c0_i32, %c0_i32_0 : i32, i32, i32, i32
  }
  func.func @transform_2(%arg0: i32, %arg1: i32) -> (i32, i32, i32, i32) {
    %c1_i32 = arith.constant 1 : i32
    %0 = arith.addi %arg1, %c1_i32 : i32
    %c16_i32 = arith.constant 16 : i32
    %1 = arith.muli %0, %c16_i32 : i32
    %c1_i32_0 = arith.constant 1 : i32
    %2 = arith.addi %1, %c1_i32_0 : i32
    %c0_i32 = arith.constant 0 : i32
    %c0_i32_1 = arith.constant 0 : i32
    %c0_i32_2 = arith.constant 0 : i32
    return %arg0, %2, %c0_i32, %c0_i32_1 : i32, i32, i32, i32
  }
  func.func @transform_3(%arg0: i32, %arg1: i32) -> (i32, i32) {
    %c0_i32 = arith.constant 0 : i32
    %c0_i32_0 = arith.constant 0 : i32
    %c0_i32_1 = arith.constant 0 : i32
    return %c0_i32, %c0_i32_0 : i32, i32
  }
  func.func @transform_4(%arg0: i32, %arg1: i32) -> (i32, i32, i32, i32) {
    %c0_i32 = arith.constant 0 : i32
    %c0_i32_0 = arith.constant 0 : i32
    %c0_i32_1 = arith.constant 0 : i32
    return %arg0, %arg1, %c0_i32, %c0_i32_0 : i32, i32, i32, i32
  }
  func.func @transform_5(%arg0: i32, %arg1: i32) -> (i32, i32, i32, i32) {
    %c0_i32 = arith.constant 0 : i32
    %c0_i32_0 = arith.constant 0 : i32
    %c0_i32_1 = arith.constant 0 : i32
    return %arg0, %arg1, %c0_i32, %c0_i32_0 : i32, i32, i32, i32
  }
}

module attributes {stable_mosaic.version = 11 : i64} {
  func.func @_bn_relu_1x1_kernel(%arg0: i32, %arg1: memref<256x192xbf16, #tpu.memory_space<vmem>>, %arg2: memref<1x192xf32, #tpu.memory_space<vmem>>, %arg3: memref<1x192xf32, #tpu.memory_space<vmem>>, %arg4: memref<192x128xbf16, #tpu.memory_space<vmem>>, %arg5: memref<1x128xf32, #tpu.memory_space<vmem>>, %arg6: memref<256x128xf32, #tpu.memory_space<vmem>>) attributes {dimension_semantics = [#tpu.dimension_semantics<parallel>], iteration_bounds = array<i64: 2>, scalar_prefetch = 0 : i64, scratch_operands = 0 : i64, tpu.core_type = #tpu.core_type<tc>, window_params = [{transform_indices = @transform_0, window_bounds = array<i64: 256, 192>}, {pipeline_mode = #tpu.pipeline_mode<synchronous>, transform_indices = @transform_1, window_bounds = array<i64: 1, 192>}, {pipeline_mode = #tpu.pipeline_mode<synchronous>, transform_indices = @transform_2, window_bounds = array<i64: 1, 192>}, {pipeline_mode = #tpu.pipeline_mode<synchronous>, transform_indices = @transform_3, window_bounds = array<i64: 192, 128>}, {pipeline_mode = #tpu.pipeline_mode<synchronous>, transform_indices = @transform_4, window_bounds = array<i64: 1, 128>}, {transform_indices = @transform_5, window_bounds = array<i64: 256, 128>}]} {
    %c0 = arith.constant 0 : index
    %c0_0 = arith.constant 0 : index
    %0 = vector.load %arg1[%c0, %c0_0] : memref<256x192xbf16, #tpu.memory_space<vmem>>, vector<256x192xbf16>
    %1 = arith.extf %0 : vector<256x192xbf16> to vector<256x192xf32>
    %c0_1 = arith.constant 0 : index
    %c0_2 = arith.constant 0 : index
    %2 = vector.load %arg2[%c0_1, %c0_2] : memref<1x192xf32, #tpu.memory_space<vmem>>, vector<1x192xf32>
    %3 = vector.broadcast %2 : vector<1x192xf32> to vector<256x192xf32>
    %4 = arith.mulf %1, %3 : vector<256x192xf32>
    %c0_3 = arith.constant 0 : index
    %c0_4 = arith.constant 0 : index
    %5 = vector.load %arg3[%c0_3, %c0_4] : memref<1x192xf32, #tpu.memory_space<vmem>>, vector<1x192xf32>
    %6 = vector.broadcast %5 : vector<1x192xf32> to vector<256x192xf32>
    %7 = arith.addf %4, %6 : vector<256x192xf32>
    %cst = arith.constant 0.000000e+00 : f32
    %8 = vector.broadcast %cst : f32 to vector<256x192xf32>
    %9 = arith.maximumf %7, %8 : vector<256x192xf32>
    %10 = arith.truncf %9 : vector<256x192xf32> to vector<256x192xbf16>
    %c0_5 = arith.constant 0 : index
    %c0_6 = arith.constant 0 : index
    %11 = vector.load %arg4[%c0_5, %c0_6] : memref<192x128xbf16, #tpu.memory_space<vmem>>, vector<192x128xbf16>
    %cst_7 = arith.constant dense<0.000000e+00> : vector<256x128xf32>
    %12 = tpu.matmul %10, %11, %cst_7 {dimension_numbers = #tpu.dot_dimension_numbers<[1], [0], [0], [1], [0, 0, 1, 1], [], []>} : vector<256x192xbf16>, vector<192x128xbf16>, vector<256x128xf32> -> vector<256x128xf32>
    %c0_8 = arith.constant 0 : index
    %c0_9 = arith.constant 0 : index
    %13 = vector.load %arg5[%c0_8, %c0_9] : memref<1x128xf32, #tpu.memory_space<vmem>>, vector<1x128xf32>
    %14 = vector.broadcast %13 : vector<1x128xf32> to vector<256x128xf32>
    %15 = arith.addf %12, %14 : vector<256x128xf32>
    %16 = tpu.iota {dimensions = array<i32: 1>} : vector<256x128xi32>
    %c80_i32 = arith.constant 80 : i32
    %17 = vector.broadcast %c80_i32 : i32 to vector<256x128xi32>
    %18 = arith.cmpi slt, %16, %17 : vector<256x128xi32>
    %19 = arith.negf %15 : vector<256x128xf32>
    %20 = math.exp %19 : vector<256x128xf32>
    %cst_10 = arith.constant 1.000000e+00 : f32
    %21 = vector.broadcast %cst_10 : f32 to vector<256x128xf32>
    %22 = arith.addf %21, %20 : vector<256x128xf32>
    %23 = arith.divf %21, %22 : vector<256x128xf32>
    %24 = arith.select %18, %23, %15 : vector<256x128xi1>, vector<256x128xf32>
    %c0_11 = arith.constant 0 : index
    %c0_12 = arith.constant 0 : index
    %25 = vector.load %arg6[%c0_11, %c0_12] : memref<256x128xf32, #tpu.memory_space<vmem>>, vector<256x128xf32>
    tpu.vector_store %arg6[%c0_11, %c0_12], %24 {strides = array<i32>} : memref<256x128xf32, #tpu.memory_space<vmem>>, vector<256x128xf32>,
    return
  }
  func.func @transform_0(%arg0: i32) -> (i32, i32) {
    %c0_i32 = arith.constant 0 : i32
    %c0_i32_0 = arith.constant 0 : i32
    return %arg0, %c0_i32 : i32, i32
  }
  func.func @transform_1(%arg0: i32) -> (i32, i32) {
    %c0_i32 = arith.constant 0 : i32
    %c0_i32_0 = arith.constant 0 : i32
    %c0_i32_1 = arith.constant 0 : i32
    return %c0_i32, %c0_i32_0 : i32, i32
  }
  func.func @transform_2(%arg0: i32) -> (i32, i32) {
    %c0_i32 = arith.constant 0 : i32
    %c0_i32_0 = arith.constant 0 : i32
    %c0_i32_1 = arith.constant 0 : i32
    return %c0_i32, %c0_i32_0 : i32, i32
  }
  func.func @transform_3(%arg0: i32) -> (i32, i32) {
    %c0_i32 = arith.constant 0 : i32
    %c0_i32_0 = arith.constant 0 : i32
    %c0_i32_1 = arith.constant 0 : i32
    return %c0_i32, %c0_i32_0 : i32, i32
  }
  func.func @transform_4(%arg0: i32) -> (i32, i32) {
    %c0_i32 = arith.constant 0 : i32
    %c0_i32_0 = arith.constant 0 : i32
    %c0_i32_1 = arith.constant 0 : i32
    return %c0_i32, %c0_i32_0 : i32, i32
  }
  func.func @transform_5(%arg0: i32) -> (i32, i32) {
    %c0_i32 = arith.constant 0 : i32
    %c0_i32_0 = arith.constant 0 : i32
    return %arg0, %c0_i32 : i32, i32
  }
}

</mosaic_0001>

<llo_original>
// kernel: efficientnet_head_forward.3
$region0: #{efficientnet_head_forward.3}
  #allocation0 [shape = 'u32[]', space=smem, size = 0x4, offset = 0x4, fixed_abs, tag = 'smem constant byte address 0x4 - core index']
  #allocation1 [shape = 'u32[144,128]{1,0:T(1,128)}', space=vmem, size = 0x12000, scoped, tag = 'internal scratch']
  %s0 = inlined_call_operand.vmem [shape: bf16[512,192], index: 0, kind: input, shape index: {}]
  %s1 = inlined_call_operand.vmem [shape: f32[1,192], index: 1, kind: input, shape index: {}]
  %s2 = inlined_call_operand.vmem [shape: f32[1,192], index: 2, kind: input, shape index: {}]
  %s3 = inlined_call_operand.vmem [shape: bf16[192,128], index: 3, kind: input, shape index: {}]
  %s4 = inlined_call_operand.vmem [shape: f32[1,128], index: 4, kind: input, shape index: {}]
  %s5 = inlined_call_operand.vmem [shape: f32[512,128], index: 5, kind: output, shape index: {}]
  %s6 = sld [smem:[#allocation0]]
  $region53: #{efficientnet_head_forward.3} parent=0
    _
  %s8 = ssub.s32 1, %s6
  %s9 = scalar_select 0, %s8, %s6
  loop: start=0, step=1, limit=4
  $region2: #{efficientnet_head_forward.3} parent=0 // loop_pre_header
    _
  $region3: #{efficientnet_head_forward.3} parent=0 // loop_header
    %s11 = sphi 0, %s15
    %p12 = scmp.ge.s32.totalorder %s11, 4
    %s21 = sphi 0, %s23
    %s24 = sphi 0, %s21
    %s25 = sphi 0, %s24
    %s41 = sphi 0, %s25
    %s45 = sphi 0, %s45
    %s47 = sphi 0, %s45
    %s48 = sphi 0, %s47
    %s62 = sphi 0, %s48
    %s66 = sphi 0, %s66
    %s68 = sphi 0, %s66
    %s69 = sphi 0, %s68
    %s83 = sphi 0, %s69
    %s87 = sphi 0, %s87
    %s89 = sphi 0, %s87
    %s90 = sphi 0, %s89
    %s104 = sphi 0, %s90
    %s108 = sphi 0, %s108
    %s110 = sphi 0, %s108
    %s111 = sphi 0, %s110
    %s125 = sphi 0, %s111
    %s131 = sphi 0, %s133
    %s134 = sphi 0, %s131
    %s135 = sphi 0, %s134
    %s151 = sphi 0, %s135
  $region4: #{efficientnet_head_forward.3} parent=0 // loop_header_branch
    %14 = sbr.rel (%p12) target = $region8
  $region5: #{efficientnet_head_forward.3} parent=0 // loop_body
    %s16 = ssub.s32 %s11, 1
    %s17 = ssub.s32 %s11, 2
    %s18 = sadd.s32 %s11, 1
    %s19 = ssub.s32 %s11, %s18
    %p20 = scmp.eq.s32.totalorder %s19, 0
    %s22 = sadd.s32 %s21, 1
    %s23 = scalar_select %p20, %s21, %s22
    %p26 = pneg %p20
    %p27 = scmp.eq.s32.totalorder %s11, 1
    %p28 = por %p26, %p27
    %p29 = scmp.ne.s32.totalorder %s21, %s24
    %p30 = scmp.eq.s32.totalorder %s11, 0
    %p31 = por %p29, %p30
    %p32 = scmp.ne.s32.totalorder %s21, %s24
    %p33 = scmp.eq.s32.totalorder %s16, 1
    %p34 = por %p32, %p33
    %p35 = scmp.ne.s32.totalorder %s24, %s25
    %p36 = scmp.eq.s32.totalorder %s16, 0
    %p37 = por %p35, %p36
    %p38 = scmp.ne.s32.totalorder %s24, %s25
    %p39 = scmp.eq.s32.totalorder %s17, 1
    %p40 = por %p38, %p39
    %p42 = scmp.ne.s32.totalorder %s25, %s41
    %p43 = scmp.eq.s32.totalorder %s17, 0
    %p44 = por %p42, %p43
    %s46 = sadd.s32 %s45, 1
    %p49 = scmp.eq.s32.totalorder %s11, 1
    %p50 = scmp.ne.s32.totalorder %s45, %s47
    %p51 = scmp.eq.s32.totalorder %s11, 0
    %p52 = por %p50, %p51
    %p53 = scmp.ne.s32.totalorder %s45, %s47
    %p54 = scmp.eq.s32.totalorder %s16, 1
    %p55 = por %p53, %p54
    %p56 = scmp.ne.s32.totalorder %s47, %s48
    %p57 = scmp.eq.s32.totalorder %s16, 0
    %p58 = por %p56, %p57
    %p59 = scmp.ne.s32.totalorder %s47, %s48
    %p60 = scmp.eq.s32.totalorder %s17, 1
    %p61 = por %p59, %p60
    %p63 = scmp.ne.s32.totalorder %s48, %s62
    %p64 = scmp.eq.s32.totalorder %s17, 0
    %p65 = por %p63, %p64
    %s67 = sadd.s32 %s66, 1
    %p70 = scmp.eq.s32.totalorder %s11, 1
    %p71 = scmp.ne.s32.totalorder %s66, %s68
    %p72 = scmp.eq.s32.totalorder %s11, 0
    %p73 = por %p71, %p72
    %p74 = scmp.ne.s32.totalorder %s66, %s68
    %p75 = scmp.eq.s32.totalorder %s16, 1
    %p76 = por %p74, %p75
    %p77 = scmp.ne.s32.totalorder %s68, %s69
    %p78 = scmp.eq.s32.totalorder %s16, 0
    %p79 = por %p77, %p78
    %p80 = scmp.ne.s32.totalorder %s68, %s69
    %p81 = scmp.eq.s32.totalorder %s17, 1
    %p82 = por %p80, %p81
    %p84 = scmp.ne.s32.totalorder %s69, %s83
    %p85 = scmp.eq.s32.totalorder %s17, 0
    %p86 = por %p84, %p85
    %s88 = sadd.s32 %s87, 1
    %p91 = scmp.eq.s32.totalorder %s11, 1
    %p92 = scmp.ne.s32.totalorder %s87, %s89
    %p93 = scmp.eq.s32.totalorder %s11, 0
    %p94 = por %p92, %p93
    %p95 = scmp.ne.s32.totalorder %s87, %s89
    %p96 = scmp.eq.s32.totalorder %s16, 1
    %p97 = por %p95, %p96
    %p98 = scmp.ne.s32.totalorder %s89, %s90
    %p99 = scmp.eq.s32.totalorder %s16, 0
    %p100 = por %p98, %p99
    %p101 = scmp.ne.s32.totalorder %s89, %s90
    %p102 = scmp.eq.s32.totalorder %s17, 1
    %p103 = por %p101, %p102
    %p105 = scmp.ne.s32.totalorder %s90, %s104
    %p106 = scmp.eq.s32.totalorder %s17, 0
    %p107 = por %p105, %p106
    %s109 = sadd.s32 %s108, 1
    %p112 = scmp.eq.s32.totalorder %s11, 1
    %p113 = scmp.ne.s32.totalorder %s108, %s110
    %p114 = scmp.eq.s32.totalorder %s11, 0
    %p115 = por %p113, %p114
    %p116 = scmp.ne.s32.totalorder %s108, %s110
    %p117 = scmp.eq.s32.totalorder %s16, 1
    %p118 = por %p116, %p117
    %p119 = scmp.ne.s32.totalorder %s110, %s111
    %p120 = scmp.eq.s32.totalorder %s16, 0
    %p121 = por %p119, %p120
    %p122 = scmp.ne.s32.totalorder %s110, %s111
    %p123 = scmp.eq.s32.totalorder %s17, 1
    %p124 = por %p122, %p123
    %p126 = scmp.ne.s32.totalorder %s111, %s125
    %p127 = scmp.eq.s32.totalorder %s17, 0
    %p128 = por %p126, %p127
    %s129 = ssub.s32 %s11, %s18
    %p130 = scmp.eq.s32.totalorder %s129, 0
    %s132 = sadd.s32 %s131, 1
    %s133 = scalar_select %p130, %s131, %s132
    %p136 = pneg %p130
    %p137 = scmp.eq.s32.totalorder %s11, 1
    %p138 = por %p136, %p137
    %p139 = scmp.ne.s32.totalorder %s131, %s134
    %p140 = scmp.eq.s32.totalorder %s11, 0
    %p141 = por %p139, %p140
    %p142 = scmp.ne.s32.totalorder %s131, %s134
    %p143 = scmp.eq.s32.totalorder %s16, 1
    %p144 = por %p142, %p143
    %p145 = scmp.ne.s32.totalorder %s134, %s135
    %p146 = scmp.eq.s32.totalorder %s16, 0
    %p147 = por %p145, %p146
    %p148 = scmp.ne.s32.totalorder %s134, %s135
    %p149 = scmp.eq.s32.totalorder %s17, 1
    %p150 = por %p148, %p149
    %p152 = scmp.ne.s32.totalorder %s135, %s151
    %p153 = scmp.eq.s32.totalorder %s17, 0
    %p154 = por %p152, %p153
    %p155 = scmp.le.s32.totalorder 1, %s11
    %p156 = scmp.lt.s32.totalorder %s11, 3
    %p157 = pnand %p155, %p156
    %p158 = pneg %p157
    // Predicated region
    $region9: #{efficientnet_head_forward.3} parent=5 // pred_check
      _
    $region10: #{efficientnet_head_forward.3} parent=5 // pred_check_branch
      %160 = sbr.rel (%p157) target = $region12
    $region11: #{efficientnet_head_forward.3} parent=5 // pred_region
      %s161 = ssub.s32 %s11, 1
      // Predicated region
      $region13: #{efficientnet_head_forward.3} parent=11 // pred_check
        %p162 = pneg %p58
      $region14: #{efficientnet_head_forward.3} parent=11 // pred_check_branch
        %164 = sbr.rel (%p162) target = $region16
      $region15: #{efficientnet_head_forward.3} parent=11 // pred_region
        _
      $region16: #{efficientnet_head_forward.3} parent=11 // pred_fallthru
        _
      // Predicated region
      $region17: #{efficientnet_head_forward.3} parent=11 // pred_check
        %p165 = pneg %p79
      $region18: #{efficientnet_head_forward.3} parent=11 // pred_check_branch
        %167 = sbr.rel (%p165) target = $region20
      $region19: #{efficientnet_head_forward.3} parent=11 // pred_region
        _
      $region20: #{efficientnet_head_forward.3} parent=11 // pred_fallthru
        _
      // Predicated region
      $region21: #{efficientnet_head_forward.3} parent=11 // pred_check
        %p168 = pneg %p100
      $region22: #{efficientnet_head_forward.3} parent=11 // pred_check_branch
        %170 = sbr.rel (%p168) target = $region24
      $region23: #{efficientnet_head_forward.3} parent=11 // pred_region
        _
      $region24: #{efficientnet_head_forward.3} parent=11 // pred_fallthru
        _
      // Predicated region
      $region25: #{efficientnet_head_forward.3} parent=11 // pred_check
        %p171 = pneg %p121
      $region26: #{efficientnet_head_forward.3} parent=11 // pred_check_branch
        %173 = sbr.rel (%p171) target = $region28
      $region27: #{efficientnet_head_forward.3} parent=11 // pred_region
        _
      $region28: #{efficientnet_head_forward.3} parent=11 // pred_fallthru
        _
    $region12: #{efficientnet_head_forward.3} parent=5 // pred_fallthru
      _
    %p174 = scmp.lt.s32.totalorder %s11, 2
    // Predicated region
    $region29: #{efficientnet_head_forward.3} parent=5 // pred_check
      %p175 = pneg %p174
    $region30: #{efficientnet_head_forward.3} parent=5 // pred_check_branch
      %177 = sbr.rel (%p175) target = $region32
    $region31: #{efficientnet_head_forward.3} parent=5 // pred_region
      // Predicated region
      $region33: #{efficientnet_head_forward.3} parent=31 // pred_check
        %p178 = pneg %p31
      $region34: #{efficientnet_head_forward.3} parent=31 // pred_check_branch
        %180 = sbr.rel (%p178) target = $region36
      $region35: #{efficientnet_head_forward.3} parent=31 // pred_region
        %s181 = smul.u32 32, %s11
        %p182 = scmp.lt.s32.totalorder %s181, 63
        %s183 = scalar_select %p182, %s181, 63
        %s184 = smul.addr %s183, 2
        %s185 = smul.addr %s184, 4
        %s186 = scalar_lea.vmem %s0, %s185
        %s187 = smul.u32 32, %s11
      $region36: #{efficientnet_head_forward.3} parent=31 // pred_fallthru
        _
    $region32: #{efficientnet_head_forward.3} parent=5 // pred_fallthru
      _
    %p188 = scmp.le.s32.totalorder 1, %s11
    %p189 = scmp.lt.s32.totalorder %s11, 3
    %p190 = pnand %p188, %p189
    %p191 = pneg %p190
    // Predicated region
    $region37: #{efficientnet_head_forward.3} parent=5 // pred_check
      _
    $region38: #{efficientnet_head_forward.3} parent=5 // pred_check_branch
      %193 = sbr.rel (%p190) target = $region40
    $region39: #{efficientnet_head_forward.3} parent=5 // pred_region
      %s194 = ssub.s32 %s11, 1
      %s195 = smul.u32 32, %s16
      %p196 = scmp.lt.s32.totalorder %s195, 63
      %s197 = scalar_select %p196, %s195, 63
      %s198 = smul.addr %s197, 2
      %s199 = smul.addr %s198, 4
      %s200 = scalar_lea.vmem %s0, %s199
      %p201 = pneg %p37
      %p202 = pneg %p34
      %p203 = pneg %p58
      %p204 = pneg %p55
      %p205 = pneg %p79
      %p206 = pneg %p76
      %p207 = pneg %p100
      %p208 = pneg %p97
      %p209 = pneg %p121
      %p210 = pneg %p118
      %p211 = pneg %p147
      %p212 = pneg %p144
      %s213 = smul.u32 32, %s16
      %p214 = scmp.lt.s32.totalorder %s213, 63
      %s215 = scalar_select %p214, %s213, 63
      %s216 = smul.addr %s215, 8
      %s217 = scalar_lea.vmem %s5, %s216
      %s218 = smul.u32 32, %s16
      %p219 = scmp.lt.s32.totalorder %s218, 63
      %s220 = scalar_select %p219, %s218, 63
      %s221 = smul.addr %s220, 2
      %s222 = smul.addr %s221, 4
      %s223 = scalar_lea.vmem %s0, %s222
      %s224 = smul.u32 32, %s16
      %s225 = smul.u32 32, %s16
      %p226 = scmp.lt.s32.totalorder %s225, 63
      %s227 = scalar_select %p226, %s225, 63
      %s228 = smul.addr %s227, 8
      %s229 = scalar_lea.vmem %s5, %s228
      %s230 = smul.u32 32, %s16
      %v232 = vld [vmem:[%s223] sm:$0xff]
      %v233 = vld [vmem:[%s223 + $0x8] sm:$0xff]
      %v234 = vld [vmem:[%s223 + $0x10] sm:$0xff]
      %v235 = vld [vmem:[%s223 + $0x18] sm:$0xff]
      %v236 = vld [vmem:[%s223 + $0x20] sm:$0xff]
      %v237 = vld [vmem:[%s223 + $0x28] sm:$0xff]
      %v238 = vld [vmem:[%s223 + $0x30] sm:$0xff]
      %v239 = vld [vmem:[%s223 + $0x38] sm:$0xff]
      %v240 = vld [vmem:[%s223 + $0x40] sm:$0xff]
      %v241 = vld [vmem:[%s223 + $0x48] sm:$0xff]
      %v242 = vld [vmem:[%s223 + $0x50] sm:$0xff]
      %v243 = vld [vmem:[%s223 + $0x58] sm:$0xff]
      %v244 = vld [vmem:[%s223 + $0x60] sm:$0xff]
      %v245 = vld [vmem:[%s223 + $0x68] sm:$0xff]
      %v246 = vld [vmem:[%s223 + $0x70] sm:$0xff]
      %v247 = vld [vmem:[%s223 + $0x78] sm:$0xff]
      %v248 = vld [vmem:[%s223 + $0x80] sm:$0xff]
      %v249 = vld [vmem:[%s223 + $0x88] sm:$0xff]
      %v250 = vld [vmem:[%s223 + $0x90] sm:$0xff]
      %v251 = vld [vmem:[%s223 + $0x98] sm:$0xff]
      %v252 = vld [vmem:[%s223 + $0xa0] sm:$0xff]
      %v253 = vld [vmem:[%s223 + $0xa8] sm:$0xff]
      %v254 = vld [vmem:[%s223 + $0xb0] sm:$0xff]
      %v255 = vld [vmem:[%s223 + $0xb8] sm:$0xff]
      %v256 = vld [vmem:[%s223 + $0xc0] sm:$0xff]
      %v257 = vld [vmem:[%s223 + $0xc8] sm:$0xff]
      %v258 = vld [vmem:[%s223 + $0xd0] sm:$0xff]
      %v259 = vld [vmem:[%s223 + $0xd8] sm:$0xff]
      %v260 = vld [vmem:[%s223 + $0xe0] sm:$0xff]
      %v261 = vld [vmem:[%s223 + $0xe8] sm:$0xff]
      %v262 = vld [vmem:[%s223 + $0xf0] sm:$0xff]
      %v263 = vld [vmem:[%s223 + $0xf8] sm:$0xff]
      %v264 = vunpack.c.l.bf16 %v232
      %v265 = vunpack.c.h.bf16 %v232
      %v266 = vunpack.c.l.bf16 %v233
      %v267 = vunpack.c.h.bf16 %v233
      %v268 = vunpack.c.l.bf16 %v234
      %v269 = vunpack.c.h.bf16 %v234
      %v270 = vunpack.c.l.bf16 %v235
      %v271 = vunpack.c.h.bf16 %v235
      %v272 = vunpack.c.l.bf16 %v236
      %v273 = vunpack.c.h.bf16 %v236
      %v274 = vunpack.c.l.bf16 %v237
      %v275 = vunpack.c.h.bf16 %v237
      %v276 = vunpack.c.l.bf16 %v238
      %v277 = vunpack.c.h.bf16 %v238
      %v278 = vunpack.c.l.bf16 %v239
      %v279 = vunpack.c.h.bf16 %v239
      %v280 = vunpack.c.l.bf16 %v240
      %v281 = vunpack.c.h.bf16 %v240
      %v282 = vunpack.c.l.bf16 %v241
      %v283 = vunpack.c.h.bf16 %v241
      %v284 = vunpack.c.l.bf16 %v242
      %v285 = vunpack.c.h.bf16 %v242
      %v286 = vunpack.c.l.bf16 %v243
      %v287 = vunpack.c.h.bf16 %v243
      %v288 = vunpack.c.l.bf16 %v244
      %v289 = vunpack.c.h.bf16 %v244
      %v290 = vunpack.c.l.bf16 %v245
      %v291 = vunpack.c.h.bf16 %v245
      %v292 = vunpack.c.l.bf16 %v246
      %v293 = vunpack.c.h.bf16 %v246
      %v294 = vunpack.c.l.bf16 %v247
      %v295 = vunpack.c.h.bf16 %v247
      %v296 = vunpack.c.l.bf16 %v248
      %v297 = vunpack.c.h.bf16 %v248
      %v298 = vunpack.c.l.bf16 %v249
      %v299 = vunpack.c.h.bf16 %v249
      %v300 = vunpack.c.l.bf16 %v250
      %v301 = vunpack.c.h.bf16 %v250
      %v302 = vunpack.c.l.bf16 %v251
      %v303 = vunpack.c.h.bf16 %v251
      %v304 = vunpack.c.l.bf16 %v252
      %v305 = vunpack.c.h.bf16 %v252
      %v306 = vunpack.c.l.bf16 %v253
      %v307 = vunpack.c.h.bf16 %v253
      %v308 = vunpack.c.l.bf16 %v254
      %v309 = vunpack.c.h.bf16 %v254
      %v310 = vunpack.c.l.bf16 %v255
      %v311 = vunpack.c.h.bf16 %v255
      %v312 = vunpack.c.l.bf16 %v256
      %v313 = vunpack.c.h.bf16 %v256
      %v314 = vunpack.c.l.bf16 %v257
      %v315 = vunpack.c.h.bf16 %v257
      %v316 = vunpack.c.l.bf16 %v258
      %v317 = vunpack.c.h.bf16 %v258
      %v318 = vunpack.c.l.bf16 %v259
      %v319 = vunpack.c.h.bf16 %v259
      %v320 = vunpack.c.l.bf16 %v260
      %v321 = vunpack.c.h.bf16 %v260
      %v322 = vunpack.c.l.bf16 %v261
      %v323 = vunpack.c.h.bf16 %v261
      %v324 = vunpack.c.l.bf16 %v262
      %v325 = vunpack.c.h.bf16 %v262
      %v326 = vunpack.c.l.bf16 %v263
      %v327 = vunpack.c.h.bf16 %v263
      %v328 = vld [vmem:[%s1] sm:$0x3]
      %v330 = vlaneseq
      %v331 = vshrl.u32 %v330, 7
      %v332 = vsub.s32 0, %v331
      %v333 = vrot.slane %v328, %v332
      %v334 = vlaneseq
      %v335 = vshrl.u32 %v334, 7
      %v336 = vsub.s32 1, %v335
      %v337 = vrot.slane %v328, %v336
      %v340 = vmul.f32 %v264, %v333
      %v341 = vmul.f32 %v265, %v337
      %v342 = vmul.f32 %v266, %v333
      %v343 = vmul.f32 %v267, %v337
      %v344 = vmul.f32 %v268, %v333
      %v345 = vmul.f32 %v269, %v337
      %v346 = vmul.f32 %v270, %v333
      %v347 = vmul.f32 %v271, %v337
      %v348 = vmul.f32 %v272, %v333
      %v349 = vmul.f32 %v273, %v337
      %v350 = vmul.f32 %v274, %v333
      %v351 = vmul.f32 %v275, %v337
      %v352 = vmul.f32 %v276, %v333
      %v353 = vmul.f32 %v277, %v337
      %v354 = vmul.f32 %v278, %v333
      %v355 = vmul.f32 %v279, %v337
      %v356 = vmul.f32 %v280, %v333
      %v357 = vmul.f32 %v281, %v337
      %v358 = vmul.f32 %v282, %v333
      %v359 = vmul.f32 %v283, %v337
      %v360 = vmul.f32 %v284, %v333
      %v361 = vmul.f32 %v285, %v337
      %v362 = vmul.f32 %v286, %v333
      %v363 = vmul.f32 %v287, %v337
      %v364 = vmul.f32 %v288, %v333
      %v365 = vmul.f32 %v289, %v337
      %v366 = vmul.f32 %v290, %v333
      %v367 = vmul.f32 %v291, %v337
      %v368 = vmul.f32 %v292, %v333
      %v369 = vmul.f32 %v293, %v337
      %v370 = vmul.f32 %v294, %v333
      %v371 = vmul.f32 %v295, %v337
      %v372 = vmul.f32 %v296, %v333
      %v373 = vmul.f32 %v297, %v337
      %v374 = vmul.f32 %v298, %v333
      %v375 = vmul.f32 %v299, %v337
      %v376 = vmul.f32 %v300, %v333
      %v377 = vmul.f32 %v301, %v337
      %v378 = vmul.f32 %v302, %v333
      %v379 = vmul.f32 %v303, %v337
      %v380 = vmul.f32 %v304, %v333
      %v381 = vmul.f32 %v305, %v337
      %v382 = vmul.f32 %v306, %v333
      %v383 = vmul.f32 %v307, %v337
      %v384 = vmul.f32 %v308, %v333
      %v385 = vmul.f32 %v309, %v337
      %v386 = vmul.f32 %v310, %v333
      %v387 = vmul.f32 %v311, %v337
      %v388 = vmul.f32 %v312, %v333
      %v389 = vmul.f32 %v313, %v337
      %v390 = vmul.f32 %v314, %v333
      %v391 = vmul.f32 %v315, %v337
      %v392 = vmul.f32 %v316, %v333
      %v393 = vmul.f32 %v317, %v337
      %v394 = vmul.f32 %v318, %v333
      %v395 = vmul.f32 %v319, %v337
      %v396 = vmul.f32 %v320, %v333
      %v397 = vmul.f32 %v321, %v337
      %v398 = vmul.f32 %v322, %v333
      %v399 = vmul.f32 %v323, %v337
      %v400 = vmul.f32 %v324, %v333
      %v401 = vmul.f32 %v325, %v337
      %v402 = vmul.f32 %v326, %v333
      %v403 = vmul.f32 %v327, %v337
      %v404 = vld [vmem:[%s2] sm:$0x3]
      %v406 = vlaneseq
      %v407 = vshrl.u32 %v406, 7
      %v408 = vsub.s32 0, %v407
      %v409 = vrot.slane %v404, %v408
      %v410 = vlaneseq
      %v411 = vshrl.u32 %v410, 7
      %v412 = vsub.s32 1, %v411
      %v413 = vrot.slane %v404, %v412
      %v416 = vadd.f32 %v340, %v409
      %v417 = vadd.f32 %v341, %v413
      %v418 = vadd.f32 %v342, %v409
      %v419 = vadd.f32 %v343, %v413
      %v420 = vadd.f32 %v344, %v409
      %v421 = vadd.f32 %v345, %v413
      %v422 = vadd.f32 %v346, %v409
      %v423 = vadd.f32 %v347, %v413
      %v424 = vadd.f32 %v348, %v409
      %v425 = vadd.f32 %v349, %v413
      %v426 = vadd.f32 %v350, %v409
      %v427 = vadd.f32 %v351, %v413
      %v428 = vadd.f32 %v352, %v409
      %v429 = vadd.f32 %v353, %v413
      %v430 = vadd.f32 %v354, %v409
      %v431 = vadd.f32 %v355, %v413
      %v432 = vadd.f32 %v356, %v409
      %v433 = vadd.f32 %v357, %v413
      %v434 = vadd.f32 %v358, %v409
      %v435 = vadd.f32 %v359, %v413
      %v436 = vadd.f32 %v360, %v409
      %v437 = vadd.f32 %v361, %v413
      %v438 = vadd.f32 %v362, %v409
      %v439 = vadd.f32 %v363, %v413
      %v440 = vadd.f32 %v364, %v409
      %v441 = vadd.f32 %v365, %v413
      %v442 = vadd.f32 %v366, %v409
      %v443 = vadd.f32 %v367, %v413
      %v444 = vadd.f32 %v368, %v409
      %v445 = vadd.f32 %v369, %v413
      %v446 = vadd.f32 %v370, %v409
      %v447 = vadd.f32 %v371, %v413
      %v448 = vadd.f32 %v372, %v409
      %v449 = vadd.f32 %v373, %v413
      %v450 = vadd.f32 %v374, %v409
      %v451 = vadd.f32 %v375, %v413
      %v452 = vadd.f32 %v376, %v409
      %v453 = vadd.f32 %v377, %v413
      %v454 = vadd.f32 %v378, %v409
      %v455 = vadd.f32 %v379, %v413
      %v456 = vadd.f32 %v380, %v409
      %v457 = vadd.f32 %v381, %v413
      %v458 = vadd.f32 %v382, %v409
      %v459 = vadd.f32 %v383, %v413
      %v460 = vadd.f32 %v384, %v409
      %v461 = vadd.f32 %v385, %v413
      %v462 = vadd.f32 %v386, %v409
      %v463 = vadd.f32 %v387, %v413
      %v464 = vadd.f32 %v388, %v409
      %v465 = vadd.f32 %v389, %v413
      %v466 = vadd.f32 %v390, %v409
      %v467 = vadd.f32 %v391, %v413
      %v468 = vadd.f32 %v392, %v409
      %v469 = vadd.f32 %v393, %v413
      %v470 = vadd.f32 %v394, %v409
      %v471 = vadd.f32 %v395, %v413
      %v472 = vadd.f32 %v396, %v409
      %v473 = vadd.f32 %v397, %v413
      %v474 = vadd.f32 %v398, %v409
      %v475 = vadd.f32 %v399, %v413
      %v476 = vadd.f32 %v400, %v409
      %v477 = vadd.f32 %v401, %v413
      %v478 = vadd.f32 %v402, %v409
      %v479 = vadd.f32 %v403, %v413
      %v480 = vmax.f32 %v416, 0.0
      %v481 = vmax.f32 %v417, 0.0
      %v482 = vmax.f32 %v418, 0.0
      %v483 = vmax.f32 %v419, 0.0
      %v484 = vmax.f32 %v420, 0.0
      %v485 = vmax.f32 %v421, 0.0
      %v486 = vmax.f32 %v422, 0.0
      %v487 = vmax.f32 %v423, 0.0
      %v488 = vmax.f32 %v424, 0.0
      %v489 = vmax.f32 %v425, 0.0
      %v490 = vmax.f32 %v426, 0.0
      %v491 = vmax.f32 %v427, 0.0
      %v492 = vmax.f32 %v428, 0.0
      %v493 = vmax.f32 %v429, 0.0
      %v494 = vmax.f32 %v430, 0.0
      %v495 = vmax.f32 %v431, 0.0
      %v496 = vmax.f32 %v432, 0.0
      %v497 = vmax.f32 %v433, 0.0
      %v498 = vmax.f32 %v434, 0.0
      %v499 = vmax.f32 %v435, 0.0
      %v500 = vmax.f32 %v436, 0.0
      %v501 = vmax.f32 %v437, 0.0
      %v502 = vmax.f32 %v438, 0.0
      %v503 = vmax.f32 %v439, 0.0
      %v504 = vmax.f32 %v440, 0.0
      %v505 = vmax.f32 %v441, 0.0
      %v506 = vmax.f32 %v442, 0.0
      %v507 = vmax.f32 %v443, 0.0
      %v508 = vmax.f32 %v444, 0.0
      %v509 = vmax.f32 %v445, 0.0
      %v510 = vmax.f32 %v446, 0.0
      %v511 = vmax.f32 %v447, 0.0
      %v512 = vmax.f32 %v448, 0.0
      %v513 = vmax.f32 %v449, 0.0
      %v514 = vmax.f32 %v450, 0.0
      %v515 = vmax.f32 %v451, 0.0
      %v516 = vmax.f32 %v452, 0.0
      %v517 = vmax.f32 %v453, 0.0
      %v518 = vmax.f32 %v454, 0.0
      %v519 = vmax.f32 %v455, 0.0
      %v520 = vmax.f32 %v456, 0.0
      %v521 = vmax.f32 %v457, 0.0
      %v522 = vmax.f32 %v458, 0.0
      %v523 = vmax.f32 %v459, 0.0
      %v524 = vmax.f32 %v460, 0.0
      %v525 = vmax.f32 %v461, 0.0
      %v526 = vmax.f32 %v462, 0.0
      %v527 = vmax.f32 %v463, 0.0
      %v528 = vmax.f32 %v464, 0.0
      %v529 = vmax.f32 %v465, 0.0
      %v530 = vmax.f32 %v466, 0.0
      %v531 = vmax.f32 %v467, 0.0
      %v532 = vmax.f32 %v468, 0.0
      %v533 = vmax.f32 %v469, 0.0
      %v534 = vmax.f32 %v470, 0.0
      %v535 = vmax.f32 %v471, 0.0
      %v536 = vmax.f32 %v472, 0.0
      %v537 = vmax.f32 %v473, 0.0
      %v538 = vmax.f32 %v474, 0.0
      %v539 = vmax.f32 %v475, 0.0
      %v540 = vmax.f32 %v476, 0.0
      %v541 = vmax.f32 %v477, 0.0
      %v542 = vmax.f32 %v478, 0.0
      %v543 = vmax.f32 %v479, 0.0
      %v544 = vpack.c.bf16 %v482, %v480
      %v545 = vpack.c.bf16 %v483, %v481
      %v546 = vpack.c.bf16 %v486, %v484
      %v547 = vpack.c.bf16 %v487, %v485
      %v548 = vpack.c.bf16 %v490, %v488
      %v549 = vpack.c.bf16 %v491, %v489
      %v550 = vpack.c.bf16 %v494, %v492
      %v551 = vpack.c.bf16 %v495, %v493
      %v552 = vpack.c.bf16 %v498, %v496
      %v553 = vpack.c.bf16 %v499, %v497
      %v554 = vpack.c.bf16 %v502, %v500
      %v555 = vpack.c.bf16 %v503, %v501
      %v556 = vpack.c.bf16 %v506, %v504
      %v557 = vpack.c.bf16 %v507, %v505
      %v558 = vpack.c.bf16 %v510, %v508
      %v559 = vpack.c.bf16 %v511, %v509
      %v560 = vpack.c.bf16 %v514, %v512
      %v561 = vpack.c.bf16 %v515, %v513
      %v562 = vpack.c.bf16 %v518, %v516
      %v563 = vpack.c.bf16 %v519, %v517
      %v564 = vpack.c.bf16 %v522, %v520
      %v565 = vpack.c.bf16 %v523, %v521
      %v566 = vpack.c.bf16 %v526, %v524
      %v567 = vpack.c.bf16 %v527, %v525
      %v568 = vpack.c.bf16 %v530, %v528
      %v569 = vpack.c.bf16 %v531, %v529
      %v570 = vpack.c.bf16 %v534, %v532
      %v571 = vpack.c.bf16 %v535, %v533
      %v572 = vpack.c.bf16 %v538, %v536
      %v573 = vpack.c.bf16 %v539, %v537
      %v574 = vpack.c.bf16 %v542, %v540
      %v575 = vpack.c.bf16 %v543, %v541
      %v576 = vld [vmem:[%s3] sm:$0xf]
      %v577 = vld [vmem:[%s3 + $0x4] sm:$0xf]
      %v578 = vld [vmem:[%s3 + $0x8] sm:$0xf]
      %v579 = vld [vmem:[%s3 + $0xc] sm:$0xf]
      %v580 = vld [vmem:[%s3 + $0x10] sm:$0xf]
      %v581 = vld [vmem:[%s3 + $0x14] sm:$0xf]
      %v582 = vld [vmem:[%s3 + $0x18] sm:$0xf]
      %v583 = vld [vmem:[%s3 + $0x1c] sm:$0xf]
      %v584 = vld [vmem:[%s3 + $0x20] sm:$0xf]
      %v585 = vld [vmem:[%s3 + $0x24] sm:$0xf]
      %v586 = vld [vmem:[%s3 + $0x28] sm:$0xf]
      %v587 = vld [vmem:[%s3 + $0x2c] sm:$0xf]
      %v588 = vld [vmem:[%s3 + $0x30] sm:$0xf]
      %v589 = vld [vmem:[%s3 + $0x34] sm:$0xf]
      %v590 = vld [vmem:[%s3 + $0x38] sm:$0xf]
      %v591 = vld [vmem:[%s3 + $0x3c] sm:$0xf]
      %v592 = vld [vmem:[%s3 + $0x40] sm:$0xf]
      %v593 = vld [vmem:[%s3 + $0x44] sm:$0xf]
      %v594 = vld [vmem:[%s3 + $0x48] sm:$0xf]
      %v595 = vld [vmem:[%s3 + $0x4c] sm:$0xf]
      %v596 = vld [vmem:[%s3 + $0x50] sm:$0xf]
      %v597 = vld [vmem:[%s3 + $0x54] sm:$0xf]
      %v598 = vld [vmem:[%s3 + $0x58] sm:$0xf]
      %v599 = vld [vmem:[%s3 + $0x5c] sm:$0xf]
      %v600 = vld [vmem:[%s4] sm:$0x1]
      %v602 = vlaneseq
      %v603 = vshrl.u32 %v602, 7
      %v604 = vsub.s32 0, %v603
      %v605 = vrot.slane %v600, %v604
      %v631 = vunpack.c.l.b16 %v576
      %v632 = vunpack.c.l.b16 %v577
      %v633 = vunpack.c.l.b16 %v578
      %v634 = vunpack.c.l.b16 %v579
      %v635 = vunpack.c.l.b16 %v580
      %v636 = vunpack.c.l.b16 %v581
      %v637 = vunpack.c.l.b16 %v582
      %v638 = vunpack.c.l.b16 %v583
      %v639 = vunpack.c.l.b16 %v584
      %v640 = vunpack.c.l.b16 %v585
      %v641 = vunpack.c.l.b16 %v586
      %v642 = vunpack.c.l.b16 %v587
      %v643 = vunpack.c.l.b16 %v588
      %v644 = vunpack.c.l.b16 %v589
      %v645 = vunpack.c.l.b16 %v590
      %v646 = vunpack.c.l.b16 %v591
      %v647 = vunpack.c.l.b16 %v592
      %v648 = vunpack.c.l.b16 %v593
      %v649 = vunpack.c.l.b16 %v594
      %v650 = vunpack.c.l.b16 %v595
      %v651 = vunpack.c.l.b16 %v596
      %v652 = vunpack.c.l.b16 %v597
      %v653 = vunpack.c.l.b16 %v598
      %v654 = vunpack.c.l.b16 %v599
      %v655 = vpack.c.b16 %v632, %v631
      %v656 = vpack.c.b16 %v634, %v633
      %v657 = vpack.c.b16 %v636, %v635
      %v658 = vpack.c.b16 %v638, %v637
      %v659 = vpack.c.b16 %v640, %v639
      %v660 = vpack.c.b16 %v642, %v641
      %v661 = vpack.c.b16 %v644, %v643
      %v662 = vpack.c.b16 %v646, %v645
      %v663 = vpack.c.b16 %v648, %v647
      %v664 = vpack.c.b16 %v650, %v649
      %v665 = vpack.c.b16 %v652, %v651
      %v666 = vpack.c.b16 %v654, %v653
      %vm679 = vcmask 523264
      %v681 = vsel %vm679, %v545, 0
      %v684 = vsel %vm679, %v547, 0
      %v687 = vsel %vm679, %v549, 0
      %v690 = vsel %vm679, %v551, 0
      %v693 = vsel %vm679, %v553, 0
      %v696 = vsel %vm679, %v555, 0
      %v699 = vsel %vm679, %v557, 0
      %v702 = vsel %vm679, %v559, 0
      %v705 = vsel %vm679, %v561, 0
      %v708 = vsel %vm679, %v563, 0
      %v711 = vsel %vm679, %v565, 0
      %v714 = vsel %vm679, %v567, 0
      %v717 = vsel %vm679, %v569, 0
      %v720 = vsel %vm679, %v571, 0
      %v723 = vsel %vm679, %v573, 0
      %v726 = vsel %vm679, %v575, 0
      %728 = vmatprep.subr.bf16.mxu0 0
      %729 = vmatpush1.bf16.msra.mxu0 %v655
      %730 = vmatprep.subr.bf16.mxu0 0
      %731 = vmatpush1.bf16.msra.mxu0 %v656
      %732 = vmatprep.subr.bf16.mxu0 0
      %733 = vmatpush1.bf16.msra.mxu0 %v657
      %734 = vmatprep.subr.bf16.mxu0 0
      %735 = vmatpush1.bf16.msra.mxu0 %v658
      %736 = vmatprep.subr.bf16.mxu0 0
      %737 = vmatpush1.bf16.msra.mxu0 %v659
      %738 = vmatprep.subr.bf16.mxu0 0
      %739 = vmatpush1.bf16.msra.mxu0 %v660
      %740 = vmatprep.subr.bf16.mxu0 0
      %741 = vmatpush1.bf16.msra.mxu0 %v661
      %742 = vmatprep.subr.bf16.mxu0 0
      %743 = vmatpush1.bf16.msra.mxu0 %v662
      %744 = vmatprep.subr.bf16.mxu0 0
      %745 = vmatpush1.bf16.msra.mxu0 %v663
      %746 = vmatprep.subr.bf16.mxu0 0
      %747 = vmatpush1.bf16.msra.mxu0 %v664
      %748 = vmatprep.subr.bf16.mxu0 0
      %749 = vmatpush1.bf16.msra.mxu0 %v665
      %750 = vmatprep.subr.bf16.mxu0 0
      %751 = vmatpush1.bf16.msra.mxu0 %v666
      %752 = vmatprep.subr.bf16.mxu0 0
      %753 = vmatpush1.bf16.msra.mxu0 0
      %754 = vmatprep.subr.bf16.mxu0 0
      %755 = vmatpush1.bf16.msra.mxu0 0
      %756 = vmatprep.subr.bf16.mxu0 0
      %757 = vmatpush1.bf16.msra.mxu0 0
      %758 = vmatprep.subr.bf16.mxu0 0
      %759 = vmatpush1.bf16.msra.mxu0 0
      %760 = vmatprep.mubr.bf16.mxu0 %v681
      %761 = vmatmul.mubr.bf16.gmra.mrb[0].mxu0 %v544
      %v762 = vpop.f32.mrb[0].mxu0
      %v763 = vadd.f32 %v605, %v762
      %v764 = vpop.f32.mrb[0].mxu0
      %v765 = vpop.f32.mrb[0].mxu0
      %v766 = vadd.f32 %v605, %v765
      %v767 = vpop.f32.mrb[0].mxu0
      %768 = vmatprep.mubr.bf16.mxu0 %v684
      %769 = vmatmul.mubr.bf16.gmra.mrb[0].mxu0 %v546
      %v770 = vpop.f32.mrb[0].mxu0
      %v771 = vadd.f32 %v605, %v770
      %v772 = vpop.f32.mrb[0].mxu0
      %v773 = vpop.f32.mrb[0].mxu0
      %v774 = vadd.f32 %v605, %v773
      %v775 = vpop.f32.mrb[0].mxu0
      %776 = vmatprep.mubr.bf16.mxu0 %v687
      %777 = vmatmul.mubr.bf16.gmra.mrb[0].mxu0 %v548
      %v778 = vpop.f32.mrb[0].mxu0
      %v779 = vadd.f32 %v605, %v778
      %v780 = vpop.f32.mrb[0].mxu0
      %v781 = vpop.f32.mrb[0].mxu0
      %v782 = vadd.f32 %v605, %v781
      %v783 = vpop.f32.mrb[0].mxu0
      %784 = vmatprep.mubr.bf16.mxu0 %v690
      %785 = vmatmul.mubr.bf16.gmra.mrb[0].mxu0 %v550
      %v786 = vpop.f32.mrb[0].mxu0
      %v787 = vadd.f32 %v605, %v786
      %v788 = vpop.f32.mrb[0].mxu0
      %v789 = vpop.f32.mrb[0].mxu0
      %v790 = vadd.f32 %v605, %v789
      %v791 = vpop.f32.mrb[0].mxu0
      %792 = vmatprep.mubr.bf16.mxu0 %v693
      %793 = vmatmul.mubr.bf16.gmra.mrb[0].mxu0 %v552
      %v794 = vpop.f32.mrb[0].mxu0
      %v795 = vadd.f32 %v605, %v794
      %v796 = vpop.f32.mrb[0].mxu0
      %v797 = vpop.f32.mrb[0].mxu0
      %v798 = vadd.f32 %v605, %v797
      %v799 = vpop.f32.mrb[0].mxu0
      %800 = vmatprep.mubr.bf16.mxu0 %v696
      %801 = vmatmul.mubr.bf16.gmra.mrb[0].mxu0 %v554
      %v802 = vpop.f32.mrb[0].mxu0
      %v803 = vadd.f32 %v605, %v802
      %v804 = vpop.f32.mrb[0].mxu0
      %v805 = vpop.f32.mrb[0].mxu0
      %v806 = vadd.f32 %v605, %v805
      %v807 = vpop.f32.mrb[0].mxu0
      %808 = vmatprep.mubr.bf16.mxu0 %v699
      %809 = vmatmul.mubr.bf16.gmra.mrb[0].mxu0 %v556
      %v810 = vpop.f32.mrb[0].mxu0
      %v811 = vadd.f32 %v605, %v810
      %v812 = vpop.f32.mrb[0].mxu0
      %v813 = vpop.f32.mrb[0].mxu0
      %v814 = vadd.f32 %v605, %v813
      %v815 = vpop.f32.mrb[0].mxu0
      %816 = vmatprep.mubr.bf16.mxu0 %v702
      %817 = vmatmul.mubr.bf16.gmra.mrb[0].mxu0 %v558
      %v818 = vpop.f32.mrb[0].mxu0
      %v819 = vadd.f32 %v605, %v818
      %v820 = vpop.f32.mrb[0].mxu0
      %v821 = vpop.f32.mrb[0].mxu0
      %v822 = vadd.f32 %v605, %v821
      %v823 = vpop.f32.mrb[0].mxu0
      %824 = vmatprep.mubr.bf16.mxu0 %v705
      %825 = vmatmul.mubr.bf16.gmra.mrb[0].mxu0 %v560
      %v826 = vpop.f32.mrb[0].mxu0
      %v827 = vadd.f32 %v605, %v826
      %v828 = vpop.f32.mrb[0].mxu0
      %v829 = vpop.f32.mrb[0].mxu0
      %v830 = vadd.f32 %v605, %v829
      %v831 = vpop.f32.mrb[0].mxu0
      %832 = vmatprep.mubr.bf16.mxu0 %v708
      %833 = vmatmul.mubr.bf16.gmra.mrb[0].mxu0 %v562
      %v834 = vpop.f32.mrb[0].mxu0
      %v835 = vadd.f32 %v605, %v834
      %v836 = vpop.f32.mrb[0].mxu0
      %v837 = vpop.f32.mrb[0].mxu0
      %v838 = vadd.f32 %v605, %v837
      %v839 = vpop.f32.mrb[0].mxu0
      %840 = vmatprep.mubr.bf16.mxu0 %v711
      %841 = vmatmul.mubr.bf16.gmra.mrb[0].mxu0 %v564
      %v842 = vpop.f32.mrb[0].mxu0
      %v843 = vadd.f32 %v605, %v842
      %v844 = vpop.f32.mrb[0].mxu0
      %v845 = vpop.f32.mrb[0].mxu0
      %v846 = vadd.f32 %v605, %v845
      %v847 = vpop.f32.mrb[0].mxu0
      %848 = vmatprep.mubr.bf16.mxu0 %v714
      %849 = vmatmul.mubr.bf16.gmra.mrb[0].mxu0 %v566
      %v850 = vpop.f32.mrb[0].mxu0
      %v851 = vadd.f32 %v605, %v850
      %v852 = vpop.f32.mrb[0].mxu0
      %v853 = vpop.f32.mrb[0].mxu0
      %v854 = vadd.f32 %v605, %v853
      %v855 = vpop.f32.mrb[0].mxu0
      %856 = vmatprep.mubr.bf16.mxu0 %v717
      %857 = vmatmul.mubr.bf16.gmra.mrb[0].mxu0 %v568
      %v858 = vpop.f32.mrb[0].mxu0
      %v859 = vadd.f32 %v605, %v858
      %v860 = vpop.f32.mrb[0].mxu0
      %v861 = vpop.f32.mrb[0].mxu0
      %v862 = vadd.f32 %v605, %v861
      %v863 = vpop.f32.mrb[0].mxu0
      %864 = vmatprep.mubr.bf16.mxu0 %v720
      %865 = vmatmul.mubr.bf16.gmra.mrb[0].mxu0 %v570
      %v866 = vpop.f32.mrb[0].mxu0
      %v867 = vadd.f32 %v605, %v866
      %v868 = vpop.f32.mrb[0].mxu0
      %v869 = vpop.f32.mrb[0].mxu0
      %v870 = vadd.f32 %v605, %v869
      %v871 = vpop.f32.mrb[0].mxu0
      %872 = vmatprep.mubr.bf16.mxu0 %v723
      %873 = vmatmul.mubr.bf16.gmra.mrb[0].mxu0 %v572
      %v874 = vpop.f32.mrb[0].mxu0
      %v875 = vadd.f32 %v605, %v874
      %v876 = vpop.f32.mrb[0].mxu0
      %v877 = vpop.f32.mrb[0].mxu0
      %v878 = vadd.f32 %v605, %v877
      %v879 = vpop.f32.mrb[0].mxu0
      %880 = vmatprep.mubr.bf16.mxu0 %v726
      %881 = vmatmul.mubr.bf16.gmra.mrb[0].mxu0 %v574
      %v882 = vpop.f32.mrb[0].mxu0
      %v883 = vadd.f32 %v605, %v882
      %v884 = vpop.f32.mrb[0].mxu0
      %v885 = vpop.f32.mrb[0].mxu0
      %v886 = vadd.f32 %v605, %v885
      %v887 = vpop.f32.mrb[0].mxu0
      %888 = vdwg.mxu0
      %v889 = vlaneseq
      %v890 = vand.u32 %v889, 127
      %vm891 = vcmp.lt.s32.totalorder %v890, 80
      %v892 = vxor.u32 %v763, 2147483648
      %v893 = vxor.u32 %v766, 2147483648
      %v894 = vxor.u32 %v771, 2147483648
      %v895 = vxor.u32 %v774, 2147483648
      %v896 = vxor.u32 %v779, 2147483648
      %v897 = vxor.u32 %v782, 2147483648
      %v898 = vxor.u32 %v787, 2147483648
      %v899 = vxor.u32 %v790, 2147483648
      %v900 = vxor.u32 %v795, 2147483648
      %v901 = vxor.u32 %v798, 2147483648
      %v902 = vxor.u32 %v803, 2147483648
      %v903 = vxor.u32 %v806, 2147483648
      %v904 = vxor.u32 %v811, 2147483648
      %v905 = vxor.u32 %v814, 2147483648
      %v906 = vxor.u32 %v819, 2147483648
      %v907 = vxor.u32 %v822, 2147483648
      %v908 = vxor.u32 %v827, 2147483648
      %v909 = vxor.u32 %v830, 2147483648
      %v910 = vxor.u32 %v835, 2147483648
      %v911 = vxor.u32 %v838, 2147483648
      %v912 = vxor.u32 %v843, 2147483648
      %v913 = vxor.u32 %v846, 2147483648
      %v914 = vxor.u32 %v851, 2147483648
      %v915 = vxor.u32 %v854, 2147483648
      %v916 = vxor.u32 %v859, 2147483648
      %v917 = vxor.u32 %v862, 2147483648
      %v918 = vxor.u32 %v867, 2147483648
      %v919 = vxor.u32 %v870, 2147483648
      %v920 = vxor.u32 %v875, 2147483648
      %v921 = vxor.u32 %v878, 2147483648
      %v922 = vxor.u32 %v883, 2147483648
      %v923 = vxor.u32 %v886, 2147483648
      %v924 = vmul.f32 %v892, 1.442695
      %v925 = vpow.pop %v924
      %v926 = vmul.f32 %v893, 1.442695
      %v927 = vpow.pop %v926
      %v928 = vmul.f32 %v894, 1.442695
      %v929 = vpow.pop %v928
      %v930 = vmul.f32 %v895, 1.442695
      %v931 = vpow.pop %v930
      %v932 = vmul.f32 %v896, 1.442695
      %v933 = vpow.pop %v932
      %v934 = vmul.f32 %v897, 1.442695
      %v935 = vpow.pop %v934
      %v936 = vmul.f32 %v898, 1.442695
      %v937 = vpow.pop %v936
      %v938 = vmul.f32 %v899, 1.442695
      %v939 = vpow.pop %v938
      %v940 = vmul.f32 %v900, 1.442695
      %v941 = vpow.pop %v940
      %v942 = vmul.f32 %v901, 1.442695
      %v943 = vpow.pop %v942
      %v944 = vmul.f32 %v902, 1.442695
      %v945 = vpow.pop %v944
      %v946 = vmul.f32 %v903, 1.442695
      %v947 = vpow.pop %v946
      %v948 = vmul.f32 %v904, 1.442695
      %v949 = vpow.pop %v948
      %v950 = vmul.f32 %v905, 1.442695
      %v951 = vpow.pop %v950
      %v952 = vmul.f32 %v906, 1.442695
      %v953 = vpow.pop %v952
      %v954 = vmul.f32 %v907, 1.442695
      %v955 = vpow.pop %v954
      %v956 = vmul.f32 %v908, 1.442695
      %v957 = vpow.pop %v956
      %v958 = vmul.f32 %v909, 1.442695
      %v959 = vpow.pop %v958
      %v960 = vmul.f32 %v910, 1.442695
      %v961 = vpow.pop %v960
      %v962 = vmul.f32 %v911, 1.442695
      %v963 = vpow.pop %v962
      %v964 = vmul.f32 %v912, 1.442695
      %v965 = vpow.pop %v964
      %v966 = vmul.f32 %v913, 1.442695
      %v967 = vpow.pop %v966
      %v968 = vmul.f32 %v914, 1.442695
      %v969 = vpow.pop %v968
      %v970 = vmul.f32 %v915, 1.442695
      %v971 = vpow.pop %v970
      %v972 = vmul.f32 %v916, 1.442695
      %v973 = vpow.pop %v972
      %v974 = vmul.f32 %v917, 1.442695
      %v975 = vpow.pop %v974
      %v976 = vmul.f32 %v918, 1.442695
      %v977 = vpow.pop %v976
      %v978 = vmul.f32 %v919, 1.442695
      %v979 = vpow.pop %v978
      %v980 = vmul.f32 %v920, 1.442695
      %v981 = vpow.pop %v980
      %v982 = vmul.f32 %v921, 1.442695
      %v983 = vpow.pop %v982
      %v984 = vmul.f32 %v922, 1.442695
      %v985 = vpow.pop %v984
      %v986 = vmul.f32 %v923, 1.442695
      %v987 = vpow.pop %v986
      %v988 = vadd.f32 %v925, 1.0
      %v989 = vadd.f32 %v927, 1.0
      %v990 = vadd.f32 %v929, 1.0
      %v991 = vadd.f32 %v931, 1.0
      %v992 = vadd.f32 %v933, 1.0
      %v993 = vadd.f32 %v935, 1.0
      %v994 = vadd.f32 %v937, 1.0
      %v995 = vadd.f32 %v939, 1.0
      %v996 = vadd.f32 %v941, 1.0
      %v997 = vadd.f32 %v943, 1.0
      %v998 = vadd.f32 %v945, 1.0
      %v999 = vadd.f32 %v947, 1.0
      %v1000 = vadd.f32 %v949, 1.0
      %v1001 = vadd.f32 %v951, 1.0
      %v1002 = vadd.f32 %v953, 1.0
      %v1003 = vadd.f32 %v955, 1.0
      %v1004 = vadd.f32 %v957, 1.0
      %v1005 = vadd.f32 %v959, 1.0
      %v1006 = vadd.f32 %v961, 1.0
      %v1007 = vadd.f32 %v963, 1.0
      %v1008 = vadd.f32 %v965, 1.0
      %v1009 = vadd.f32 %v967, 1.0
      %v1010 = vadd.f32 %v969, 1.0
      %v1011 = vadd.f32 %v971, 1.0
      %v1012 = vadd.f32 %v973, 1.0
      %v1013 = vadd.f32 %v975, 1.0
      %v1014 = vadd.f32 %v977, 1.0
      %v1015 = vadd.f32 %v979, 1.0
      %v1016 = vadd.f32 %v981, 1.0
      %v1017 = vadd.f32 %v983, 1.0
      %v1018 = vadd.f32 %v985, 1.0
      %v1019 = vadd.f32 %v987, 1.0
      %v1020 = vrcp.pop %v988
      %v1021 = vmul.f32 1.0, %v1020
      %v1022 = vrcp.pop %v989
      %v1023 = vmul.f32 1.0, %v1022
      %v1024 = vrcp.pop %v990
      %v1025 = vmul.f32 1.0, %v1024
      %v1026 = vrcp.pop %v991
      %v1027 = vmul.f32 1.0, %v1026
      %v1028 = vrcp.pop %v992
      %v1029 = vmul.f32 1.0, %v1028
      %v1030 = vrcp.pop %v993
      %v1031 = vmul.f32 1.0, %v1030
      %v1032 = vrcp.pop %v994
      %v1033 = vmul.f32 1.0, %v1032
      %v1034 = vrcp.pop %v995
      %v1035 = vmul.f32 1.0, %v1034
      %v1036 = vrcp.pop %v996
      %v1037 = vmul.f32 1.0, %v1036
      %v1038 = vrcp.pop %v997
      %v1039 = vmul.f32 1.0, %v1038
      %v1040 = vrcp.pop %v998
      %v1041 = vmul.f32 1.0, %v1040
      %v1042 = vrcp.pop %v999
      %v1043 = vmul.f32 1.0, %v1042
      %v1044 = vrcp.pop %v1000
      %v1045 = vmul.f32 1.0, %v1044
      %v1046 = vrcp.pop %v1001
      %v1047 = vmul.f32 1.0, %v1046
      %v1048 = vrcp.pop %v1002
      %v1049 = vmul.f32 1.0, %v1048
      %v1050 = vrcp.pop %v1003
      %v1051 = vmul.f32 1.0, %v1050
      %v1052 = vrcp.pop %v1004
      %v1053 = vmul.f32 1.0, %v1052
      %v1054 = vrcp.pop %v1005
      %v1055 = vmul.f32 1.0, %v1054
      %v1056 = vrcp.pop %v1006
      %v1057 = vmul.f32 1.0, %v1056
      %v1058 = vrcp.pop %v1007
      %v1059 = vmul.f32 1.0, %v1058
      %v1060 = vrcp.pop %v1008
      %v1061 = vmul.f32 1.0, %v1060
      %v1062 = vrcp.pop %v1009
      %v1063 = vmul.f32 1.0, %v1062
      %v1064 = vrcp.pop %v1010
      %v1065 = vmul.f32 1.0, %v1064
      %v1066 = vrcp.pop %v1011
      %v1067 = vmul.f32 1.0, %v1066
      %v1068 = vrcp.pop %v1012
      %v1069 = vmul.f32 1.0, %v1068
      %v1070 = vrcp.pop %v1013
      %v1071 = vmul.f32 1.0, %v1070
      %v1072 = vrcp.pop %v1014
      %v1073 = vmul.f32 1.0, %v1072
      %v1074 = vrcp.pop %v1015
      %v1075 = vmul.f32 1.0, %v1074
      %v1076 = vrcp.pop %v1016
      %v1077 = vmul.f32 1.0, %v1076
      %v1078 = vrcp.pop %v1017
      %v1079 = vmul.f32 1.0, %v1078
      %v1080 = vrcp.pop %v1018
      %v1081 = vmul.f32 1.0, %v1080
      %v1082 = vrcp.pop %v1019
      %v1083 = vmul.f32 1.0, %v1082
      %v1084 = vsel %vm891, %v1021, %v763
      %v1085 = vsel %vm891, %v1023, %v766
      %v1086 = vsel %vm891, %v1025, %v771
      %v1087 = vsel %vm891, %v1027, %v774
      %v1088 = vsel %vm891, %v1029, %v779
      %v1089 = vsel %vm891, %v1031, %v782
      %v1090 = vsel %vm891, %v1033, %v787
      %v1091 = vsel %vm891, %v1035, %v790
      %v1092 = vsel %vm891, %v1037, %v795
      %v1093 = vsel %vm891, %v1039, %v798
      %v1094 = vsel %vm891, %v1041, %v803
      %v1095 = vsel %vm891, %v1043, %v806
      %v1096 = vsel %vm891, %v1045, %v811
      %v1097 = vsel %vm891, %v1047, %v814
      %v1098 = vsel %vm891, %v1049, %v819
      %v1099 = vsel %vm891, %v1051, %v822
      %v1100 = vsel %vm891, %v1053, %v827
      %v1101 = vsel %vm891, %v1055, %v830
      %v1102 = vsel %vm891, %v1057, %v835
      %v1103 = vsel %vm891, %v1059, %v838
      %v1104 = vsel %vm891, %v1061, %v843
      %v1105 = vsel %vm891, %v1063, %v846
      %v1106 = vsel %vm891, %v1065, %v851
      %v1107 = vsel %vm891, %v1067, %v854
      %v1108 = vsel %vm891, %v1069, %v859
      %v1109 = vsel %vm891, %v1071, %v862
      %v1110 = vsel %vm891, %v1073, %v867
      %v1111 = vsel %vm891, %v1075, %v870
      %v1112 = vsel %vm891, %v1077, %v875
      %v1113 = vsel %vm891, %v1079, %v878
      %v1114 = vsel %vm891, %v1081, %v883
      %v1115 = vsel %vm891, %v1083, %v886
      %1116 = vst [vmem:[%s229] sm:$0xff] %v1084
      %1117 = vst [vmem:[%s229 + $0x8] sm:$0xff] %v1085
      %1118 = vst [vmem:[%s229 + $0x10] sm:$0xff] %v1086
      %1119 = vst [vmem:[%s229 + $0x18] sm:$0xff] %v1087
      %1120 = vst [vmem:[%s229 + $0x20] sm:$0xff] %v1088
      %1121 = vst [vmem:[%s229 + $0x28] sm:$0xff] %v1089
      %1122 = vst [vmem:[%s229 + $0x30] sm:$0xff] %v1090
      %1123 = vst [vmem:[%s229 + $0x38] sm:$0xff] %v1091
      %1124 = vst [vmem:[%s229 + $0x40] sm:$0xff] %v1092
      %1125 = vst [vmem:[%s229 + $0x48] sm:$0xff] %v1093
      %1126 = vst [vmem:[%s229 + $0x50] sm:$0xff] %v1094
      %1127 = vst [vmem:[%s229 + $0x58] sm:$0xff] %v1095
      %1128 = vst [vmem:[%s229 + $0x60] sm:$0xff] %v1096
      %1129 = vst [vmem:[%s229 + $0x68] sm:$0xff] %v1097
      %1130 = vst [vmem:[%s229 + $0x70] sm:$0xff] %v1098
      %1131 = vst [vmem:[%s229 + $0x78] sm:$0xff] %v1099
      %1132 = vst [vmem:[%s229 + $0x80] sm:$0xff] %v1100
      %1133 = vst [vmem:[%s229 + $0x88] sm:$0xff] %v1101
      %1134 = vst [vmem:[%s229 + $0x90] sm:$0xff] %v1102
      %1135 = vst [vmem:[%s229 + $0x98] sm:$0xff] %v1103
      %1136 = vst [vmem:[%s229 + $0xa0] sm:$0xff] %v1104
      %1137 = vst [vmem:[%s229 + $0xa8] sm:$0xff] %v1105
      %1138 = vst [vmem:[%s229 + $0xb0] sm:$0xff] %v1106
      %1139 = vst [vmem:[%s229 + $0xb8] sm:$0xff] %v1107
      %1140 = vst [vmem:[%s229 + $0xc0] sm:$0xff] %v1108
      %1141 = vst [vmem:[%s229 + $0xc8] sm:$0xff] %v1109
      %1142 = vst [vmem:[%s229 + $0xd0] sm:$0xff] %v1110
      %1143 = vst [vmem:[%s229 + $0xd8] sm:$0xff] %v1111
      %1144 = vst [vmem:[%s229 + $0xe0] sm:$0xff] %v1112
      %1145 = vst [vmem:[%s229 + $0xe8] sm:$0xff] %v1113
      %1146 = vst [vmem:[%s229 + $0xf0] sm:$0xff] %v1114
      %1147 = vst [vmem:[%s229 + $0xf8] sm:$0xff] %v1115
      %s1148 = smul.u32 32, %s16
      %p1149 = scmp.lt.s32.totalorder %s1148, 63
      %s1150 = scalar_select %p1149, %s1148, 63
      %s1151 = smul.addr %s1150, 8
      %s1152 = scalar_lea.vmem %s5, %s1151
      // Predicated region
      $region41: #{efficientnet_head_forward.3} parent=39 // pred_check
        %p1153 = pneg %p144
      $region42: #{efficientnet_head_forward.3} parent=39 // pred_check_branch
        %1155 = sbr.rel (%p1153) target = $region44
      $region43: #{efficientnet_head_forward.3} parent=39 // pred_region
        %s1156 = smul.u32 32, %s16
      $region44: #{efficientnet_head_forward.3} parent=39 // pred_fallthru
        _
    $region40: #{efficientnet_head_forward.3} parent=5 // pred_fallthru
      _
    %p1157 = scmp.le.s32.totalorder 2, %s11
    // Predicated region
    $region45: #{efficientnet_head_forward.3} parent=5 // pred_check
      %p1158 = pneg %p1157
    $region46: #{efficientnet_head_forward.3} parent=5 // pred_check_branch
      %1160 = sbr.rel (%p1158) target = $region48
    $region47: #{efficientnet_head_forward.3} parent=5 // pred_region
      %s1161 = ssub.s32 %s11, 2
      // Predicated region
      $region49: #{efficientnet_head_forward.3} parent=47 // pred_check
        %p1162 = pneg %p150
      $region50: #{efficientnet_head_forward.3} parent=47 // pred_check_branch
        %1164 = sbr.rel (%p1162) target = $region52
      $region51: #{efficientnet_head_forward.3} parent=47 // pred_region
        %s1165 = smul.u32 32, %s17
        %p1166 = scmp.lt.s32.totalorder %s1165, 63
        %s1167 = scalar_select %p1166, %s1165, 63
        %s1168 = smul.addr %s1167, 8
        %s1169 = scalar_lea.vmem %s5, %s1168
      $region52: #{efficientnet_head_forward.3} parent=47 // pred_fallthru
        _
    $region48: #{efficientnet_head_forward.3} parent=5 // pred_fallthru
      _
  $region6: #{efficientnet_head_forward.3} parent=0 // loop_footer
    %s15 = sadd.s32 1, %s11
  $region7: #{efficientnet_head_forward.3} parent=0 // loop_footer_branch
    %10 = sbr.rel target = $region3
  $region8: #{efficientnet_head_forward.3} parent=0 // loop_exit
    _

// kernel: efficientnet_head_forward.2
$region0: #{efficientnet_head_forward.2}
  #allocation0 [shape = 'u32[]', space=smem, size = 0x4, offset = 0x4, fixed_abs, tag = 'smem constant byte address 0x4 - core index']
  #allocation1 [shape = 'u32[144,128]{1,0:T(1,128)}', space=vmem, size = 0x12000, scoped, tag = 'internal scratch']
  #allocation2 [shape = 'bf16[18,18,64]{2,1,0:T(8,128)(2,1)}', space=vmem, size = 0x1b000, scoped, tag = 'scratch operand']
  %s0 = inlined_call_operand.vmem [shape: bf16[2,18,18,64], index: 0, kind: input, shape index: {}, may-alias: {0,1,2}]
  %s1 = inlined_call_operand.vmem [shape: bf16[2,18,18,64], index: 1, kind: input, shape index: {}, may-alias: {0,1,2}]
  %s2 = inlined_call_operand.vmem [shape: bf16[2,18,18,64], index: 2, kind: input, shape index: {}, may-alias: {0,1,2}]
  %s3 = inlined_call_operand.vmem [shape: bf16[576,192], index: 3, kind: input, shape index: {}]
  %s4 = inlined_call_operand.vmem [shape: bf16[2,1,256,192], index: 4, kind: output, shape index: {0}]
  %s5 = inlined_call_operand.vmem [shape: f32[2,1,2,192], index: 5, kind: output, shape index: {1}]
  %6 = xla_tuple %s4, %s5
  %s7 = sld [smem:[#allocation0]]
  $region57: #{efficientnet_head_forward.2} parent=0
    _
  %s9 = ssub.s32 1, %s7
  %s10 = scalar_select 0, %s9, %s7
  loop: start=0, step=1, limit=4
  $region2: #{efficientnet_head_forward.2} parent=0 // loop_pre_header
    _
  $region3: #{efficientnet_head_forward.2} parent=0 // loop_header
    %s12 = sphi 0, %s16
    %p13 = scmp.ge.s32.totalorder %s12, 4
    %s19 = sphi 0, %s31
    %s20 = sphi 0, %s27
    %s21 = sphi 0, %s19
    %s22 = sphi 0, %s20
    %s23 = sphi 0, %s21
    %s24 = sphi 0, %s22
    %s36 = sphi 0, %s38
    %s39 = sphi 0, %s36
    %s40 = sphi 0, %s39
    %s56 = sphi 0, %s40
    %s68 = sphi 0, %s70
    %s71 = sphi 0, %s68
    %s72 = sphi 0, %s71
    %s88 = sphi 0, %s72
    %s102 = sphi 0, %s104
    %s105 = sphi 0, %s102
    %s106 = sphi 0, %s105
    %s122 = sphi 0, %s106
    %s126 = sphi 0, %s126
    %s128 = sphi 0, %s126
    %s129 = sphi 0, %s128
    %s143 = sphi 0, %s129
    %s151 = sphi 0, %s153
    %s154 = sphi 0, %s151
    %s155 = sphi 0, %s154
    %s171 = sphi 0, %s155
    %s179 = sphi 0, %s181
    %s182 = sphi 0, %s179
    %s183 = sphi 0, %s182
    %s199 = sphi 0, %s183
  $region4: #{efficientnet_head_forward.2} parent=0 // loop_header_branch
    %15 = sbr.rel (%p13) target = $region8
  $region5: #{efficientnet_head_forward.2} parent=0 // loop_body
    %s17 = ssub.s32 %s12, 1
    %s18 = ssub.s32 %s12, 2
    %s25 = sadd.s32 1, %s20
    %p26 = scmp.ge.s32.totalorder %s25, 1
    %s27 = scalar_select %p26, 0, %s25
    %s28 = sadd.s32 1, %s19
    %s29 = scalar_select %p26, %s28, %s19
    %p30 = scmp.ge.s32.totalorder %s29, 2
    %s31 = scalar_select %p30, 0, %s29
    %s32 = ssub.s32 %s19, %s31
    %s33 = ssub.s32 %s20, %s27
    %s34 = sor.u32 %s32, %s33
    %p35 = scmp.eq.s32.totalorder %s34, 0
    %s37 = sadd.s32 %s36, 1
    %s38 = scalar_select %p35, %s36, %s37
    %p41 = pneg %p35
    %p42 = scmp.eq.s32.totalorder %s12, 1
    %p43 = por %p41, %p42
    %p44 = scmp.ne.s32.totalorder %s36, %s39
    %p45 = scmp.eq.s32.totalorder %s12, 0
    %p46 = por %p44, %p45
    %p47 = scmp.ne.s32.totalorder %s36, %s39
    %p48 = scmp.eq.s32.totalorder %s17, 1
    %p49 = por %p47, %p48
    %p50 = scmp.ne.s32.totalorder %s39, %s40
    %p51 = scmp.eq.s32.totalorder %s17, 0
    %p52 = por %p50, %p51
    %p53 = scmp.ne.s32.totalorder %s39, %s40
    %p54 = scmp.eq.s32.totalorder %s18, 1
    %p55 = por %p53, %p54
    %p57 = scmp.ne.s32.totalorder %s40, %s56
    %p58 = scmp.eq.s32.totalorder %s18, 0
    %p59 = por %p57, %p58
    %s60 = sadd.s32 %s20, 1
    %s61 = smul.u32 %s60, 16
    %s62 = sadd.s32 %s27, 1
    %s63 = smul.u32 %s62, 16
    %s64 = ssub.s32 %s19, %s31
    %s65 = ssub.s32 %s61, %s63
    %s66 = sor.u32 %s64, %s65
    %p67 = scmp.eq.s32.totalorder %s66, 0
    %s69 = sadd.s32 %s68, 1
    %s70 = scalar_select %p67, %s68, %s69
    %p73 = pneg %p67
    %p74 = scmp.eq.s32.totalorder %s12, 1
    %p75 = por %p73, %p74
    %p76 = scmp.ne.s32.totalorder %s68, %s71
    %p77 = scmp.eq.s32.totalorder %s12, 0
    %p78 = por %p76, %p77
    %p79 = scmp.ne.s32.totalorder %s68, %s71
    %p80 = scmp.eq.s32.totalorder %s17, 1
    %p81 = por %p79, %p80
    %p82 = scmp.ne.s32.totalorder %s71, %s72
    %p83 = scmp.eq.s32.totalorder %s17, 0
    %p84 = por %p82, %p83
    %p85 = scmp.ne.s32.totalorder %s71, %s72
    %p86 = scmp.eq.s32.totalorder %s18, 1
    %p87 = por %p85, %p86
    %p89 = scmp.ne.s32.totalorder %s72, %s88
    %p90 = scmp.eq.s32.totalorder %s18, 0
    %p91 = por %p89, %p90
    %s92 = sadd.s32 %s20, 1
    %s93 = smul.u32 %s92, 16
    %s94 = sadd.s32 %s93, 1
    %s95 = sadd.s32 %s27, 1
    %s96 = smul.u32 %s95, 16
    %s97 = sadd.s32 %s96, 1
    %s98 = ssub.s32 %s19, %s31
    %s99 = ssub.s32 %s94, %s97
    %s100 = sor.u32 %s98, %s99
    %p101 = scmp.eq.s32.totalorder %s100, 0
    %s103 = sadd.s32 %s102, 1
    %s104 = scalar_select %p101, %s102, %s103
    %p107 = pneg %p101
    %p108 = scmp.eq.s32.totalorder %s12, 1
    %p109 = por %p107, %p108
    %p110 = scmp.ne.s32.totalorder %s102, %s105
    %p111 = scmp.eq.s32.totalorder %s12, 0
    %p112 = por %p110, %p111
    %p113 = scmp.ne.s32.totalorder %s102, %s105
    %p114 = scmp.eq.s32.totalorder %s17, 1
    %p115 = por %p113, %p114
    %p116 = scmp.ne.s32.totalorder %s105, %s106
    %p117 = scmp.eq.s32.totalorder %s17, 0
    %p118 = por %p116, %p117
    %p119 = scmp.ne.s32.totalorder %s105, %s106
    %p120 = scmp.eq.s32.totalorder %s18, 1
    %p121 = por %p119, %p120
    %p123 = scmp.ne.s32.totalorder %s106, %s122
    %p124 = scmp.eq.s32.totalorder %s18, 0
    %p125 = por %p123, %p124
    %s127 = sadd.s32 %s126, 1
    %p130 = scmp.eq.s32.totalorder %s12, 1
    %p131 = scmp.ne.s32.totalorder %s126, %s128
    %p132 = scmp.eq.s32.totalorder %s12, 0
    %p133 = por %p131, %p132
    %p134 = scmp.ne.s32.totalorder %s126, %s128
    %p135 = scmp.eq.s32.totalorder %s17, 1
    %p136 = por %p134, %p135
    %p137 = scmp.ne.s32.totalorder %s128, %s129
    %p138 = scmp.eq.s32.totalorder %s17, 0
    %p139 = por %p137, %p138
    %p140 = scmp.ne.s32.totalorder %s128, %s129
    %p141 = scmp.eq.s32.totalorder %s18, 1
    %p142 = por %p140, %p141
    %p144 = scmp.ne.s32.totalorder %s129, %s143
    %p145 = scmp.eq.s32.totalorder %s18, 0
    %p146 = por %p144, %p145
    %s147 = ssub.s32 %s19, %s31
    %s148 = ssub.s32 %s20, %s27
    %s149 = sor.u32 %s147, %s148
    %p150 = scmp.eq.s32.totalorder %s149, 0
    %s152 = sadd.s32 %s151, 1
    %s153 = scalar_select %p150, %s151, %s152
    %p156 = pneg %p150
    %p157 = scmp.eq.s32.totalorder %s12, 1
    %p158 = por %p156, %p157
    %p159 = scmp.ne.s32.totalorder %s151, %s154
    %p160 = scmp.eq.s32.totalorder %s12, 0
    %p161 = por %p159, %p160
    %p162 = scmp.ne.s32.totalorder %s151, %s154
    %p163 = scmp.eq.s32.totalorder %s17, 1
    %p164 = por %p162, %p163
    %p165 = scmp.ne.s32.totalorder %s154, %s155
    %p166 = scmp.eq.s32.totalorder %s17, 0
    %p167 = por %p165, %p166
    %p168 = scmp.ne.s32.totalorder %s154, %s155
    %p169 = scmp.eq.s32.totalorder %s18, 1
    %p170 = por %p168, %p169
    %p172 = scmp.ne.s32.totalorder %s155, %s171
    %p173 = scmp.eq.s32.totalorder %s18, 0
    %p174 = por %p172, %p173
    %s175 = ssub.s32 %s19, %s31
    %s176 = ssub.s32 %s20, %s27
    %s177 = sor.u32 %s175, %s176
    %p178 = scmp.eq.s32.totalorder %s177, 0
    %s180 = sadd.s32 %s179, 1
    %s181 = scalar_select %p178, %s179, %s180
    %p184 = pneg %p178
    %p185 = scmp.eq.s32.totalorder %s12, 1
    %p186 = por %p184, %p185
    %p187 = scmp.ne.s32.totalorder %s179, %s182
    %p188 = scmp.eq.s32.totalorder %s12, 0
    %p189 = por %p187, %p188
    %p190 = scmp.ne.s32.totalorder %s179, %s182
    %p191 = scmp.eq.s32.totalorder %s17, 1
    %p192 = por %p190, %p191
    %p193 = scmp.ne.s32.totalorder %s182, %s183
    %p194 = scmp.eq.s32.totalorder %s17, 0
    %p195 = por %p193, %p194
    %p196 = scmp.ne.s32.totalorder %s182, %s183
    %p197 = scmp.eq.s32.totalorder %s18, 1
    %p198 = por %p196, %p197
    %p200 = scmp.ne.s32.totalorder %s183, %s199
    %p201 = scmp.eq.s32.totalorder %s18, 0
    %p202 = por %p200, %p201
    %p203 = scmp.le.s32.totalorder 1, %s12
    %p204 = scmp.lt.s32.totalorder %s12, 3
    %p205 = pnand %p203, %p204
    %p206 = pneg %p205
    // Predicated region
    $region9: #{efficientnet_head_forward.2} parent=5 // pred_check
      _
    $region10: #{efficientnet_head_forward.2} parent=5 // pred_check_branch
      %208 = sbr.rel (%p205) target = $region12
    $region11: #{efficientnet_head_forward.2} parent=5 // pred_region
      %s209 = ssub.s32 %s12, 1
      // Predicated region
      $region13: #{efficientnet_head_forward.2} parent=11 // pred_check
        %p210 = pneg %p139
      $region14: #{efficientnet_head_forward.2} parent=11 // pred_check_branch
        %212 = sbr.rel (%p210) target = $region16
      $region15: #{efficientnet_head_forward.2} parent=11 // pred_region
        _
      $region16: #{efficientnet_head_forward.2} parent=11 // pred_fallthru
        _
    $region12: #{efficientnet_head_forward.2} parent=5 // pred_fallthru
      _
    %p213 = scmp.lt.s32.totalorder %s12, 2
    // Predicated region
    $region17: #{efficientnet_head_forward.2} parent=5 // pred_check
      %p214 = pneg %p213
    $region18: #{efficientnet_head_forward.2} parent=5 // pred_check_branch
      %216 = sbr.rel (%p214) target = $region20
    $region19: #{efficientnet_head_forward.2} parent=5 // pred_region
      // Predicated region
      $region21: #{efficientnet_head_forward.2} parent=19 // pred_check
        %p217 = pneg %p46
      $region22: #{efficientnet_head_forward.2} parent=19 // pred_check_branch
        %219 = sbr.rel (%p217) target = $region24
      $region23: #{efficientnet_head_forward.2} parent=19 // pred_region
        %s220 = smul.u32 16, %s20
        %s221 = ssub.s32 18, %s220
        %p222 = scmp.lt.s32.totalorder %s221, 16
        %s223 = scalar_select %p222, %s221, 16
        %s224 = smul.u32 64, %s223
        %s225 = smul.u32 %s224, 3
        %p226 = scmp.lt.s32.totalorder %s19, 1
        %s227 = scalar_select %p226, %s19, 1
        %p228 = scmp.lt.s32.totalorder %s220, 17
        %s229 = scalar_select %p228, %s220, 17
        %s230 = smul.addr %s229, 3
        %s231 = smul.addr %s227, 54
        %s232 = sadd.s32 %s230, %s231
        %s233 = smul.addr %s232, 4
        %s234 = scalar_lea.vmem %s0, %s233
        %s235 = smul.u32 16, %s20
        %s236 = ssub.s32 18, %s235
        %p237 = scmp.lt.s32.totalorder %s236, 16
        %s238 = scalar_select %p237, %s236, 16
        %s239 = smul.u32 64, %s238
        %s240 = smul.u32 %s239, 3
      $region24: #{efficientnet_head_forward.2} parent=19 // pred_fallthru
        _
      // Predicated region
      $region25: #{efficientnet_head_forward.2} parent=19 // pred_check
        %p241 = pneg %p78
      $region26: #{efficientnet_head_forward.2} parent=19 // pred_check_branch
        %243 = sbr.rel (%p241) target = $region28
      $region27: #{efficientnet_head_forward.2} parent=19 // pred_region
        %s244 = sadd.s32 %s20, 1
        %s245 = smul.u32 %s244, 16
        %p246 = scmp.lt.s32.totalorder %s19, 1
        %s247 = scalar_select %p246, %s19, 1
        %p248 = scmp.lt.s32.totalorder %s245, 17
        %s249 = scalar_select %p248, %s245, 17
        %s250 = smul.addr %s249, 3
        %s251 = smul.addr %s247, 54
        %s252 = sadd.s32 %s250, %s251
        %s253 = smul.addr %s252, 4
        %s254 = scalar_lea.vmem %s1, %s253
        %s255 = sadd.s32 %s20, 1
        %s256 = smul.u32 %s255, 16
      $region28: #{efficientnet_head_forward.2} parent=19 // pred_fallthru
        _
      // Predicated region
      $region29: #{efficientnet_head_forward.2} parent=19 // pred_check
        %p257 = pneg %p112
      $region30: #{efficientnet_head_forward.2} parent=19 // pred_check_branch
        %259 = sbr.rel (%p257) target = $region32
      $region31: #{efficientnet_head_forward.2} parent=19 // pred_region
        %s260 = sadd.s32 %s20, 1
        %s261 = smul.u32 %s260, 16
        %s262 = sadd.s32 %s261, 1
        %p263 = scmp.lt.s32.totalorder %s19, 1
        %s264 = scalar_select %p263, %s19, 1
        %p265 = scmp.lt.s32.totalorder %s262, 17
        %s266 = scalar_select %p265, %s262, 17
        %s267 = smul.addr %s266, 3
        %s268 = smul.addr %s264, 54
        %s269 = sadd.s32 %s267, %s268
        %s270 = smul.addr %s269, 4
        %s271 = scalar_lea.vmem %s2, %s270
        %s272 = sadd.s32 %s20, 1
        %s273 = smul.u32 %s272, 16
        %s274 = sadd.s32 %s273, 1
      $region32: #{efficientnet_head_forward.2} parent=19 // pred_fallthru
        _
    $region20: #{efficientnet_head_forward.2} parent=5 // pred_fallthru
      _
    %p275 = scmp.le.s32.totalorder 1, %s12
    %p276 = scmp.lt.s32.totalorder %s12, 3
    %p277 = pnand %p275, %p276
    %p278 = pneg %p277
    // Predicated region
    $region33: #{efficientnet_head_forward.2} parent=5 // pred_check
      _
    $region34: #{efficientnet_head_forward.2} parent=5 // pred_check_branch
      %280 = sbr.rel (%p277) target = $region36
    $region35: #{efficientnet_head_forward.2} parent=5 // pred_region
      %s281 = ssub.s32 %s12, 1
      %s282 = smul.u32 16, %s22
      %s283 = ssub.s32 18, %s282
      %p284 = scmp.lt.s32.totalorder %s283, 16
      %s285 = scalar_select %p284, %s283, 16
      %s286 = smul.u32 64, %s285
      %s287 = smul.u32 %s286, 3
      %p288 = scmp.lt.s32.totalorder %s21, 1
      %s289 = scalar_select %p288, %s21, 1
      %p290 = scmp.lt.s32.totalorder %s282, 17
      %s291 = scalar_select %p290, %s282, 17
      %s292 = smul.addr %s291, 3
      %s293 = smul.addr %s289, 54
      %s294 = sadd.s32 %s292, %s293
      %s295 = smul.addr %s294, 4
      %s296 = scalar_lea.vmem %s0, %s295
      %p297 = pneg %p52
      %p298 = pneg %p49
      %s299 = sadd.s32 %s22, 1
      %s300 = smul.u32 %s299, 16
      %p301 = scmp.lt.s32.totalorder %s21, 1
      %s302 = scalar_select %p301, %s21, 1
      %p303 = scmp.lt.s32.totalorder %s300, 17
      %s304 = scalar_select %p303, %s300, 17
      %s305 = smul.addr %s304, 3
      %s306 = smul.addr %s302, 54
      %s307 = sadd.s32 %s305, %s306
      %s308 = smul.addr %s307, 4
      %s309 = scalar_lea.vmem %s1, %s308
      %p310 = pneg %p84
      %p311 = pneg %p81
      %s312 = sadd.s32 %s22, 1
      %s313 = smul.u32 %s312, 16
      %s314 = sadd.s32 %s313, 1
      %p315 = scmp.lt.s32.totalorder %s21, 1
      %s316 = scalar_select %p315, %s21, 1
      %p317 = scmp.lt.s32.totalorder %s314, 17
      %s318 = scalar_select %p317, %s314, 17
      %s319 = smul.addr %s318, 3
      %s320 = smul.addr %s316, 54
      %s321 = sadd.s32 %s319, %s320
      %s322 = smul.addr %s321, 4
      %s323 = scalar_lea.vmem %s2, %s322
      %p324 = pneg %p118
      %p325 = pneg %p115
      %p326 = pneg %p139
      %p327 = pneg %p136
      %p328 = pneg %p167
      %p329 = pneg %p164
      %p330 = scmp.lt.s32.totalorder %s21, 1
      %s331 = scalar_select %p330, %s21, 1
      %p332 = scmp.lt.s32.totalorder %s22, 0
      %s333 = scalar_select %p332, %s22, 0
      %s334 = smul.addr %s333, 64
      %s335 = smul.addr %s331, 64
      %s336 = sadd.s32 %s334, %s335
      %s337 = smul.addr %s336, 4
      %s338 = scalar_lea.vmem %s4, %s337
      %p339 = pneg %p195
      %p340 = pneg %p192
      %p341 = scmp.lt.s32.totalorder %s21, 1
      %s342 = scalar_select %p341, %s21, 1
      %p343 = scmp.lt.s32.totalorder %s22, 0
      %s344 = scalar_select %p343, %s22, 0
      %s345 = smul.addr %s344, 2
      %s346 = smul.addr %s342, 2
      %s347 = sadd.s32 %s345, %s346
      %s348 = smul.addr %s347, 2
      %s349 = scalar_lea.vmem %s5, %s348
      %s350 = smul.u32 16, %s22
      %s351 = ssub.s32 18, %s350
      %p352 = scmp.lt.s32.totalorder %s351, 16
      %s353 = scalar_select %p352, %s351, 16
      %s354 = smul.u32 64, %s353
      %s355 = smul.u32 %s354, 3
      %p356 = scmp.lt.s32.totalorder %s21, 1
      %s357 = scalar_select %p356, %s21, 1
      %p358 = scmp.lt.s32.totalorder %s350, 17
      %s359 = scalar_select %p358, %s350, 17
      %s360 = smul.addr %s359, 3
      %s361 = smul.addr %s357, 54
      %s362 = sadd.s32 %s360, %s361
      %s363 = smul.addr %s362, 4
      %s364 = scalar_lea.vmem %s0, %s363
      %s365 = smul.u32 16, %s22
      %s366 = ssub.s32 18, %s365
      %p367 = scmp.lt.s32.totalorder %s366, 16
      %s368 = scalar_select %p367, %s366, 16
      %s369 = smul.u32 64, %s368
      %s370 = smul.u32 %s369, 3
      %s371 = sadd.s32 %s22, 1
      %s372 = smul.u32 %s371, 16
      %p373 = scmp.lt.s32.totalorder %s21, 1
      %s374 = scalar_select %p373, %s21, 1
      %p375 = scmp.lt.s32.totalorder %s372, 17
      %s376 = scalar_select %p375, %s372, 17
      %s377 = smul.addr %s376, 3
      %s378 = smul.addr %s374, 54
      %s379 = sadd.s32 %s377, %s378
      %s380 = smul.addr %s379, 4
      %s381 = scalar_lea.vmem %s1, %s380
      %s382 = sadd.s32 %s22, 1
      %s383 = smul.u32 %s382, 16
      %s384 = sadd.s32 %s22, 1
      %s385 = smul.u32 %s384, 16
      %s386 = sadd.s32 %s385, 1
      %p387 = scmp.lt.s32.totalorder %s21, 1
      %s388 = scalar_select %p387, %s21, 1
      %p389 = scmp.lt.s32.totalorder %s386, 17
      %s390 = scalar_select %p389, %s386, 17
      %s391 = smul.addr %s390, 3
      %s392 = smul.addr %s388, 54
      %s393 = sadd.s32 %s391, %s392
      %s394 = smul.addr %s393, 4
      %s395 = scalar_lea.vmem %s2, %s394
      %s396 = sadd.s32 %s22, 1
      %s397 = smul.u32 %s396, 16
      %s398 = sadd.s32 %s397, 1
      %p399 = scmp.lt.s32.totalorder %s21, 1
      %s400 = scalar_select %p399, %s21, 1
      %p401 = scmp.lt.s32.totalorder %s22, 0
      %s402 = scalar_select %p401, %s22, 0
      %s403 = smul.addr %s402, 64
      %s404 = smul.addr %s400, 64
      %s405 = sadd.s32 %s403, %s404
      %s406 = smul.addr %s405, 4
      %s407 = scalar_lea.vmem %s4, %s406
      %p408 = scmp.lt.s32.totalorder %s21, 1
      %s409 = scalar_select %p408, %s21, 1
      %p410 = scmp.lt.s32.totalorder %s22, 0
      %s411 = scalar_select %p410, %s22, 0
      %s412 = smul.addr %s411, 2
      %s413 = smul.addr %s409, 2
      %s414 = sadd.s32 %s412, %s413
      %s415 = smul.addr %s414, 2
      %s416 = scalar_lea.vmem %s5, %s415
      %v418 = vld [vmem:[%s364] sm:$0xf]
      %v419 = vld [vmem:[%s364 + $0x4] sm:$0xf]
      %v420 = vld [vmem:[%s364 + $0x8] sm:$0x1]
      %v421 = vld [vmem:[%s364 + $0xc] sm:$0xf]
      %v422 = vld [vmem:[%s364 + $0x10] sm:$0xf]
      %v423 = vld [vmem:[%s364 + $0x14] sm:$0x1]
      %v424 = vld [vmem:[%s364 + $0x18] sm:$0xf]
      %v425 = vld [vmem:[%s364 + $0x1c] sm:$0xf]
      %v426 = vld [vmem:[%s364 + $0x20] sm:$0x1]
      %v427 = vld [vmem:[%s364 + $0x24] sm:$0xf]
      %v428 = vld [vmem:[%s364 + $0x28] sm:$0xf]
      %v429 = vld [vmem:[%s364 + $0x2c] sm:$0x1]
      %v430 = vld [vmem:[%s364 + $0x30] sm:$0xf]
      %v431 = vld [vmem:[%s364 + $0x34] sm:$0xf]
      %v432 = vld [vmem:[%s364 + $0x38] sm:$0x1]
      %v433 = vld [vmem:[%s364 + $0x3c] sm:$0xf]
      %v434 = vld [vmem:[%s364 + $0x40] sm:$0xf]
      %v435 = vld [vmem:[%s364 + $0x44] sm:$0x1]
      %v436 = vld [vmem:[%s364 + $0x48] sm:$0xf]
      %v437 = vld [vmem:[%s364 + $0x4c] sm:$0xf]
      %v438 = vld [vmem:[%s364 + $0x50] sm:$0x1]
      %v439 = vld [vmem:[%s364 + $0x54] sm:$0xf]
      %v440 = vld [vmem:[%s364 + $0x58] sm:$0xf]
      %v441 = vld [vmem:[%s364 + $0x5c] sm:$0x1]
      %v442 = vld [vmem:[%s364 + $0x60] sm:$0xf]
      %v443 = vld [vmem:[%s364 + $0x64] sm:$0xf]
      %v444 = vld [vmem:[%s364 + $0x68] sm:$0x1]
      %v445 = vld [vmem:[%s364 + $0x6c] sm:$0xf]
      %v446 = vld [vmem:[%s364 + $0x70] sm:$0xf]
      %v447 = vld [vmem:[%s364 + $0x74] sm:$0x1]
      %v448 = vld [vmem:[%s364 + $0x78] sm:$0xf]
      %v449 = vld [vmem:[%s364 + $0x7c] sm:$0xf]
      %v450 = vld [vmem:[%s364 + $0x80] sm:$0x1]
      %v451 = vld [vmem:[%s364 + $0x84] sm:$0xf]
      %v452 = vld [vmem:[%s364 + $0x88] sm:$0xf]
      %v453 = vld [vmem:[%s364 + $0x8c] sm:$0x1]
      %v454 = vld [vmem:[%s364 + $0x90] sm:$0xf]
      %v455 = vld [vmem:[%s364 + $0x94] sm:$0xf]
      %v456 = vld [vmem:[%s364 + $0x98] sm:$0x1]
      %v457 = vld [vmem:[%s364 + $0x9c] sm:$0xf]
      %v458 = vld [vmem:[%s364 + $0xa0] sm:$0xf]
      %v459 = vld [vmem:[%s364 + $0xa4] sm:$0x1]
      %v460 = vld [vmem:[%s364 + $0xa8] sm:$0xf]
      %v461 = vld [vmem:[%s364 + $0xac] sm:$0xf]
      %v462 = vld [vmem:[%s364 + $0xb0] sm:$0x1]
      %v463 = vld [vmem:[%s364 + $0xb4] sm:$0xf]
      %v464 = vld [vmem:[%s364 + $0xb8] sm:$0xf]
      %v465 = vld [vmem:[%s364 + $0xbc] sm:$0x1]
      %vm466 = vcmask 519168
      %467 = vst.msk [vmem:[#allocation2] sm:$0xf] %vm466, %v418
      %468 = vst.msk [vmem:[#allocation2 + $0x4] sm:$0xf] %vm466, %v419
      %vm469 = vcmask 516096
      %470 = vst.msk [vmem:[#allocation2 + $0x8] sm:$0x1] %vm469, %v420
      %471 = vst.msk [vmem:[#allocation2 + $0xc] sm:$0xf] %vm466, %v421
      %472 = vst.msk [vmem:[#allocation2 + $0x10] sm:$0xf] %vm466, %v422
      %473 = vst.msk [vmem:[#allocation2 + $0x14] sm:$0x1] %vm469, %v423
      %474 = vst.msk [vmem:[#allocation2 + $0x18] sm:$0xf] %vm466, %v424
      %475 = vst.msk [vmem:[#allocation2 + $0x1c] sm:$0xf] %vm466, %v425
      %476 = vst.msk [vmem:[#allocation2 + $0x20] sm:$0x1] %vm469, %v426
      %477 = vst.msk [vmem:[#allocation2 + $0x24] sm:$0xf] %vm466, %v427
      %478 = vst.msk [vmem:[#allocation2 + $0x28] sm:$0xf] %vm466, %v428
      %479 = vst.msk [vmem:[#allocation2 + $0x2c] sm:$0x1] %vm469, %v429
      %480 = vst.msk [vmem:[#allocation2 + $0x30] sm:$0xf] %vm466, %v430
      %481 = vst.msk [vmem:[#allocation2 + $0x34] sm:$0xf] %vm466, %v431
      %482 = vst.msk [vmem:[#allocation2 + $0x38] sm:$0x1] %vm469, %v432
      %483 = vst.msk [vmem:[#allocation2 + $0x3c] sm:$0xf] %vm466, %v433
      %484 = vst.msk [vmem:[#allocation2 + $0x40] sm:$0xf] %vm466, %v434
      %485 = vst.msk [vmem:[#allocation2 + $0x44] sm:$0x1] %vm469, %v435
      %486 = vst.msk [vmem:[#allocation2 + $0x48] sm:$0xf] %vm466, %v436
      %487 = vst.msk [vmem:[#allocation2 + $0x4c] sm:$0xf] %vm466, %v437
      %488 = vst.msk [vmem:[#allocation2 + $0x50] sm:$0x1] %vm469, %v438
      %489 = vst.msk [vmem:[#allocation2 + $0x54] sm:$0xf] %vm466, %v439
      %490 = vst.msk [vmem:[#allocation2 + $0x58] sm:$0xf] %vm466, %v440
      %491 = vst.msk [vmem:[#allocation2 + $0x5c] sm:$0x1] %vm469, %v441
      %492 = vst.msk [vmem:[#allocation2 + $0x60] sm:$0xf] %vm466, %v442
      %493 = vst.msk [vmem:[#allocation2 + $0x64] sm:$0xf] %vm466, %v443
      %494 = vst.msk [vmem:[#allocation2 + $0x68] sm:$0x1] %vm469, %v444
      %495 = vst.msk [vmem:[#allocation2 + $0x6c] sm:$0xf] %vm466, %v445
      %496 = vst.msk [vmem:[#allocation2 + $0x70] sm:$0xf] %vm466, %v446
      %497 = vst.msk [vmem:[#allocation2 + $0x74] sm:$0x1] %vm469, %v447
      %498 = vst.msk [vmem:[#allocation2 + $0x78] sm:$0xf] %vm466, %v448
      %499 = vst.msk [vmem:[#allocation2 + $0x7c] sm:$0xf] %vm466, %v449
      %500 = vst.msk [vmem:[#allocation2 + $0x80] sm:$0x1] %vm469, %v450
      %501 = vst.msk [vmem:[#allocation2 + $0x84] sm:$0xf] %vm466, %v451
      %502 = vst.msk [vmem:[#allocation2 + $0x88] sm:$0xf] %vm466, %v452
      %503 = vst.msk [vmem:[#allocation2 + $0x8c] sm:$0x1] %vm469, %v453
      %504 = vst.msk [vmem:[#allocation2 + $0x90] sm:$0xf] %vm466, %v454
      %505 = vst.msk [vmem:[#allocation2 + $0x94] sm:$0xf] %vm466, %v455
      %506 = vst.msk [vmem:[#allocation2 + $0x98] sm:$0x1] %vm469, %v456
      %507 = vst.msk [vmem:[#allocation2 + $0x9c] sm:$0xf] %vm466, %v457
      %508 = vst.msk [vmem:[#allocation2 + $0xa0] sm:$0xf] %vm466, %v458
      %509 = vst.msk [vmem:[#allocation2 + $0xa4] sm:$0x1] %vm469, %v459
      %510 = vst.msk [vmem:[#allocation2 + $0xa8] sm:$0xf] %vm466, %v460
      %511 = vst.msk [vmem:[#allocation2 + $0xac] sm:$0xf] %vm466, %v461
      %512 = vst.msk [vmem:[#allocation2 + $0xb0] sm:$0x1] %vm469, %v462
      %513 = vst.msk [vmem:[#allocation2 + $0xb4] sm:$0xf] %vm466, %v463
      %514 = vst.msk [vmem:[#allocation2 + $0xb8] sm:$0xf] %vm466, %v464
      %515 = vst.msk [vmem:[#allocation2 + $0xbc] sm:$0x1] %vm469, %v465
      %v516 = vld [vmem:[%s381] sm:$0xf]
      %v517 = vld [vmem:[%s381 + $0x4] sm:$0xf]
      %v518 = vld [vmem:[%s381 + $0x8] sm:$0x1]
      %s519 = scalar_lea.vmem [#allocation2], 192
      %520 = vst.msk [vmem:[%s519] sm:$0xf] %vm466, %v516
      %521 = vst.msk [vmem:[%s519 + $0x4] sm:$0xf] %vm466, %v517
      %522 = vst.msk [vmem:[%s519 + $0x8] sm:$0x1] %vm469, %v518
      %v523 = vld [vmem:[%s395] sm:$0xf]
      %v524 = vld [vmem:[%s395 + $0x4] sm:$0xf]
      %v525 = vld [vmem:[%s395 + $0x8] sm:$0x1]
      %s526 = scalar_lea.vmem [#allocation2], 204
      %527 = vst.msk [vmem:[%s526] sm:$0xf] %vm466, %v523
      %528 = vst.msk [vmem:[%s526 + $0x4] sm:$0xf] %vm466, %v524
      %529 = vst.msk [vmem:[%s526 + $0x8] sm:$0x1] %vm469, %v525
      %v530 = vld [vmem:[#allocation2] sm:$0xf]
      %v531 = vld [vmem:[#allocation2 + $0x4] sm:$0xf]
      %v532 = vld [vmem:[#allocation2 + $0xc] sm:$0xf]
      %v533 = vld [vmem:[#allocation2 + $0x10] sm:$0xf]
      %v534 = vld [vmem:[#allocation2 + $0x18] sm:$0xf]
      %v535 = vld [vmem:[#allocation2 + $0x1c] sm:$0xf]
      %v536 = vld [vmem:[#allocation2 + $0x24] sm:$0xf]
      %v537 = vld [vmem:[#allocation2 + $0x28] sm:$0xf]
      %v538 = vld [vmem:[#allocation2 + $0x30] sm:$0xf]
      %v539 = vld [vmem:[#allocation2 + $0x34] sm:$0xf]
      %v540 = vld [vmem:[#allocation2 + $0x3c] sm:$0xf]
      %v541 = vld [vmem:[#allocation2 + $0x40] sm:$0xf]
      %v542 = vld [vmem:[#allocation2 + $0x48] sm:$0xf]
      %v543 = vld [vmem:[#allocation2 + $0x4c] sm:$0xf]
      %v544 = vld [vmem:[#allocation2 + $0x54] sm:$0xf]
      %v545 = vld [vmem:[#allocation2 + $0x58] sm:$0xf]
      %v546 = vld [vmem:[#allocation2 + $0x60] sm:$0xf]
      %v547 = vld [vmem:[#allocation2 + $0x64] sm:$0xf]
      %v548 = vld [vmem:[#allocation2 + $0x6c] sm:$0xf]
      %v549 = vld [vmem:[#allocation2 + $0x70] sm:$0xf]
      %v550 = vld [vmem:[#allocation2 + $0x78] sm:$0xf]
      %v551 = vld [vmem:[#allocation2 + $0x7c] sm:$0xf]
      %v552 = vld [vmem:[#allocation2 + $0x84] sm:$0xf]
      %v553 = vld [vmem:[#allocation2 + $0x88] sm:$0xf]
      %v554 = vld [vmem:[#allocation2 + $0x90] sm:$0xf]
      %v555 = vld [vmem:[#allocation2 + $0x94] sm:$0xf]
      %v556 = vld [vmem:[#allocation2 + $0x9c] sm:$0xf]
      %v557 = vld [vmem:[#allocation2 + $0xa0] sm:$0xf]
      %v558 = vld [vmem:[#allocation2 + $0xa8] sm:$0xf]
      %v559 = vld [vmem:[#allocation2 + $0xac] sm:$0xf]
      %v560 = vld [vmem:[#allocation2 + $0xb4] sm:$0xf]
      %v561 = vld [vmem:[#allocation2 + $0xb8] sm:$0xf]
      %v562 = vld [vmem:[#allocation2 + $0x8] sm:$0x1]
      %v563 = vld [vmem:[#allocation2 + $0x14] sm:$0x1]
      %v564 = vld [vmem:[#allocation2 + $0x20] sm:$0x1]
      %v565 = vld [vmem:[#allocation2 + $0x2c] sm:$0x1]
      %v566 = vld [vmem:[#allocation2 + $0x38] sm:$0x1]
      %v567 = vld [vmem:[#allocation2 + $0x44] sm:$0x1]
      %v568 = vld [vmem:[#allocation2 + $0x50] sm:$0x1]
      %v569 = vld [vmem:[#allocation2 + $0x5c] sm:$0x1]
      %v570 = vld [vmem:[#allocation2 + $0x68] sm:$0x1]
      %v571 = vld [vmem:[#allocation2 + $0x74] sm:$0x1]
      %v572 = vld [vmem:[#allocation2 + $0x80] sm:$0x1]
      %v573 = vld [vmem:[#allocation2 + $0x8c] sm:$0x1]
      %v574 = vld [vmem:[#allocation2 + $0x98] sm:$0x1]
      %v575 = vld [vmem:[#allocation2 + $0xa4] sm:$0x1]
      %v576 = vld [vmem:[#allocation2 + $0xb0] sm:$0x1]
      %v577 = vld [vmem:[#allocation2 + $0xbc] sm:$0x1]
      %vm578 = vsmask.f32 3328
      %vm579 = vsmask.f32 7440
      %vm580 = vmor %vm578, %vm579
      %v582 = vshrl.u32 %v530, 16
      %v584 = vrot.slane %v582, 4
      %v585 = vshll.u32 %v530, 16
      %v587 = vrot.slane %v585, 5
      %v588 = vor.u32 %v584, %v587
      %v589 = vrot.slane %v588, 4
      %v591 = vshll.u32 %v531, 16
      %v593 = vrot.slane %v591, 5
      %v594 = vsel %vm580, %v589, %v593
      %v595 = vshrl.u32 %v531, 16
      %v597 = vrot.slane %v595, 4
      %v598 = vor.u32 %v597, %v593
      %v599 = vrot.slane %v598, 4
      %v601 = vshll.u32 %v562, 16
      %v603 = vrot.slane %v601, 5
      %v604 = vsel %vm580, %v599, %v603
      %v606 = vshrl.u32 %v532, 16
      %v608 = vrot.slane %v606, 4
      %v609 = vshll.u32 %v532, 16
      %v611 = vrot.slane %v609, 5
      %v612 = vor.u32 %v608, %v611
      %v613 = vrot.slane %v612, 4
      %v615 = vshll.u32 %v533, 16
      %v617 = vrot.slane %v615, 5
      %v618 = vsel %vm580, %v613, %v617
      %v619 = vshrl.u32 %v533, 16
      %v621 = vrot.slane %v619, 4
      %v622 = vor.u32 %v621, %v617
      %v623 = vrot.slane %v622, 4
      %v625 = vshll.u32 %v563, 16
      %v627 = vrot.slane %v625, 5
      %v628 = vsel %vm580, %v623, %v627
      %v630 = vshrl.u32 %v534, 16
      %v632 = vrot.slane %v630, 4
      %v633 = vshll.u32 %v534, 16
      %v635 = vrot.slane %v633, 5
      %v636 = vor.u32 %v632, %v635
      %v637 = vrot.slane %v636, 4
      %v639 = vshll.u32 %v535, 16
      %v641 = vrot.slane %v639, 5
      %v642 = vsel %vm580, %v637, %v641
      %v643 = vshrl.u32 %v535, 16
      %v645 = vrot.slane %v643, 4
      %v646 = vor.u32 %v645, %v641
      %v647 = vrot.slane %v646, 4
      %v649 = vshll.u32 %v564, 16
      %v651 = vrot.slane %v649, 5
      %v652 = vsel %vm580, %v647, %v651
      %v654 = vshrl.u32 %v536, 16
      %v656 = vrot.slane %v654, 4
      %v657 = vshll.u32 %v536, 16
      %v659 = vrot.slane %v657, 5
      %v660 = vor.u32 %v656, %v659
      %v661 = vrot.slane %v660, 4
      %v663 = vshll.u32 %v537, 16
      %v665 = vrot.slane %v663, 5
      %v666 = vsel %vm580, %v661, %v665
      %v667 = vshrl.u32 %v537, 16
      %v669 = vrot.slane %v667, 4
      %v670 = vor.u32 %v669, %v665
      %v671 = vrot.slane %v670, 4
      %v673 = vshll.u32 %v565, 16
      %v675 = vrot.slane %v673, 5
      %v676 = vsel %vm580, %v671, %v675
      %v678 = vshrl.u32 %v538, 16
      %v680 = vrot.slane %v678, 4
      %v681 = vshll.u32 %v538, 16
      %v683 = vrot.slane %v681, 5
      %v684 = vor.u32 %v680, %v683
      %v685 = vrot.slane %v684, 4
      %v687 = vshll.u32 %v539, 16
      %v689 = vrot.slane %v687, 5
      %v690 = vsel %vm580, %v685, %v689
      %v691 = vshrl.u32 %v539, 16
      %v693 = vrot.slane %v691, 4
      %v694 = vor.u32 %v693, %v689
      %v695 = vrot.slane %v694, 4
      %v697 = vshll.u32 %v566, 16
      %v699 = vrot.slane %v697, 5
      %v700 = vsel %vm580, %v695, %v699
      %v702 = vshrl.u32 %v540, 16
      %v704 = vrot.slane %v702, 4
      %v705 = vshll.u32 %v540, 16
      %v707 = vrot.slane %v705, 5
      %v708 = vor.u32 %v704, %v707
      %v709 = vrot.slane %v708, 4
      %v711 = vshll.u32 %v541, 16
      %v713 = vrot.slane %v711, 5
      %v714 = vsel %vm580, %v709, %v713
      %v715 = vshrl.u32 %v541, 16
      %v717 = vrot.slane %v715, 4
      %v718 = vor.u32 %v717, %v713
      %v719 = vrot.slane %v718, 4
      %v721 = vshll.u32 %v567, 16
      %v723 = vrot.slane %v721, 5
      %v724 = vsel %vm580, %v719, %v723
      %v726 = vshrl.u32 %v542, 16
      %v728 = vrot.slane %v726, 4
      %v729 = vshll.u32 %v542, 16
      %v731 = vrot.slane %v729, 5
      %v732 = vor.u32 %v728, %v731
      %v733 = vrot.slane %v732, 4
      %v735 = vshll.u32 %v543, 16
      %v737 = vrot.slane %v735, 5
      %v738 = vsel %vm580, %v733, %v737
      %v739 = vshrl.u32 %v543, 16
      %v741 = vrot.slane %v739, 4
      %v742 = vor.u32 %v741, %v737
      %v743 = vrot.slane %v742, 4
      %v745 = vshll.u32 %v568, 16
      %v747 = vrot.slane %v745, 5
      %v748 = vsel %vm580, %v743, %v747
      %v750 = vshrl.u32 %v544, 16
      %v752 = vrot.slane %v750, 4
      %v753 = vshll.u32 %v544, 16
      %v755 = vrot.slane %v753, 5
      %v756 = vor.u32 %v752, %v755
      %v757 = vrot.slane %v756, 4
      %v759 = vshll.u32 %v545, 16
      %v761 = vrot.slane %v759, 5
      %v762 = vsel %vm580, %v757, %v761
      %v763 = vshrl.u32 %v545, 16
      %v765 = vrot.slane %v763, 4
      %v766 = vor.u32 %v765, %v761
      %v767 = vrot.slane %v766, 4
      %v769 = vshll.u32 %v569, 16
      %v771 = vrot.slane %v769, 5
      %v772 = vsel %vm580, %v767, %v771
      %v774 = vshrl.u32 %v546, 16
      %v776 = vrot.slane %v774, 4
      %v777 = vshll.u32 %v546, 16
      %v779 = vrot.slane %v777, 5
      %v780 = vor.u32 %v776, %v779
      %v781 = vrot.slane %v780, 4
      %v783 = vshll.u32 %v547, 16
      %v785 = vrot.slane %v783, 5
      %v786 = vsel %vm580, %v781, %v785
      %v787 = vshrl.u32 %v547, 16
      %v789 = vrot.slane %v787, 4
      %v790 = vor.u32 %v789, %v785
      %v791 = vrot.slane %v790, 4
      %v793 = vshll.u32 %v570, 16
      %v795 = vrot.slane %v793, 5
      %v796 = vsel %vm580, %v791, %v795
      %v798 = vshrl.u32 %v548, 16
      %v800 = vrot.slane %v798, 4
      %v801 = vshll.u32 %v548, 16
      %v803 = vrot.slane %v801, 5
      %v804 = vor.u32 %v800, %v803
      %v805 = vrot.slane %v804, 4
      %v807 = vshll.u32 %v549, 16
      %v809 = vrot.slane %v807, 5
      %v810 = vsel %vm580, %v805, %v809
      %v811 = vshrl.u32 %v549, 16
      %v813 = vrot.slane %v811, 4
      %v814 = vor.u32 %v813, %v809
      %v815 = vrot.slane %v814, 4
      %v817 = vshll.u32 %v571, 16
      %v819 = vrot.slane %v817, 5
      %v820 = vsel %vm580, %v815, %v819
      %v822 = vshrl.u32 %v550, 16
      %v824 = vrot.slane %v822, 4
      %v825 = vshll.u32 %v550, 16
      %v827 = vrot.slane %v825, 5
      %v828 = vor.u32 %v824, %v827
      %v829 = vrot.slane %v828, 4
      %v831 = vshll.u32 %v551, 16
      %v833 = vrot.slane %v831, 5
      %v834 = vsel %vm580, %v829, %v833
      %v835 = vshrl.u32 %v551, 16
      %v837 = vrot.slane %v835, 4
      %v838 = vor.u32 %v837, %v833
      %v839 = vrot.slane %v838, 4
      %v841 = vshll.u32 %v572, 16
      %v843 = vrot.slane %v841, 5
      %v844 = vsel %vm580, %v839, %v843
      %v846 = vshrl.u32 %v552, 16
      %v848 = vrot.slane %v846, 4
      %v849 = vshll.u32 %v552, 16
      %v851 = vrot.slane %v849, 5
      %v852 = vor.u32 %v848, %v851
      %v853 = vrot.slane %v852, 4
      %v855 = vshll.u32 %v553, 16
      %v857 = vrot.slane %v855, 5
      %v858 = vsel %vm580, %v853, %v857
      %v859 = vshrl.u32 %v553, 16
      %v861 = vrot.slane %v859, 4
      %v862 = vor.u32 %v861, %v857
      %v863 = vrot.slane %v862, 4
      %v865 = vshll.u32 %v573, 16
      %v867 = vrot.slane %v865, 5
      %v868 = vsel %vm580, %v863, %v867
      %v870 = vshrl.u32 %v554, 16
      %v872 = vrot.slane %v870, 4
      %v873 = vshll.u32 %v554, 16
      %v875 = vrot.slane %v873, 5
      %v876 = vor.u32 %v872, %v875
      %v877 = vrot.slane %v876, 4
      %v879 = vshll.u32 %v555, 16
      %v881 = vrot.slane %v879, 5
      %v882 = vsel %vm580, %v877, %v881
      %v883 = vshrl.u32 %v555, 16
      %v885 = vrot.slane %v883, 4
      %v886 = vor.u32 %v885, %v881
      %v887 = vrot.slane %v886, 4
      %v889 = vshll.u32 %v574, 16
      %v891 = vrot.slane %v889, 5
      %v892 = vsel %vm580, %v887, %v891
      %v894 = vshrl.u32 %v556, 16
      %v896 = vrot.slane %v894, 4
      %v897 = vshll.u32 %v556, 16
      %v899 = vrot.slane %v897, 5
      %v900 = vor.u32 %v896, %v899
      %v901 = vrot.slane %v900, 4
      %v903 = vshll.u32 %v557, 16
      %v905 = vrot.slane %v903, 5
      %v906 = vsel %vm580, %v901, %v905
      %v907 = vshrl.u32 %v557, 16
      %v909 = vrot.slane %v907, 4
      %v910 = vor.u32 %v909, %v905
      %v911 = vrot.slane %v910, 4
      %v913 = vshll.u32 %v575, 16
      %v915 = vrot.slane %v913, 5
      %v916 = vsel %vm580, %v911, %v915
      %v918 = vshrl.u32 %v558, 16
      %v920 = vrot.slane %v918, 4
      %v921 = vshll.u32 %v558, 16
      %v923 = vrot.slane %v921, 5
      %v924 = vor.u32 %v920, %v923
      %v925 = vrot.slane %v924, 4
      %v927 = vshll.u32 %v559, 16
      %v929 = vrot.slane %v927, 5
      %v930 = vsel %vm580, %v925, %v929
      %v931 = vshrl.u32 %v559, 16
      %v933 = vrot.slane %v931, 4
      %v934 = vor.u32 %v933, %v929
      %v935 = vrot.slane %v934, 4
      %v937 = vshll.u32 %v576, 16
      %v939 = vrot.slane %v937, 5
      %v940 = vsel %vm580, %v935, %v939
      %v942 = vshrl.u32 %v560, 16
      %v944 = vrot.slane %v942, 4
      %v945 = vshll.u32 %v560, 16
      %v947 = vrot.slane %v945, 5
      %v948 = vor.u32 %v944, %v947
      %v949 = vrot.slane %v948, 4
      %v951 = vshll.u32 %v561, 16
      %v953 = vrot.slane %v951, 5
      %v954 = vsel %vm580, %v949, %v953
      %v955 = vshrl.u32 %v561, 16
      %v957 = vrot.slane %v955, 4
      %v958 = vor.u32 %v957, %v953
      %v959 = vrot.slane %v958, 4
      %v961 = vshll.u32 %v577, 16
      %v963 = vrot.slane %v961, 5
      %v964 = vsel %vm580, %v959, %v963
      %v965 = vld [vmem:[#allocation2] sm:$0xe]
      %v966 = vld [vmem:[#allocation2 + $0xc] sm:$0xe]
      %v967 = vld [vmem:[#allocation2 + $0x18] sm:$0xe]
      %v968 = vld [vmem:[#allocation2 + $0x24] sm:$0xe]
      %v969 = vld [vmem:[#allocation2 + $0x30] sm:$0xe]
      %v970 = vld [vmem:[#allocation2 + $0x3c] sm:$0xe]
      %v971 = vld [vmem:[#allocation2 + $0x48] sm:$0xe]
      %v972 = vld [vmem:[#allocation2 + $0x54] sm:$0xe]
      %v973 = vld [vmem:[#allocation2 + $0x60] sm:$0xe]
      %v974 = vld [vmem:[#allocation2 + $0x6c] sm:$0xe]
      %v975 = vld [vmem:[#allocation2 + $0x78] sm:$0xe]
      %v976 = vld [vmem:[#allocation2 + $0x84] sm:$0xe]
      %v977 = vld [vmem:[#allocation2 + $0x90] sm:$0xe]
      %v978 = vld [vmem:[#allocation2 + $0x9c] sm:$0xe]
      %v979 = vld [vmem:[#allocation2 + $0xa8] sm:$0xe]
      %v980 = vld [vmem:[#allocation2 + $0xb4] sm:$0xe]
      %vm1029 = vcmask 1042432
      %vm1030 = vcmask 1046532
      %vm1031 = vmor %vm1029, %vm1030
      %v1032 = vrot.slane %v965, 5
      %v1033 = vrot.slane %v1032, 4
      %v1034 = vrot.slane %v531, 5
      %v1035 = vsel %vm1031, %v1033, %v1034
      %v1036 = vrot.slane %v1034, 4
      %v1037 = vrot.slane %v562, 5
      %v1038 = vsel %vm1031, %v1036, %v1037
      %v1039 = vrot.slane %v966, 5
      %v1040 = vrot.slane %v1039, 4
      %v1041 = vrot.slane %v533, 5
      %v1042 = vsel %vm1031, %v1040, %v1041
      %v1043 = vrot.slane %v1041, 4
      %v1044 = vrot.slane %v563, 5
      %v1045 = vsel %vm1031, %v1043, %v1044
      %v1046 = vrot.slane %v967, 5
      %v1047 = vrot.slane %v1046, 4
      %v1048 = vrot.slane %v535, 5
      %v1049 = vsel %vm1031, %v1047, %v1048
      %v1050 = vrot.slane %v1048, 4
      %v1051 = vrot.slane %v564, 5
      %v1052 = vsel %vm1031, %v1050, %v1051
      %v1053 = vrot.slane %v968, 5
      %v1054 = vrot.slane %v1053, 4
      %v1055 = vrot.slane %v537, 5
      %v1056 = vsel %vm1031, %v1054, %v1055
      %v1057 = vrot.slane %v1055, 4
      %v1058 = vrot.slane %v565, 5
      %v1059 = vsel %vm1031, %v1057, %v1058
      %v1060 = vrot.slane %v969, 5
      %v1061 = vrot.slane %v1060, 4
      %v1062 = vrot.slane %v539, 5
      %v1063 = vsel %vm1031, %v1061, %v1062
      %v1064 = vrot.slane %v1062, 4
      %v1065 = vrot.slane %v566, 5
      %v1066 = vsel %vm1031, %v1064, %v1065
      %v1067 = vrot.slane %v970, 5
      %v1068 = vrot.slane %v1067, 4
      %v1069 = vrot.slane %v541, 5
      %v1070 = vsel %vm1031, %v1068, %v1069
      %v1071 = vrot.slane %v1069, 4
      %v1072 = vrot.slane %v567, 5
      %v1073 = vsel %vm1031, %v1071, %v1072
      %v1074 = vrot.slane %v971, 5
      %v1075 = vrot.slane %v1074, 4
      %v1076 = vrot.slane %v543, 5
      %v1077 = vsel %vm1031, %v1075, %v1076
      %v1078 = vrot.slane %v1076, 4
      %v1079 = vrot.slane %v568, 5
      %v1080 = vsel %vm1031, %v1078, %v1079
      %v1081 = vrot.slane %v972, 5
      %v1082 = vrot.slane %v1081, 4
      %v1083 = vrot.slane %v545, 5
      %v1084 = vsel %vm1031, %v1082, %v1083
      %v1085 = vrot.slane %v1083, 4
      %v1086 = vrot.slane %v569, 5
      %v1087 = vsel %vm1031, %v1085, %v1086
      %v1088 = vrot.slane %v973, 5
      %v1089 = vrot.slane %v1088, 4
      %v1090 = vrot.slane %v547, 5
      %v1091 = vsel %vm1031, %v1089, %v1090
      %v1092 = vrot.slane %v1090, 4
      %v1093 = vrot.slane %v570, 5
      %v1094 = vsel %vm1031, %v1092, %v1093
      %v1095 = vrot.slane %v974, 5
      %v1096 = vrot.slane %v1095, 4
      %v1097 = vrot.slane %v549, 5
      %v1098 = vsel %vm1031, %v1096, %v1097
      %v1099 = vrot.slane %v1097, 4
      %v1100 = vrot.slane %v571, 5
      %v1101 = vsel %vm1031, %v1099, %v1100
      %v1102 = vrot.slane %v975, 5
      %v1103 = vrot.slane %v1102, 4
      %v1104 = vrot.slane %v551, 5
      %v1105 = vsel %vm1031, %v1103, %v1104
      %v1106 = vrot.slane %v1104, 4
      %v1107 = vrot.slane %v572, 5
      %v1108 = vsel %vm1031, %v1106, %v1107
      %v1109 = vrot.slane %v976, 5
      %v1110 = vrot.slane %v1109, 4
      %v1111 = vrot.slane %v553, 5
      %v1112 = vsel %vm1031, %v1110, %v1111
      %v1113 = vrot.slane %v1111, 4
      %v1114 = vrot.slane %v573, 5
      %v1115 = vsel %vm1031, %v1113, %v1114
      %v1116 = vrot.slane %v977, 5
      %v1117 = vrot.slane %v1116, 4
      %v1118 = vrot.slane %v555, 5
      %v1119 = vsel %vm1031, %v1117, %v1118
      %v1120 = vrot.slane %v1118, 4
      %v1121 = vrot.slane %v574, 5
      %v1122 = vsel %vm1031, %v1120, %v1121
      %v1123 = vrot.slane %v978, 5
      %v1124 = vrot.slane %v1123, 4
      %v1125 = vrot.slane %v557, 5
      %v1126 = vsel %vm1031, %v1124, %v1125
      %v1127 = vrot.slane %v1125, 4
      %v1128 = vrot.slane %v575, 5
      %v1129 = vsel %vm1031, %v1127, %v1128
      %v1130 = vrot.slane %v979, 5
      %v1131 = vrot.slane %v1130, 4
      %v1132 = vrot.slane %v559, 5
      %v1133 = vsel %vm1031, %v1131, %v1132
      %v1134 = vrot.slane %v1132, 4
      %v1135 = vrot.slane %v576, 5
      %v1136 = vsel %vm1031, %v1134, %v1135
      %v1137 = vrot.slane %v980, 5
      %v1138 = vrot.slane %v1137, 4
      %v1139 = vrot.slane %v561, 5
      %v1140 = vsel %vm1031, %v1138, %v1139
      %v1141 = vrot.slane %v1139, 4
      %v1142 = vrot.slane %v577, 5
      %v1143 = vsel %vm1031, %v1141, %v1142
      %s1144 = scalar_lea.vmem [#allocation2], 12
      %v1145 = vld [vmem:[%s1144] sm:$0xf]
      %v1146 = vld [vmem:[%s1144 + $0x4] sm:$0xf]
      %v1147 = vld [vmem:[%s1144 + $0xc] sm:$0xf]
      %v1148 = vld [vmem:[%s1144 + $0x10] sm:$0xf]
      %v1149 = vld [vmem:[%s1144 + $0x18] sm:$0xf]
      %v1150 = vld [vmem:[%s1144 + $0x1c] sm:$0xf]
      %v1151 = vld [vmem:[%s1144 + $0x24] sm:$0xf]
      %v1152 = vld [vmem:[%s1144 + $0x28] sm:$0xf]
      %v1153 = vld [vmem:[%s1144 + $0x30] sm:$0xf]
      %v1154 = vld [vmem:[%s1144 + $0x34] sm:$0xf]
      %v1155 = vld [vmem:[%s1144 + $0x3c] sm:$0xf]
      %v1156 = vld [vmem:[%s1144 + $0x40] sm:$0xf]
      %v1157 = vld [vmem:[%s1144 + $0x48] sm:$0xf]
      %v1158 = vld [vmem:[%s1144 + $0x4c] sm:$0xf]
      %v1159 = vld [vmem:[%s1144 + $0x54] sm:$0xf]
      %v1160 = vld [vmem:[%s1144 + $0x58] sm:$0xf]
      %v1161 = vld [vmem:[%s1144 + $0x60] sm:$0xf]
      %v1162 = vld [vmem:[%s1144 + $0x64] sm:$0xf]
      %v1163 = vld [vmem:[%s1144 + $0x6c] sm:$0xf]
      %v1164 = vld [vmem:[%s1144 + $0x70] sm:$0xf]
      %v1165 = vld [vmem:[%s1144 + $0x78] sm:$0xf]
      %v1166 = vld [vmem:[%s1144 + $0x7c] sm:$0xf]
      %v1167 = vld [vmem:[%s1144 + $0x84] sm:$0xf]
      %v1168 = vld [vmem:[%s1144 + $0x88] sm:$0xf]
      %v1169 = vld [vmem:[%s1144 + $0x90] sm:$0xf]
      %v1170 = vld [vmem:[%s1144 + $0x94] sm:$0xf]
      %v1171 = vld [vmem:[%s1144 + $0x9c] sm:$0xf]
      %v1172 = vld [vmem:[%s1144 + $0xa0] sm:$0xf]
      %v1173 = vld [vmem:[%s1144 + $0xa8] sm:$0xf]
      %v1174 = vld [vmem:[%s1144 + $0xac] sm:$0xf]
      %v1175 = vld [vmem:[%s1144 + $0xb4] sm:$0xf]
      %v1176 = vld [vmem:[%s1144 + $0xb8] sm:$0xf]
      %v1177 = vld [vmem:[%s1144 + $0x8] sm:$0x1]
      %v1178 = vld [vmem:[%s1144 + $0x14] sm:$0x1]
      %v1179 = vld [vmem:[%s1144 + $0x20] sm:$0x1]
      %v1180 = vld [vmem:[%s1144 + $0x2c] sm:$0x1]
      %v1181 = vld [vmem:[%s1144 + $0x38] sm:$0x1]
      %v1182 = vld [vmem:[%s1144 + $0x44] sm:$0x1]
      %v1183 = vld [vmem:[%s1144 + $0x50] sm:$0x1]
      %v1184 = vld [vmem:[%s1144 + $0x5c] sm:$0x1]
      %v1185 = vld [vmem:[%s1144 + $0x68] sm:$0x1]
      %v1186 = vld [vmem:[%s1144 + $0x74] sm:$0x1]
      %v1187 = vld [vmem:[%s1144 + $0x80] sm:$0x1]
      %v1188 = vld [vmem:[%s1144 + $0x8c] sm:$0x1]
      %v1189 = vld [vmem:[%s1144 + $0x98] sm:$0x1]
      %v1190 = vld [vmem:[%s1144 + $0xa4] sm:$0x1]
      %v1191 = vld [vmem:[%s1144 + $0xb0] sm:$0x1]
      %v1192 = vld [vmem:[%s1144 + $0xbc] sm:$0x1]
      %v1194 = vshrl.u32 %v1145, 16
      %v1196 = vrot.slane %v1194, 4
      %v1197 = vshll.u32 %v1145, 16
      %v1199 = vrot.slane %v1197, 5
      %v1200 = vor.u32 %v1196, %v1199
      %v1201 = vrot.slane %v1200, 4
      %v1203 = vshll.u32 %v1146, 16
      %v1205 = vrot.slane %v1203, 5
      %v1206 = vsel %vm580, %v1201, %v1205
      %v1207 = vshrl.u32 %v1146, 16
      %v1209 = vrot.slane %v1207, 4
      %v1210 = vor.u32 %v1209, %v1205
      %v1211 = vrot.slane %v1210, 4
      %v1213 = vshll.u32 %v1177, 16
      %v1215 = vrot.slane %v1213, 5
      %v1216 = vsel %vm580, %v1211, %v1215
      %v1218 = vshrl.u32 %v1147, 16
      %v1220 = vrot.slane %v1218, 4
      %v1221 = vshll.u32 %v1147, 16
      %v1223 = vrot.slane %v1221, 5
      %v1224 = vor.u32 %v1220, %v1223
      %v1225 = vrot.slane %v1224, 4
      %v1227 = vshll.u32 %v1148, 16
      %v1229 = vrot.slane %v1227, 5
      %v1230 = vsel %vm580, %v1225, %v1229
      %v1231 = vshrl.u32 %v1148, 16
      %v1233 = vrot.slane %v1231, 4
      %v1234 = vor.u32 %v1233, %v1229
      %v1235 = vrot.slane %v1234, 4
      %v1237 = vshll.u32 %v1178, 16
      %v1239 = vrot.slane %v1237, 5
      %v1240 = vsel %vm580, %v1235, %v1239
      %v1242 = vshrl.u32 %v1149, 16
      %v1244 = vrot.slane %v1242, 4
      %v1245 = vshll.u32 %v1149, 16
      %v1247 = vrot.slane %v1245, 5
      %v1248 = vor.u32 %v1244, %v1247
      %v1249 = vrot.slane %v1248, 4
      %v1251 = vshll.u32 %v1150, 16
      %v1253 = vrot.slane %v1251, 5
      %v1254 = vsel %vm580, %v1249, %v1253
      %v1255 = vshrl.u32 %v1150, 16
      %v1257 = vrot.slane %v1255, 4
      %v1258 = vor.u32 %v1257, %v1253
      %v1259 = vrot.slane %v1258, 4
      %v1261 = vshll.u32 %v1179, 16
      %v1263 = vrot.slane %v1261, 5
      %v1264 = vsel %vm580, %v1259, %v1263
      %v1266 = vshrl.u32 %v1151, 16
      %v1268 = vrot.slane %v1266, 4
      %v1269 = vshll.u32 %v1151, 16
      %v1271 = vrot.slane %v1269, 5
      %v1272 = vor.u32 %v1268, %v1271
      %v1273 = vrot.slane %v1272, 4
      %v1275 = vshll.u32 %v1152, 16
      %v1277 = vrot.slane %v1275, 5
      %v1278 = vsel %vm580, %v1273, %v1277
      %v1279 = vshrl.u32 %v1152, 16
      %v1281 = vrot.slane %v1279, 4
      %v1282 = vor.u32 %v1281, %v1277
      %v1283 = vrot.slane %v1282, 4
      %v1285 = vshll.u32 %v1180, 16
      %v1287 = vrot.slane %v1285, 5
      %v1288 = vsel %vm580, %v1283, %v1287
      %v1290 = vshrl.u32 %v1153, 16
      %v1292 = vrot.slane %v1290, 4
      %v1293 = vshll.u32 %v1153, 16
      %v1295 = vrot.slane %v1293, 5
      %v1296 = vor.u32 %v1292, %v1295
      %v1297 = vrot.slane %v1296, 4
      %v1299 = vshll.u32 %v1154, 16
      %v1301 = vrot.slane %v1299, 5
      %v1302 = vsel %vm580, %v1297, %v1301
      %v1303 = vshrl.u32 %v1154, 16
      %v1305 = vrot.slane %v1303, 4
      %v1306 = vor.u32 %v1305, %v1301
      %v1307 = vrot.slane %v1306, 4
      %v1309 = vshll.u32 %v1181, 16
      %v1311 = vrot.slane %v1309, 5
      %v1312 = vsel %vm580, %v1307, %v1311
      %v1314 = vshrl.u32 %v1155, 16
      %v1316 = vrot.slane %v1314, 4
      %v1317 = vshll.u32 %v1155, 16
      %v1319 = vrot.slane %v1317, 5
      %v1320 = vor.u32 %v1316, %v1319
      %v1321 = vrot.slane %v1320, 4
      %v1323 = vshll.u32 %v1156, 16
      %v1325 = vrot.slane %v1323, 5
      %v1326 = vsel %vm580, %v1321, %v1325
      %v1327 = vshrl.u32 %v1156, 16
      %v1329 = vrot.slane %v1327, 4
      %v1330 = vor.u32 %v1329, %v1325
      %v1331 = vrot.slane %v1330, 4
      %v1333 = vshll.u32 %v1182, 16
      %v1335 = vrot.slane %v1333, 5
      %v1336 = vsel %vm580, %v1331, %v1335
      %v1338 = vshrl.u32 %v1157, 16
      %v1340 = vrot.slane %v1338, 4
      %v1341 = vshll.u32 %v1157, 16
      %v1343 = vrot.slane %v1341, 5
      %v1344 = vor.u32 %v1340, %v1343
      %v1345 = vrot.slane %v1344, 4
      %v1347 = vshll.u32 %v1158, 16
      %v1349 = vrot.slane %v1347, 5
      %v1350 = vsel %vm580, %v1345, %v1349
      %v1351 = vshrl.u32 %v1158, 16
      %v1353 = vrot.slane %v1351, 4
      %v1354 = vor.u32 %v1353, %v1349
      %v1355 = vrot.slane %v1354, 4
      %v1357 = vshll.u32 %v1183, 16
      %v1359 = vrot.slane %v1357, 5
      %v1360 = vsel %vm580, %v1355, %v1359
      %v1362 = vshrl.u32 %v1159, 16
      %v1364 = vrot.slane %v1362, 4
      %v1365 = vshll.u32 %v1159, 16
      %v1367 = vrot.slane %v1365, 5
      %v1368 = vor.u32 %v1364, %v1367
      %v1369 = vrot.slane %v1368, 4
      %v1371 = vshll.u32 %v1160, 16
      %v1373 = vrot.slane %v1371, 5
      %v1374 = vsel %vm580, %v1369, %v1373
      %v1375 = vshrl.u32 %v1160, 16
      %v1377 = vrot.slane %v1375, 4
      %v1378 = vor.u32 %v1377, %v1373
      %v1379 = vrot.slane %v1378, 4
      %v1381 = vshll.u32 %v1184, 16
      %v1383 = vrot.slane %v1381, 5
      %v1384 = vsel %vm580, %v1379, %v1383
      %v1386 = vshrl.u32 %v1161, 16
      %v1388 = vrot.slane %v1386, 4
      %v1389 = vshll.u32 %v1161, 16
      %v1391 = vrot.slane %v1389, 5
      %v1392 = vor.u32 %v1388, %v1391
      %v1393 = vrot.slane %v1392, 4
      %v1395 = vshll.u32 %v1162, 16
      %v1397 = vrot.slane %v1395, 5
      %v1398 = vsel %vm580, %v1393, %v1397
      %v1399 = vshrl.u32 %v1162, 16
      %v1401 = vrot.slane %v1399, 4
      %v1402 = vor.u32 %v1401, %v1397
      %v1403 = vrot.slane %v1402, 4
      %v1405 = vshll.u32 %v1185, 16
      %v1407 = vrot.slane %v1405, 5
      %v1408 = vsel %vm580, %v1403, %v1407
      %v1410 = vshrl.u32 %v1163, 16
      %v1412 = vrot.slane %v1410, 4
      %v1413 = vshll.u32 %v1163, 16
      %v1415 = vrot.slane %v1413, 5
      %v1416 = vor.u32 %v1412, %v1415
      %v1417 = vrot.slane %v1416, 4
      %v1419 = vshll.u32 %v1164, 16
      %v1421 = vrot.slane %v1419, 5
      %v1422 = vsel %vm580, %v1417, %v1421
      %v1423 = vshrl.u32 %v1164, 16
      %v1425 = vrot.slane %v1423, 4
      %v1426 = vor.u32 %v1425, %v1421
      %v1427 = vrot.slane %v1426, 4
      %v1429 = vshll.u32 %v1186, 16
      %v1431 = vrot.slane %v1429, 5
      %v1432 = vsel %vm580, %v1427, %v1431
      %v1434 = vshrl.u32 %v1165, 16
      %v1436 = vrot.slane %v1434, 4
      %v1437 = vshll.u32 %v1165, 16
      %v1439 = vrot.slane %v1437, 5
      %v1440 = vor.u32 %v1436, %v1439
      %v1441 = vrot.slane %v1440, 4
      %v1443 = vshll.u32 %v1166, 16
      %v1445 = vrot.slane %v1443, 5
      %v1446 = vsel %vm580, %v1441, %v1445
      %v1447 = vshrl.u32 %v1166, 16
      %v1449 = vrot.slane %v1447, 4
      %v1450 = vor.u32 %v1449, %v1445
      %v1451 = vrot.slane %v1450, 4
      %v1453 = vshll.u32 %v1187, 16
      %v1455 = vrot.slane %v1453, 5
      %v1456 = vsel %vm580, %v1451, %v1455
      %v1458 = vshrl.u32 %v1167, 16
      %v1460 = vrot.slane %v1458, 4
      %v1461 = vshll.u32 %v1167, 16
      %v1463 = vrot.slane %v1461, 5
      %v1464 = vor.u32 %v1460, %v1463
      %v1465 = vrot.slane %v1464, 4
      %v1467 = vshll.u32 %v1168, 16
      %v1469 = vrot.slane %v1467, 5
      %v1470 = vsel %vm580, %v1465, %v1469
      %v1471 = vshrl.u32 %v1168, 16
      %v1473 = vrot.slane %v1471, 4
      %v1474 = vor.u32 %v1473, %v1469
      %v1475 = vrot.slane %v1474, 4
      %v1477 = vshll.u32 %v1188, 16
      %v1479 = vrot.slane %v1477, 5
      %v1480 = vsel %vm580, %v1475, %v1479
      %v1482 = vshrl.u32 %v1169, 16
      %v1484 = vrot.slane %v1482, 4
      %v1485 = vshll.u32 %v1169, 16
      %v1487 = vrot.slane %v1485, 5
      %v1488 = vor.u32 %v1484, %v1487
      %v1489 = vrot.slane %v1488, 4
      %v1491 = vshll.u32 %v1170, 16
      %v1493 = vrot.slane %v1491, 5
      %v1494 = vsel %vm580, %v1489, %v1493
      %v1495 = vshrl.u32 %v1170, 16
      %v1497 = vrot.slane %v1495, 4
      %v1498 = vor.u32 %v1497, %v1493
      %v1499 = vrot.slane %v1498, 4
      %v1501 = vshll.u32 %v1189, 16
      %v1503 = vrot.slane %v1501, 5
      %v1504 = vsel %vm580, %v1499, %v1503
      %v1506 = vshrl.u32 %v1171, 16
      %v1508 = vrot.slane %v1506, 4
      %v1509 = vshll.u32 %v1171, 16
      %v1511 = vrot.slane %v1509, 5
      %v1512 = vor.u32 %v1508, %v1511
      %v1513 = vrot.slane %v1512, 4
      %v1515 = vshll.u32 %v1172, 16
      %v1517 = vrot.slane %v1515, 5
      %v1518 = vsel %vm580, %v1513, %v1517
      %v1519 = vshrl.u32 %v1172, 16
      %v1521 = vrot.slane %v1519, 4
      %v1522 = vor.u32 %v1521, %v1517
      %v1523 = vrot.slane %v1522, 4
      %v1525 = vshll.u32 %v1190, 16
      %v1527 = vrot.slane %v1525, 5
      %v1528 = vsel %vm580, %v1523, %v1527
      %v1530 = vshrl.u32 %v1173, 16
      %v1532 = vrot.slane %v1530, 4
      %v1533 = vshll.u32 %v1173, 16
      %v1535 = vrot.slane %v1533, 5
      %v1536 = vor.u32 %v1532, %v1535
      %v1537 = vrot.slane %v1536, 4
      %v1539 = vshll.u32 %v1174, 16
      %v1541 = vrot.slane %v1539, 5
      %v1542 = vsel %vm580, %v1537, %v1541
      %v1543 = vshrl.u32 %v1174, 16
      %v1545 = vrot.slane %v1543, 4
      %v1546 = vor.u32 %v1545, %v1541
      %v1547 = vrot.slane %v1546, 4
      %v1549 = vshll.u32 %v1191, 16
      %v1551 = vrot.slane %v1549, 5
      %v1552 = vsel %vm580, %v1547, %v1551
      %v1554 = vshrl.u32 %v1175, 16
      %v1556 = vrot.slane %v1554, 4
      %v1557 = vshll.u32 %v1175, 16
      %v1559 = vrot.slane %v1557, 5
      %v1560 = vor.u32 %v1556, %v1559
      %v1561 = vrot.slane %v1560, 4
      %v1563 = vshll.u32 %v1176, 16
      %v1565 = vrot.slane %v1563, 5
      %v1566 = vsel %vm580, %v1561, %v1565
      %v1567 = vshrl.u32 %v1176, 16
      %v1569 = vrot.slane %v1567, 4
      %v1570 = vor.u32 %v1569, %v1565
      %v1571 = vrot.slane %v1570, 4
      %v1573 = vshll.u32 %v1192, 16
      %v1575 = vrot.slane %v1573, 5
      %v1576 = vsel %vm580, %v1571, %v1575
      %v1577 = vld [vmem:[%s1144] sm:$0xe]
      %v1578 = vld [vmem:[%s1144 + $0xc] sm:$0xe]
      %v1579 = vld [vmem:[%s1144 + $0x18] sm:$0xe]
      %v1580 = vld [vmem:[%s1144 + $0x24] sm:$0xe]
      %v1581 = vld [vmem:[%s1144 + $0x30] sm:$0xe]
      %v1582 = vld [vmem:[%s1144 + $0x3c] sm:$0xe]
      %v1583 = vld [vmem:[%s1144 + $0x48] sm:$0xe]
      %v1584 = vld [vmem:[%s1144 + $0x54] sm:$0xe]
      %v1585 = vld [vmem:[%s1144 + $0x60] sm:$0xe]
      %v1586 = vld [vmem:[%s1144 + $0x6c] sm:$0xe]
      %v1587 = vld [vmem:[%s1144 + $0x78] sm:$0xe]
      %v1588 = vld [vmem:[%s1144 + $0x84] sm:$0xe]
      %v1589 = vld [vmem:[%s1144 + $0x90] sm:$0xe]
      %v1590 = vld [vmem:[%s1144 + $0x9c] sm:$0xe]
      %v1591 = vld [vmem:[%s1144 + $0xa8] sm:$0xe]
      %v1592 = vld [vmem:[%s1144 + $0xb4] sm:$0xe]
      %v1641 = vrot.slane %v1577, 5
      %v1642 = vrot.slane %v1641, 4
      %v1643 = vrot.slane %v1146, 5
      %v1644 = vsel %vm1031, %v1642, %v1643
      %v1645 = vrot.slane %v1643, 4
      %v1646 = vrot.slane %v1177, 5
      %v1647 = vsel %vm1031, %v1645, %v1646
      %v1648 = vrot.slane %v1578, 5
      %v1649 = vrot.slane %v1648, 4
      %v1650 = vrot.slane %v1148, 5
      %v1651 = vsel %vm1031, %v1649, %v1650
      %v1652 = vrot.slane %v1650, 4
      %v1653 = vrot.slane %v1178, 5
      %v1654 = vsel %vm1031, %v1652, %v1653
      %v1655 = vrot.slane %v1579, 5
      %v1656 = vrot.slane %v1655, 4
      %v1657 = vrot.slane %v1150, 5
      %v1658 = vsel %vm1031, %v1656, %v1657
      %v1659 = vrot.slane %v1657, 4
      %v1660 = vrot.slane %v1179, 5
      %v1661 = vsel %vm1031, %v1659, %v1660
      %v1662 = vrot.slane %v1580, 5
      %v1663 = vrot.slane %v1662, 4
      %v1664 = vrot.slane %v1152, 5
      %v1665 = vsel %vm1031, %v1663, %v1664
      %v1666 = vrot.slane %v1664, 4
      %v1667 = vrot.slane %v1180, 5
      %v1668 = vsel %vm1031, %v1666, %v1667
      %v1669 = vrot.slane %v1581, 5
      %v1670 = vrot.slane %v1669, 4
      %v1671 = vrot.slane %v1154, 5
      %v1672 = vsel %vm1031, %v1670, %v1671
      %v1673 = vrot.slane %v1671, 4
      %v1674 = vrot.slane %v1181, 5
      %v1675 = vsel %vm1031, %v1673, %v1674
      %v1676 = vrot.slane %v1582, 5
      %v1677 = vrot.slane %v1676, 4
      %v1678 = vrot.slane %v1156, 5
      %v1679 = vsel %vm1031, %v1677, %v1678
      %v1680 = vrot.slane %v1678, 4
      %v1681 = vrot.slane %v1182, 5
      %v1682 = vsel %vm1031, %v1680, %v1681
      %v1683 = vrot.slane %v1583, 5
      %v1684 = vrot.slane %v1683, 4
      %v1685 = vrot.slane %v1158, 5
      %v1686 = vsel %vm1031, %v1684, %v1685
      %v1687 = vrot.slane %v1685, 4
      %v1688 = vrot.slane %v1183, 5
      %v1689 = vsel %vm1031, %v1687, %v1688
      %v1690 = vrot.slane %v1584, 5
      %v1691 = vrot.slane %v1690, 4
      %v1692 = vrot.slane %v1160, 5
      %v1693 = vsel %vm1031, %v1691, %v1692
      %v1694 = vrot.slane %v1692, 4
      %v1695 = vrot.slane %v1184, 5
      %v1696 = vsel %vm1031, %v1694, %v1695
      %v1697 = vrot.slane %v1585, 5
      %v1698 = vrot.slane %v1697, 4
      %v1699 = vrot.slane %v1162, 5
      %v1700 = vsel %vm1031, %v1698, %v1699
      %v1701 = vrot.slane %v1699, 4
      %v1702 = vrot.slane %v1185, 5
      %v1703 = vsel %vm1031, %v1701, %v1702
      %v1704 = vrot.slane %v1586, 5
      %v1705 = vrot.slane %v1704, 4
      %v1706 = vrot.slane %v1164, 5
      %v1707 = vsel %vm1031, %v1705, %v1706
      %v1708 = vrot.slane %v1706, 4
      %v1709 = vrot.slane %v1186, 5
      %v1710 = vsel %vm1031, %v1708, %v1709
      %v1711 = vrot.slane %v1587, 5
      %v1712 = vrot.slane %v1711, 4
      %v1713 = vrot.slane %v1166, 5
      %v1714 = vsel %vm1031, %v1712, %v1713
      %v1715 = vrot.slane %v1713, 4
      %v1716 = vrot.slane %v1187, 5
      %v1717 = vsel %vm1031, %v1715, %v1716
      %v1718 = vrot.slane %v1588, 5
      %v1719 = vrot.slane %v1718, 4
      %v1720 = vrot.slane %v1168, 5
      %v1721 = vsel %vm1031, %v1719, %v1720
      %v1722 = vrot.slane %v1720, 4
      %v1723 = vrot.slane %v1188, 5
      %v1724 = vsel %vm1031, %v1722, %v1723
      %v1725 = vrot.slane %v1589, 5
      %v1726 = vrot.slane %v1725, 4
      %v1727 = vrot.slane %v1170, 5
      %v1728 = vsel %vm1031, %v1726, %v1727
      %v1729 = vrot.slane %v1727, 4
      %v1730 = vrot.slane %v1189, 5
      %v1731 = vsel %vm1031, %v1729, %v1730
      %v1732 = vrot.slane %v1590, 5
      %v1733 = vrot.slane %v1732, 4
      %v1734 = vrot.slane %v1172, 5
      %v1735 = vsel %vm1031, %v1733, %v1734
      %v1736 = vrot.slane %v1734, 4
      %v1737 = vrot.slane %v1190, 5
      %v1738 = vsel %vm1031, %v1736, %v1737
      %v1739 = vrot.slane %v1591, 5
      %v1740 = vrot.slane %v1739, 4
      %v1741 = vrot.slane %v1174, 5
      %v1742 = vsel %vm1031, %v1740, %v1741
      %v1743 = vrot.slane %v1741, 4
      %v1744 = vrot.slane %v1191, 5
      %v1745 = vsel %vm1031, %v1743, %v1744
      %v1746 = vrot.slane %v1592, 5
      %v1747 = vrot.slane %v1746, 4
      %v1748 = vrot.slane %v1176, 5
      %v1749 = vsel %vm1031, %v1747, %v1748
      %v1750 = vrot.slane %v1748, 4
      %v1751 = vrot.slane %v1192, 5
      %v1752 = vsel %vm1031, %v1750, %v1751
      %s1753 = scalar_lea.vmem [#allocation2], 24
      %v1754 = vld [vmem:[%s1753] sm:$0xf]
      %v1755 = vld [vmem:[%s1753 + $0x4] sm:$0xf]
      %v1756 = vld [vmem:[%s1753 + $0xc] sm:$0xf]
      %v1757 = vld [vmem:[%s1753 + $0x10] sm:$0xf]
      %v1758 = vld [vmem:[%s1753 + $0x18] sm:$0xf]
      %v1759 = vld [vmem:[%s1753 + $0x1c] sm:$0xf]
      %v1760 = vld [vmem:[%s1753 + $0x24] sm:$0xf]
      %v1761 = vld [vmem:[%s1753 + $0x28] sm:$0xf]
      %v1762 = vld [vmem:[%s1753 + $0x30] sm:$0xf]
      %v1763 = vld [vmem:[%s1753 + $0x34] sm:$0xf]
      %v1764 = vld [vmem:[%s1753 + $0x3c] sm:$0xf]
      %v1765 = vld [vmem:[%s1753 + $0x40] sm:$0xf]
      %v1766 = vld [vmem:[%s1753 + $0x48] sm:$0xf]
      %v1767 = vld [vmem:[%s1753 + $0x4c] sm:$0xf]
      %v1768 = vld [vmem:[%s1753 + $0x54] sm:$0xf]
      %v1769 = vld [vmem:[%s1753 + $0x58] sm:$0xf]
      %v1770 = vld [vmem:[%s1753 + $0x60] sm:$0xf]
      %v1771 = vld [vmem:[%s1753 + $0x64] sm:$0xf]
      %v1772 = vld [vmem:[%s1753 + $0x6c] sm:$0xf]
      %v1773 = vld [vmem:[%s1753 + $0x70] sm:$0xf]
      %v1774 = vld [vmem:[%s1753 + $0x78] sm:$0xf]
      %v1775 = vld [vmem:[%s1753 + $0x7c] sm:$0xf]
      %v1776 = vld [vmem:[%s1753 + $0x84] sm:$0xf]
      %v1777 = vld [vmem:[%s1753 + $0x88] sm:$0xf]
      %v1778 = vld [vmem:[%s1753 + $0x90] sm:$0xf]
      %v1779 = vld [vmem:[%s1753 + $0x94] sm:$0xf]
      %v1780 = vld [vmem:[%s1753 + $0x9c] sm:$0xf]
      %v1781 = vld [vmem:[%s1753 + $0xa0] sm:$0xf]
      %v1782 = vld [vmem:[%s1753 + $0xa8] sm:$0xf]
      %v1783 = vld [vmem:[%s1753 + $0xac] sm:$0xf]
      %v1784 = vld [vmem:[%s1753 + $0xb4] sm:$0xf]
      %v1785 = vld [vmem:[%s1753 + $0xb8] sm:$0xf]
      %v1786 = vld [vmem:[%s1753 + $0x8] sm:$0x1]
      %v1787 = vld [vmem:[%s1753 + $0x14] sm:$0x1]
      %v1788 = vld [vmem:[%s1753 + $0x20] sm:$0x1]
      %v1789 = vld [vmem:[%s1753 + $0x2c] sm:$0x1]
      %v1790 = vld [vmem:[%s1753 + $0x38] sm:$0x1]
      %v1791 = vld [vmem:[%s1753 + $0x44] sm:$0x1]
      %v1792 = vld [vmem:[%s1753 + $0x50] sm:$0x1]
      %v1793 = vld [vmem:[%s1753 + $0x5c] sm:$0x1]
      %v1794 = vld [vmem:[%s1753 + $0x68] sm:$0x1]
      %v1795 = vld [vmem:[%s1753 + $0x74] sm:$0x1]
      %v1796 = vld [vmem:[%s1753 + $0x80] sm:$0x1]
      %v1797 = vld [vmem:[%s1753 + $0x8c] sm:$0x1]
      %v1798 = vld [vmem:[%s1753 + $0x98] sm:$0x1]
      %v1799 = vld [vmem:[%s1753 + $0xa4] sm:$0x1]
      %v1800 = vld [vmem:[%s1753 + $0xb0] sm:$0x1]
      %v1801 = vld [vmem:[%s1753 + $0xbc] sm:$0x1]
      %v1803 = vshrl.u32 %v1754, 16
      %v1805 = vrot.slane %v1803, 4
      %v1806 = vshll.u32 %v1754, 16
      %v1808 = vrot.slane %v1806, 5
      %v1809 = vor.u32 %v1805, %v1808
      %v1810 = vrot.slane %v1809, 4
      %v1812 = vshll.u32 %v1755, 16
      %v1814 = vrot.slane %v1812, 5
      %v1815 = vsel %vm580, %v1810, %v1814
      %v1816 = vshrl.u32 %v1755, 16
      %v1818 = vrot.slane %v1816, 4
      %v1819 = vor.u32 %v1818, %v1814
      %v1820 = vrot.slane %v1819, 4
      %v1822 = vshll.u32 %v1786, 16
      %v1824 = vrot.slane %v1822, 5
      %v1825 = vsel %vm580, %v1820, %v1824
      %v1827 = vshrl.u32 %v1756, 16
      %v1829 = vrot.slane %v1827, 4
      %v1830 = vshll.u32 %v1756, 16
      %v1832 = vrot.slane %v1830, 5
      %v1833 = vor.u32 %v1829, %v1832
      %v1834 = vrot.slane %v1833, 4
      %v1836 = vshll.u32 %v1757, 16
      %v1838 = vrot.slane %v1836, 5
      %v1839 = vsel %vm580, %v1834, %v1838
      %v1840 = vshrl.u32 %v1757, 16
      %v1842 = vrot.slane %v1840, 4
      %v1843 = vor.u32 %v1842, %v1838
      %v1844 = vrot.slane %v1843, 4
      %v1846 = vshll.u32 %v1787, 16
      %v1848 = vrot.slane %v1846, 5
      %v1849 = vsel %vm580, %v1844, %v1848
      %v1851 = vshrl.u32 %v1758, 16
      %v1853 = vrot.slane %v1851, 4
      %v1854 = vshll.u32 %v1758, 16
      %v1856 = vrot.slane %v1854, 5
      %v1857 = vor.u32 %v1853, %v1856
      %v1858 = vrot.slane %v1857, 4
      %v1860 = vshll.u32 %v1759, 16
      %v1862 = vrot.slane %v1860, 5
      %v1863 = vsel %vm580, %v1858, %v1862
      %v1864 = vshrl.u32 %v1759, 16
      %v1866 = vrot.slane %v1864, 4
      %v1867 = vor.u32 %v1866, %v1862
      %v1868 = vrot.slane %v1867, 4
      %v1870 = vshll.u32 %v1788, 16
      %v1872 = vrot.slane %v1870, 5
      %v1873 = vsel %vm580, %v1868, %v1872
      %v1875 = vshrl.u32 %v1760, 16
      %v1877 = vrot.slane %v1875, 4
      %v1878 = vshll.u32 %v1760, 16
      %v1880 = vrot.slane %v1878, 5
      %v1881 = vor.u32 %v1877, %v1880
      %v1882 = vrot.slane %v1881, 4
      %v1884 = vshll.u32 %v1761, 16
      %v1886 = vrot.slane %v1884, 5
      %v1887 = vsel %vm580, %v1882, %v1886
      %v1888 = vshrl.u32 %v1761, 16
      %v1890 = vrot.slane %v1888, 4
      %v1891 = vor.u32 %v1890, %v1886
      %v1892 = vrot.slane %v1891, 4
      %v1894 = vshll.u32 %v1789, 16
      %v1896 = vrot.slane %v1894, 5
      %v1897 = vsel %vm580, %v1892, %v1896
      %v1899 = vshrl.u32 %v1762, 16
      %v1901 = vrot.slane %v1899, 4
      %v1902 = vshll.u32 %v1762, 16
      %v1904 = vrot.slane %v1902, 5
      %v1905 = vor.u32 %v1901, %v1904
      %v1906 = vrot.slane %v1905, 4
      %v1908 = vshll.u32 %v1763, 16
      %v1910 = vrot.slane %v1908, 5
      %v1911 = vsel %vm580, %v1906, %v1910
      %v1912 = vshrl.u32 %v1763, 16
      %v1914 = vrot.slane %v1912, 4
      %v1915 = vor.u32 %v1914, %v1910
      %v1916 = vrot.slane %v1915, 4
      %v1918 = vshll.u32 %v1790, 16
      %v1920 = vrot.slane %v1918, 5
      %v1921 = vsel %vm580, %v1916, %v1920
      %v1923 = vshrl.u32 %v1764, 16
      %v1925 = vrot.slane %v1923, 4
      %v1926 = vshll.u32 %v1764, 16
      %v1928 = vrot.slane %v1926, 5
      %v1929 = vor.u32 %v1925, %v1928
      %v1930 = vrot.slane %v1929, 4
      %v1932 = vshll.u32 %v1765, 16
      %v1934 = vrot.slane %v1932, 5
      %v1935 = vsel %vm580, %v1930, %v1934
      %v1936 = vshrl.u32 %v1765, 16
      %v1938 = vrot.slane %v1936, 4
      %v1939 = vor.u32 %v1938, %v1934
      %v1940 = vrot.slane %v1939, 4
      %v1942 = vshll.u32 %v1791, 16
      %v1944 = vrot.slane %v1942, 5
      %v1945 = vsel %vm580, %v1940, %v1944
      %v1947 = vshrl.u32 %v1766, 16
      %v1949 = vrot.slane %v1947, 4
      %v1950 = vshll.u32 %v1766, 16
      %v1952 = vrot.slane %v1950, 5
      %v1953 = vor.u32 %v1949, %v1952
      %v1954 = vrot.slane %v1953, 4
      %v1956 = vshll.u32 %v1767, 16
      %v1958 = vrot.slane %v1956, 5
      %v1959 = vsel %vm580, %v1954, %v1958
      %v1960 = vshrl.u32 %v1767, 16
      %v1962 = vrot.slane %v1960, 4
      %v1963 = vor.u32 %v1962, %v1958
      %v1964 = vrot.slane %v1963, 4
      %v1966 = vshll.u32 %v1792, 16
      %v1968 = vrot.slane %v1966, 5
      %v1969 = vsel %vm580, %v1964, %v1968
      %v1971 = vshrl.u32 %v1768, 16
      %v1973 = vrot.slane %v1971, 4
      %v1974 = vshll.u32 %v1768, 16
      %v1976 = vrot.slane %v1974, 5
      %v1977 = vor.u32 %v1973, %v1976
      %v1978 = vrot.slane %v1977, 4
      %v1980 = vshll.u32 %v1769, 16
      %v1982 = vrot.slane %v1980, 5
      %v1983 = vsel %vm580, %v1978, %v1982
      %v1984 = vshrl.u32 %v1769, 16
      %v1986 = vrot.slane %v1984, 4
      %v1987 = vor.u32 %v1986, %v1982
      %v1988 = vrot.slane %v1987, 4
      %v1990 = vshll.u32 %v1793, 16
      %v1992 = vrot.slane %v1990, 5
      %v1993 = vsel %vm580, %v1988, %v1992
      %v1995 = vshrl.u32 %v1770, 16
      %v1997 = vrot.slane %v1995, 4
      %v1998 = vshll.u32 %v1770, 16
      %v2000 = vrot.slane %v1998, 5
      %v2001 = vor.u32 %v1997, %v2000
      %v2002 = vrot.slane %v2001, 4
      %v2004 = vshll.u32 %v1771, 16
      %v2006 = vrot.slane %v2004, 5
      %v2007 = vsel %vm580, %v2002, %v2006
      %v2008 = vshrl.u32 %v1771, 16
      %v2010 = vrot.slane %v2008, 4
      %v2011 = vor.u32 %v2010, %v2006
      %v2012 = vrot.slane %v2011, 4
      %v2014 = vshll.u32 %v1794, 16
      %v2016 = vrot.slane %v2014, 5
      %v2017 = vsel %vm580, %v2012, %v2016
      %v2019 = vshrl.u32 %v1772, 16
      %v2021 = vrot.slane %v2019, 4
      %v2022 = vshll.u32 %v1772, 16
      %v2024 = vrot.slane %v2022, 5
      %v2025 = vor.u32 %v2021, %v2024
      %v2026 = vrot.slane %v2025, 4
      %v2028 = vshll.u32 %v1773, 16
      %v2030 = vrot.slane %v2028, 5
      %v2031 = vsel %vm580, %v2026, %v2030
      %v2032 = vshrl.u32 %v1773, 16
      %v2034 = vrot.slane %v2032, 4
      %v2035 = vor.u32 %v2034, %v2030
      %v2036 = vrot.slane %v2035, 4
      %v2038 = vshll.u32 %v1795, 16
      %v2040 = vrot.slane %v2038, 5
      %v2041 = vsel %vm580, %v2036, %v2040
      %v2043 = vshrl.u32 %v1774, 16
      %v2045 = vrot.slane %v2043, 4
      %v2046 = vshll.u32 %v1774, 16
      %v2048 = vrot.slane %v2046, 5
      %v2049 = vor.u32 %v2045, %v2048
      %v2050 = vrot.slane %v2049, 4
      %v2052 = vshll.u32 %v1775, 16
      %v2054 = vrot.slane %v2052, 5
      %v2055 = vsel %vm580, %v2050, %v2054
      %v2056 = vshrl.u32 %v1775, 16
      %v2058 = vrot.slane %v2056, 4
      %v2059 = vor.u32 %v2058, %v2054
      %v2060 = vrot.slane %v2059, 4
      %v2062 = vshll.u32 %v1796, 16
      %v2064 = vrot.slane %v2062, 5
      %v2065 = vsel %vm580, %v2060, %v2064
      %v2067 = vshrl.u32 %v1776, 16
      %v2069 = vrot.slane %v2067, 4
      %v2070 = vshll.u32 %v1776, 16
      %v2072 = vrot.slane %v2070, 5
      %v2073 = vor.u32 %v2069, %v2072
      %v2074 = vrot.slane %v2073, 4
      %v2076 = vshll.u32 %v1777, 16
      %v2078 = vrot.slane %v2076, 5
      %v2079 = vsel %vm580, %v2074, %v2078
      %v2080 = vshrl.u32 %v1777, 16
      %v2082 = vrot.slane %v2080, 4
      %v2083 = vor.u32 %v2082, %v2078
      %v2084 = vrot.slane %v2083, 4
      %v2086 = vshll.u32 %v1797, 16
      %v2088 = vrot.slane %v2086, 5
      %v2089 = vsel %vm580, %v2084, %v2088
      %v2091 = vshrl.u32 %v1778, 16
      %v2093 = vrot.slane %v2091, 4
      %v2094 = vshll.u32 %v1778, 16
      %v2096 = vrot.slane %v2094, 5
      %v2097 = vor.u32 %v2093, %v2096
      %v2098 = vrot.slane %v2097, 4
      %v2100 = vshll.u32 %v1779, 16
      %v2102 = vrot.slane %v2100, 5
      %v2103 = vsel %vm580, %v2098, %v2102
      %v2104 = vshrl.u32 %v1779, 16
      %v2106 = vrot.slane %v2104, 4
      %v2107 = vor.u32 %v2106, %v2102
      %v2108 = vrot.slane %v2107, 4
      %v2110 = vshll.u32 %v1798, 16
      %v2112 = vrot.slane %v2110, 5
      %v2113 = vsel %vm580, %v2108, %v2112
      %v2115 = vshrl.u32 %v1780, 16
      %v2117 = vrot.slane %v2115, 4
      %v2118 = vshll.u32 %v1780, 16
      %v2120 = vrot.slane %v2118, 5
      %v2121 = vor.u32 %v2117, %v2120
      %v2122 = vrot.slane %v2121, 4
      %v2124 = vshll.u32 %v1781, 16
      %v2126 = vrot.slane %v2124, 5
      %v2127 = vsel %vm580, %v2122, %v2126
      %v2128 = vshrl.u32 %v1781, 16
      %v2130 = vrot.slane %v2128, 4
      %v2131 = vor.u32 %v2130, %v2126
      %v2132 = vrot.slane %v2131, 4
      %v2134 = vshll.u32 %v1799, 16
      %v2136 = vrot.slane %v2134, 5
      %v2137 = vsel %vm580, %v2132, %v2136
      %v2139 = vshrl.u32 %v1782, 16
      %v2141 = vrot.slane %v2139, 4
      %v2142 = vshll.u32 %v1782, 16
      %v2144 = vrot.slane %v2142, 5
      %v2145 = vor.u32 %v2141, %v2144
      %v2146 = vrot.slane %v2145, 4
      %v2148 = vshll.u32 %v1783, 16
      %v2150 = vrot.slane %v2148, 5
      %v2151 = vsel %vm580, %v2146, %v2150
      %v2152 = vshrl.u32 %v1783, 16
      %v2154 = vrot.slane %v2152, 4
      %v2155 = vor.u32 %v2154, %v2150
      %v2156 = vrot.slane %v2155, 4
      %v2158 = vshll.u32 %v1800, 16
      %v2160 = vrot.slane %v2158, 5
      %v2161 = vsel %vm580, %v2156, %v2160
      %v2163 = vshrl.u32 %v1784, 16
      %v2165 = vrot.slane %v2163, 4
      %v2166 = vshll.u32 %v1784, 16
      %v2168 = vrot.slane %v2166, 5
      %v2169 = vor.u32 %v2165, %v2168
      %v2170 = vrot.slane %v2169, 4
      %v2172 = vshll.u32 %v1785, 16
      %v2174 = vrot.slane %v2172, 5
      %v2175 = vsel %vm580, %v2170, %v2174
      %v2176 = vshrl.u32 %v1785, 16
      %v2178 = vrot.slane %v2176, 4
      %v2179 = vor.u32 %v2178, %v2174
      %v2180 = vrot.slane %v2179, 4
      %v2182 = vshll.u32 %v1801, 16
      %v2184 = vrot.slane %v2182, 5
      %v2185 = vsel %vm580, %v2180, %v2184
      %v2186 = vld [vmem:[%s1753] sm:$0xe]
      %v2187 = vld [vmem:[%s1753 + $0xc] sm:$0xe]
      %v2188 = vld [vmem:[%s1753 + $0x18] sm:$0xe]
      %v2189 = vld [vmem:[%s1753 + $0x24] sm:$0xe]
      %v2190 = vld [vmem:[%s1753 + $0x30] sm:$0xe]
      %v2191 = vld [vmem:[%s1753 + $0x3c] sm:$0xe]
      %v2192 = vld [vmem:[%s1753 + $0x48] sm:$0xe]
      %v2193 = vld [vmem:[%s1753 + $0x54] sm:$0xe]
      %v2194 = vld [vmem:[%s1753 + $0x60] sm:$0xe]
      %v2195 = vld [vmem:[%s1753 + $0x6c] sm:$0xe]
      %v2196 = vld [vmem:[%s1753 + $0x78] sm:$0xe]
      %v2197 = vld [vmem:[%s1753 + $0x84] sm:$0xe]
      %v2198 = vld [vmem:[%s1753 + $0x90] sm:$0xe]
      %v2199 = vld [vmem:[%s1753 + $0x9c] sm:$0xe]
      %v2200 = vld [vmem:[%s1753 + $0xa8] sm:$0xe]
      %v2201 = vld [vmem:[%s1753 + $0xb4] sm:$0xe]
      %v2250 = vrot.slane %v2186, 5
      %v2251 = vrot.slane %v2250, 4
      %v2252 = vrot.slane %v1755, 5
      %v2253 = vsel %vm1031, %v2251, %v2252
      %v2254 = vrot.slane %v2252, 4
      %v2255 = vrot.slane %v1786, 5
      %v2256 = vsel %vm1031, %v2254, %v2255
      %v2257 = vrot.slane %v2187, 5
      %v2258 = vrot.slane %v2257, 4
      %v2259 = vrot.slane %v1757, 5
      %v2260 = vsel %vm1031, %v2258, %v2259
      %v2261 = vrot.slane %v2259, 4
      %v2262 = vrot.slane %v1787, 5
      %v2263 = vsel %vm1031, %v2261, %v2262
      %v2264 = vrot.slane %v2188, 5
      %v2265 = vrot.slane %v2264, 4
      %v2266 = vrot.slane %v1759, 5
      %v2267 = vsel %vm1031, %v2265, %v2266
      %v2268 = vrot.slane %v2266, 4
      %v2269 = vrot.slane %v1788, 5
      %v2270 = vsel %vm1031, %v2268, %v2269
      %v2271 = vrot.slane %v2189, 5
      %v2272 = vrot.slane %v2271, 4
      %v2273 = vrot.slane %v1761, 5
      %v2274 = vsel %vm1031, %v2272, %v2273
      %v2275 = vrot.slane %v2273, 4
      %v2276 = vrot.slane %v1789, 5
      %v2277 = vsel %vm1031, %v2275, %v2276
      %v2278 = vrot.slane %v2190, 5
      %v2279 = vrot.slane %v2278, 4
      %v2280 = vrot.slane %v1763, 5
      %v2281 = vsel %vm1031, %v2279, %v2280
      %v2282 = vrot.slane %v2280, 4
      %v2283 = vrot.slane %v1790, 5
      %v2284 = vsel %vm1031, %v2282, %v2283
      %v2285 = vrot.slane %v2191, 5
      %v2286 = vrot.slane %v2285, 4
      %v2287 = vrot.slane %v1765, 5
      %v2288 = vsel %vm1031, %v2286, %v2287
      %v2289 = vrot.slane %v2287, 4
      %v2290 = vrot.slane %v1791, 5
      %v2291 = vsel %vm1031, %v2289, %v2290
      %v2292 = vrot.slane %v2192, 5
      %v2293 = vrot.slane %v2292, 4
      %v2294 = vrot.slane %v1767, 5
      %v2295 = vsel %vm1031, %v2293, %v2294
      %v2296 = vrot.slane %v2294, 4
      %v2297 = vrot.slane %v1792, 5
      %v2298 = vsel %vm1031, %v2296, %v2297
      %v2299 = vrot.slane %v2193, 5
      %v2300 = vrot.slane %v2299, 4
      %v2301 = vrot.slane %v1769, 5
      %v2302 = vsel %vm1031, %v2300, %v2301
      %v2303 = vrot.slane %v2301, 4
      %v2304 = vrot.slane %v1793, 5
      %v2305 = vsel %vm1031, %v2303, %v2304
      %v2306 = vrot.slane %v2194, 5
      %v2307 = vrot.slane %v2306, 4
      %v2308 = vrot.slane %v1771, 5
      %v2309 = vsel %vm1031, %v2307, %v2308
      %v2310 = vrot.slane %v2308, 4
      %v2311 = vrot.slane %v1794, 5
      %v2312 = vsel %vm1031, %v2310, %v2311
      %v2313 = vrot.slane %v2195, 5
      %v2314 = vrot.slane %v2313, 4
      %v2315 = vrot.slane %v1773, 5
      %v2316 = vsel %vm1031, %v2314, %v2315
      %v2317 = vrot.slane %v2315, 4
      %v2318 = vrot.slane %v1795, 5
      %v2319 = vsel %vm1031, %v2317, %v2318
      %v2320 = vrot.slane %v2196, 5
      %v2321 = vrot.slane %v2320, 4
      %v2322 = vrot.slane %v1775, 5
      %v2323 = vsel %vm1031, %v2321, %v2322
      %v2324 = vrot.slane %v2322, 4
      %v2325 = vrot.slane %v1796, 5
      %v2326 = vsel %vm1031, %v2324, %v2325
      %v2327 = vrot.slane %v2197, 5
      %v2328 = vrot.slane %v2327, 4
      %v2329 = vrot.slane %v1777, 5
      %v2330 = vsel %vm1031, %v2328, %v2329
      %v2331 = vrot.slane %v2329, 4
      %v2332 = vrot.slane %v1797, 5
      %v2333 = vsel %vm1031, %v2331, %v2332
      %v2334 = vrot.slane %v2198, 5
      %v2335 = vrot.slane %v2334, 4
      %v2336 = vrot.slane %v1779, 5
      %v2337 = vsel %vm1031, %v2335, %v2336
      %v2338 = vrot.slane %v2336, 4
      %v2339 = vrot.slane %v1798, 5
      %v2340 = vsel %vm1031, %v2338, %v2339
      %v2341 = vrot.slane %v2199, 5
      %v2342 = vrot.slane %v2341, 4
      %v2343 = vrot.slane %v1781, 5
      %v2344 = vsel %vm1031, %v2342, %v2343
      %v2345 = vrot.slane %v2343, 4
      %v2346 = vrot.slane %v1799, 5
      %v2347 = vsel %vm1031, %v2345, %v2346
      %v2348 = vrot.slane %v2200, 5
      %v2349 = vrot.slane %v2348, 4
      %v2350 = vrot.slane %v1783, 5
      %v2351 = vsel %vm1031, %v2349, %v2350
      %v2352 = vrot.slane %v2350, 4
      %v2353 = vrot.slane %v1800, 5
      %v2354 = vsel %vm1031, %v2352, %v2353
      %v2355 = vrot.slane %v2201, 5
      %v2356 = vrot.slane %v2355, 4
      %v2357 = vrot.slane %v1785, 5
      %v2358 = vsel %vm1031, %v2356, %v2357
      %v2359 = vrot.slane %v2357, 4
      %v2360 = vrot.slane %v1801, 5
      %v2361 = vsel %vm1031, %v2359, %v2360
      %v2378 = vunpack.c.l.b16 %v530
      %v2379 = vunpack.c.l.b16 %v531
      %v2380 = vunpack.c.l.b16 %v532
      %v2381 = vunpack.c.l.b16 %v533
      %v2382 = vunpack.c.l.b16 %v534
      %v2383 = vunpack.c.l.b16 %v535
      %v2384 = vunpack.c.l.b16 %v536
      %v2385 = vunpack.c.l.b16 %v537
      %v2386 = vunpack.c.l.b16 %v538
      %v2387 = vunpack.c.l.b16 %v539
      %v2388 = vunpack.c.l.b16 %v540
      %v2389 = vunpack.c.l.b16 %v541
      %v2390 = vunpack.c.l.b16 %v542
      %v2391 = vunpack.c.l.b16 %v543
      %v2392 = vunpack.c.l.b16 %v544
      %v2393 = vunpack.c.l.b16 %v545
      %v2394 = vunpack.c.l.b16 %v546
      %v2395 = vunpack.c.l.b16 %v547
      %v2396 = vunpack.c.l.b16 %v548
      %v2397 = vunpack.c.l.b16 %v549
      %v2398 = vunpack.c.l.b16 %v550
      %v2399 = vunpack.c.l.b16 %v551
      %v2400 = vunpack.c.l.b16 %v552
      %v2401 = vunpack.c.l.b16 %v553
      %v2402 = vunpack.c.l.b16 %v554
      %v2403 = vunpack.c.l.b16 %v555
      %v2404 = vunpack.c.l.b16 %v556
      %v2405 = vunpack.c.l.b16 %v557
      %v2406 = vunpack.c.l.b16 %v558
      %v2407 = vunpack.c.l.b16 %v559
      %v2408 = vunpack.c.l.b16 %v560
      %v2409 = vunpack.c.l.b16 %v561
      %v2410 = vpack.c.b16 %v2379, %v2378
      %v2411 = vpack.c.b16 %v2381, %v2380
      %v2412 = vpack.c.b16 %v2383, %v2382
      %v2413 = vpack.c.b16 %v2385, %v2384
      %v2414 = vpack.c.b16 %v2387, %v2386
      %v2415 = vpack.c.b16 %v2389, %v2388
      %v2416 = vpack.c.b16 %v2391, %v2390
      %v2417 = vpack.c.b16 %v2393, %v2392
      %v2418 = vpack.c.b16 %v2395, %v2394
      %v2419 = vpack.c.b16 %v2397, %v2396
      %v2420 = vpack.c.b16 %v2399, %v2398
      %v2421 = vpack.c.b16 %v2401, %v2400
      %v2422 = vpack.c.b16 %v2403, %v2402
      %v2423 = vpack.c.b16 %v2405, %v2404
      %v2424 = vpack.c.b16 %v2407, %v2406
      %v2425 = vpack.c.b16 %v2409, %v2408
      %v2426 = vunpack.c.l.b16 %v594
      %v2427 = vunpack.c.l.b16 %v604
      %v2428 = vunpack.c.l.b16 %v618
      %v2429 = vunpack.c.l.b16 %v628
      %v2430 = vunpack.c.l.b16 %v642
      %v2431 = vunpack.c.l.b16 %v652
      %v2432 = vunpack.c.l.b16 %v666
      %v2433 = vunpack.c.l.b16 %v676
      %v2434 = vunpack.c.l.b16 %v690
      %v2435 = vunpack.c.l.b16 %v700
      %v2436 = vunpack.c.l.b16 %v714
      %v2437 = vunpack.c.l.b16 %v724
      %v2438 = vunpack.c.l.b16 %v738
      %v2439 = vunpack.c.l.b16 %v748
      %v2440 = vunpack.c.l.b16 %v762
      %v2441 = vunpack.c.l.b16 %v772
      %v2442 = vunpack.c.l.b16 %v786
      %v2443 = vunpack.c.l.b16 %v796
      %v2444 = vunpack.c.l.b16 %v810
      %v2445 = vunpack.c.l.b16 %v820
      %v2446 = vunpack.c.l.b16 %v834
      %v2447 = vunpack.c.l.b16 %v844
      %v2448 = vunpack.c.l.b16 %v858
      %v2449 = vunpack.c.l.b16 %v868
      %v2450 = vunpack.c.l.b16 %v882
      %v2451 = vunpack.c.l.b16 %v892
      %v2452 = vunpack.c.l.b16 %v906
      %v2453 = vunpack.c.l.b16 %v916
      %v2454 = vunpack.c.l.b16 %v930
      %v2455 = vunpack.c.l.b16 %v940
      %v2456 = vunpack.c.l.b16 %v954
      %v2457 = vunpack.c.l.b16 %v964
      %v2458 = vpack.c.b16 %v2427, %v2426
      %v2459 = vpack.c.b16 %v2429, %v2428
      %v2460 = vpack.c.b16 %v2431, %v2430
      %v2461 = vpack.c.b16 %v2433, %v2432
      %v2462 = vpack.c.b16 %v2435, %v2434
      %v2463 = vpack.c.b16 %v2437, %v2436
      %v2464 = vpack.c.b16 %v2439, %v2438
      %v2465 = vpack.c.b16 %v2441, %v2440
      %v2466 = vpack.c.b16 %v2443, %v2442
      %v2467 = vpack.c.b16 %v2445, %v2444
      %v2468 = vpack.c.b16 %v2447, %v2446
      %v2469 = vpack.c.b16 %v2449, %v2448
      %v2470 = vpack.c.b16 %v2451, %v2450
      %v2471 = vpack.c.b16 %v2453, %v2452
      %v2472 = vpack.c.b16 %v2455, %v2454
      %v2473 = vpack.c.b16 %v2457, %v2456
      %2474 = vrot.lane.b32.xlu0 %v2458, 64
      %v2475 = vpop.permute.xlu0 %2474
      %2476 = vrot.lane.b32.xlu0 %v2459, 64
      %v2477 = vpop.permute.xlu0 %2476
      %2478 = vrot.lane.b32.xlu0 %v2460, 64
      %v2479 = vpop.permute.xlu0 %2478
      %2480 = vrot.lane.b32.xlu0 %v2461, 64
      %v2481 = vpop.permute.xlu0 %2480
      %2482 = vrot.lane.b32.xlu0 %v2462, 64
      %v2483 = vpop.permute.xlu0 %2482
      %2484 = vrot.lane.b32.xlu0 %v2463, 64
      %v2485 = vpop.permute.xlu0 %2484
      %2486 = vrot.lane.b32.xlu0 %v2464, 64
      %v2487 = vpop.permute.xlu0 %2486
      %2488 = vrot.lane.b32.xlu0 %v2465, 64
      %v2489 = vpop.permute.xlu0 %2488
      %2490 = vrot.lane.b32.xlu0 %v2466, 64
      %v2491 = vpop.permute.xlu0 %2490
      %2492 = vrot.lane.b32.xlu0 %v2467, 64
      %v2493 = vpop.permute.xlu0 %2492
      %2494 = vrot.lane.b32.xlu0 %v2468, 64
      %v2495 = vpop.permute.xlu0 %2494
      %2496 = vrot.lane.b32.xlu0 %v2469, 64
      %v2497 = vpop.permute.xlu0 %2496
      %2498 = vrot.lane.b32.xlu0 %v2470, 64
      %v2499 = vpop.permute.xlu0 %2498
      %2500 = vrot.lane.b32.xlu0 %v2471, 64
      %v2501 = vpop.permute.xlu0 %2500
      %2502 = vrot.lane.b32.xlu0 %v2472, 64
      %v2503 = vpop.permute.xlu0 %2502
      %2504 = vrot.lane.b32.xlu0 %v2473, 64
      %v2505 = vpop.permute.xlu0 %2504
      %v2506 = vunpack.c.l.b16 %v1035
      %v2507 = vunpack.c.l.b16 %v1038
      %v2508 = vunpack.c.l.b16 %v1042
      %v2509 = vunpack.c.l.b16 %v1045
      %v2510 = vunpack.c.l.b16 %v1049
      %v2511 = vunpack.c.l.b16 %v1052
      %v2512 = vunpack.c.l.b16 %v1056
      %v2513 = vunpack.c.l.b16 %v1059
      %v2514 = vunpack.c.l.b16 %v1063
      %v2515 = vunpack.c.l.b16 %v1066
      %v2516 = vunpack.c.l.b16 %v1070
      %v2517 = vunpack.c.l.b16 %v1073
      %v2518 = vunpack.c.l.b16 %v1077
      %v2519 = vunpack.c.l.b16 %v1080
      %v2520 = vunpack.c.l.b16 %v1084
      %v2521 = vunpack.c.l.b16 %v1087
      %v2522 = vunpack.c.l.b16 %v1091
      %v2523 = vunpack.c.l.b16 %v1094
      %v2524 = vunpack.c.l.b16 %v1098
      %v2525 = vunpack.c.l.b16 %v1101
      %v2526 = vunpack.c.l.b16 %v1105
      %v2527 = vunpack.c.l.b16 %v1108
      %v2528 = vunpack.c.l.b16 %v1112
      %v2529 = vunpack.c.l.b16 %v1115
      %v2530 = vunpack.c.l.b16 %v1119
      %v2531 = vunpack.c.l.b16 %v1122
      %v2532 = vunpack.c.l.b16 %v1126
      %v2533 = vunpack.c.l.b16 %v1129
      %v2534 = vunpack.c.l.b16 %v1133
      %v2535 = vunpack.c.l.b16 %v1136
      %v2536 = vunpack.c.l.b16 %v1140
      %v2537 = vunpack.c.l.b16 %v1143
      %v2538 = vpack.c.b16 %v2507, %v2506
      %v2539 = vpack.c.b16 %v2509, %v2508
      %v2540 = vpack.c.b16 %v2511, %v2510
      %v2541 = vpack.c.b16 %v2513, %v2512
      %v2542 = vpack.c.b16 %v2515, %v2514
      %v2543 = vpack.c.b16 %v2517, %v2516
      %v2544 = vpack.c.b16 %v2519, %v2518
      %v2545 = vpack.c.b16 %v2521, %v2520
      %v2546 = vpack.c.b16 %v2523, %v2522
      %v2547 = vpack.c.b16 %v2525, %v2524
      %v2548 = vpack.c.b16 %v2527, %v2526
      %v2549 = vpack.c.b16 %v2529, %v2528
      %v2550 = vpack.c.b16 %v2531, %v2530
      %v2551 = vpack.c.b16 %v2533, %v2532
      %v2552 = vpack.c.b16 %v2535, %v2534
      %v2553 = vpack.c.b16 %v2537, %v2536
      %v2570 = vunpack.c.l.b16 %v1145
      %v2571 = vunpack.c.l.b16 %v1146
      %v2572 = vunpack.c.l.b16 %v1147
      %v2573 = vunpack.c.l.b16 %v1148
      %v2574 = vunpack.c.l.b16 %v1149
      %v2575 = vunpack.c.l.b16 %v1150
      %v2576 = vunpack.c.l.b16 %v1151
      %v2577 = vunpack.c.l.b16 %v1152
      %v2578 = vunpack.c.l.b16 %v1153
      %v2579 = vunpack.c.l.b16 %v1154
      %v2580 = vunpack.c.l.b16 %v1155
      %v2581 = vunpack.c.l.b16 %v1156
      %v2582 = vunpack.c.l.b16 %v1157
      %v2583 = vunpack.c.l.b16 %v1158
      %v2584 = vunpack.c.l.b16 %v1159
      %v2585 = vunpack.c.l.b16 %v1160
      %v2586 = vunpack.c.l.b16 %v1161
      %v2587 = vunpack.c.l.b16 %v1162
      %v2588 = vunpack.c.l.b16 %v1163
      %v2589 = vunpack.c.l.b16 %v1164
      %v2590 = vunpack.c.l.b16 %v1165
      %v2591 = vunpack.c.l.b16 %v1166
      %v2592 = vunpack.c.l.b16 %v1167
      %v2593 = vunpack.c.l.b16 %v1168
      %v2594 = vunpack.c.l.b16 %v1169
      %v2595 = vunpack.c.l.b16 %v1170
      %v2596 = vunpack.c.l.b16 %v1171
      %v2597 = vunpack.c.l.b16 %v1172
      %v2598 = vunpack.c.l.b16 %v1173
      %v2599 = vunpack.c.l.b16 %v1174
      %v2600 = vunpack.c.l.b16 %v1175
      %v2601 = vunpack.c.l.b16 %v1176
      %v2602 = vpack.c.b16 %v2571, %v2570
      %v2603 = vpack.c.b16 %v2573, %v2572
      %v2604 = vpack.c.b16 %v2575, %v2574
      %v2605 = vpack.c.b16 %v2577, %v2576
      %v2606 = vpack.c.b16 %v2579, %v2578
      %v2607 = vpack.c.b16 %v2581, %v2580
      %v2608 = vpack.c.b16 %v2583, %v2582
      %v2609 = vpack.c.b16 %v2585, %v2584
      %v2610 = vpack.c.b16 %v2587, %v2586
      %v2611 = vpack.c.b16 %v2589, %v2588
      %v2612 = vpack.c.b16 %v2591, %v2590
      %v2613 = vpack.c.b16 %v2593, %v2592
      %v2614 = vpack.c.b16 %v2595, %v2594
      %v2615 = vpack.c.b16 %v2597, %v2596
      %v2616 = vpack.c.b16 %v2599, %v2598
      %v2617 = vpack.c.b16 %v2601, %v2600
      %2618 = vrot.lane.b32.xlu0 %v2602, 64
      %v2619 = vpop.permute.xlu0 %2618
      %2620 = vrot.lane.b32.xlu0 %v2603, 64
      %v2621 = vpop.permute.xlu0 %2620
      %2622 = vrot.lane.b32.xlu0 %v2604, 64
      %v2623 = vpop.permute.xlu0 %2622
      %2624 = vrot.lane.b32.xlu0 %v2605, 64
      %v2625 = vpop.permute.xlu0 %2624
      %2626 = vrot.lane.b32.xlu0 %v2606, 64
      %v2627 = vpop.permute.xlu0 %2626
      %2628 = vrot.lane.b32.xlu0 %v2607, 64
      %v2629 = vpop.permute.xlu0 %2628
      %2630 = vrot.lane.b32.xlu0 %v2608, 64
      %v2631 = vpop.permute.xlu0 %2630
      %2632 = vrot.lane.b32.xlu0 %v2609, 64
      %v2633 = vpop.permute.xlu0 %2632
      %2634 = vrot.lane.b32.xlu0 %v2610, 64
      %v2635 = vpop.permute.xlu0 %2634
      %2636 = vrot.lane.b32.xlu0 %v2611, 64
      %v2637 = vpop.permute.xlu0 %2636
      %2638 = vrot.lane.b32.xlu0 %v2612, 64
      %v2639 = vpop.permute.xlu0 %2638
      %2640 = vrot.lane.b32.xlu0 %v2613, 64
      %v2641 = vpop.permute.xlu0 %2640
      %2642 = vrot.lane.b32.xlu0 %v2614, 64
      %v2643 = vpop.permute.xlu0 %2642
      %2644 = vrot.lane.b32.xlu0 %v2615, 64
      %v2645 = vpop.permute.xlu0 %2644
      %2646 = vrot.lane.b32.xlu0 %v2616, 64
      %v2647 = vpop.permute.xlu0 %2646
      %2648 = vrot.lane.b32.xlu0 %v2617, 64
      %v2649 = vpop.permute.xlu0 %2648
      %v2650 = vunpack.c.l.b16 %v1206
      %v2651 = vunpack.c.l.b16 %v1216
      %v2652 = vunpack.c.l.b16 %v1230
      %v2653 = vunpack.c.l.b16 %v1240
      %v2654 = vunpack.c.l.b16 %v1254
      %v2655 = vunpack.c.l.b16 %v1264
      %v2656 = vunpack.c.l.b16 %v1278
      %v2657 = vunpack.c.l.b16 %v1288
      %v2658 = vunpack.c.l.b16 %v1302
      %v2659 = vunpack.c.l.b16 %v1312
      %v2660 = vunpack.c.l.b16 %v1326
      %v2661 = vunpack.c.l.b16 %v1336
      %v2662 = vunpack.c.l.b16 %v1350
      %v2663 = vunpack.c.l.b16 %v1360
      %v2664 = vunpack.c.l.b16 %v1374
      %v2665 = vunpack.c.l.b16 %v1384
      %v2666 = vunpack.c.l.b16 %v1398
      %v2667 = vunpack.c.l.b16 %v1408
      %v2668 = vunpack.c.l.b16 %v1422
      %v2669 = vunpack.c.l.b16 %v1432
      %v2670 = vunpack.c.l.b16 %v1446
      %v2671 = vunpack.c.l.b16 %v1456
      %v2672 = vunpack.c.l.b16 %v1470
      %v2673 = vunpack.c.l.b16 %v1480
      %v2674 = vunpack.c.l.b16 %v1494
      %v2675 = vunpack.c.l.b16 %v1504
      %v2676 = vunpack.c.l.b16 %v1518
      %v2677 = vunpack.c.l.b16 %v1528
      %v2678 = vunpack.c.l.b16 %v1542
      %v2679 = vunpack.c.l.b16 %v1552
      %v2680 = vunpack.c.l.b16 %v1566
      %v2681 = vunpack.c.l.b16 %v1576
      %v2682 = vpack.c.b16 %v2651, %v2650
      %v2683 = vpack.c.b16 %v2653, %v2652
      %v2684 = vpack.c.b16 %v2655, %v2654
      %v2685 = vpack.c.b16 %v2657, %v2656
      %v2686 = vpack.c.b16 %v2659, %v2658
      %v2687 = vpack.c.b16 %v2661, %v2660
      %v2688 = vpack.c.b16 %v2663, %v2662
      %v2689 = vpack.c.b16 %v2665, %v2664
      %v2690 = vpack.c.b16 %v2667, %v2666
      %v2691 = vpack.c.b16 %v2669, %v2668
      %v2692 = vpack.c.b16 %v2671, %v2670
      %v2693 = vpack.c.b16 %v2673, %v2672
      %v2694 = vpack.c.b16 %v2675, %v2674
      %v2695 = vpack.c.b16 %v2677, %v2676
      %v2696 = vpack.c.b16 %v2679, %v2678
      %v2697 = vpack.c.b16 %v2681, %v2680
      %v2698 = vunpack.c.l.b16 %v1644
      %v2699 = vunpack.c.l.b16 %v1647
      %v2700 = vunpack.c.l.b16 %v1651
      %v2701 = vunpack.c.l.b16 %v1654
      %v2702 = vunpack.c.l.b16 %v1658
      %v2703 = vunpack.c.l.b16 %v1661
      %v2704 = vunpack.c.l.b16 %v1665
      %v2705 = vunpack.c.l.b16 %v1668
      %v2706 = vunpack.c.l.b16 %v1672
      %v2707 = vunpack.c.l.b16 %v1675
      %v2708 = vunpack.c.l.b16 %v1679
      %v2709 = vunpack.c.l.b16 %v1682
      %v2710 = vunpack.c.l.b16 %v1686
      %v2711 = vunpack.c.l.b16 %v1689
      %v2712 = vunpack.c.l.b16 %v1693
      %v2713 = vunpack.c.l.b16 %v1696
      %v2714 = vunpack.c.l.b16 %v1700
      %v2715 = vunpack.c.l.b16 %v1703
      %v2716 = vunpack.c.l.b16 %v1707
      %v2717 = vunpack.c.l.b16 %v1710
      %v2718 = vunpack.c.l.b16 %v1714
      %v2719 = vunpack.c.l.b16 %v1717
      %v2720 = vunpack.c.l.b16 %v1721
      %v2721 = vunpack.c.l.b16 %v1724
      %v2722 = vunpack.c.l.b16 %v1728
      %v2723 = vunpack.c.l.b16 %v1731
      %v2724 = vunpack.c.l.b16 %v1735
      %v2725 = vunpack.c.l.b16 %v1738
      %v2726 = vunpack.c.l.b16 %v1742
      %v2727 = vunpack.c.l.b16 %v1745
      %v2728 = vunpack.c.l.b16 %v1749
      %v2729 = vunpack.c.l.b16 %v1752
      %v2730 = vpack.c.b16 %v2699, %v2698
      %v2731 = vpack.c.b16 %v2701, %v2700
      %v2732 = vpack.c.b16 %v2703, %v2702
      %v2733 = vpack.c.b16 %v2705, %v2704
      %v2734 = vpack.c.b16 %v2707, %v2706
      %v2735 = vpack.c.b16 %v2709, %v2708
      %v2736 = vpack.c.b16 %v2711, %v2710
      %v2737 = vpack.c.b16 %v2713, %v2712
      %v2738 = vpack.c.b16 %v2715, %v2714
      %v2739 = vpack.c.b16 %v2717, %v2716
      %v2740 = vpack.c.b16 %v2719, %v2718
      %v2741 = vpack.c.b16 %v2721, %v2720
      %v2742 = vpack.c.b16 %v2723, %v2722
      %v2743 = vpack.c.b16 %v2725, %v2724
      %v2744 = vpack.c.b16 %v2727, %v2726
      %v2745 = vpack.c.b16 %v2729, %v2728
      %2746 = vrot.lane.b32.xlu0 %v2730, 64
      %v2747 = vpop.permute.xlu0 %2746
      %2748 = vrot.lane.b32.xlu0 %v2731, 64
      %v2749 = vpop.permute.xlu0 %2748
      %2750 = vrot.lane.b32.xlu0 %v2732, 64
      %v2751 = vpop.permute.xlu0 %2750
      %2752 = vrot.lane.b32.xlu0 %v2733, 64
      %v2753 = vpop.permute.xlu0 %2752
      %2754 = vrot.lane.b32.xlu0 %v2734, 64
      %v2755 = vpop.permute.xlu0 %2754
      %2756 = vrot.lane.b32.xlu0 %v2735, 64
      %v2757 = vpop.permute.xlu0 %2756
      %2758 = vrot.lane.b32.xlu0 %v2736, 64
      %v2759 = vpop.permute.xlu0 %2758
      %2760 = vrot.lane.b32.xlu0 %v2737, 64
      %v2761 = vpop.permute.xlu0 %2760
      %2762 = vrot.lane.b32.xlu0 %v2738, 64
      %v2763 = vpop.permute.xlu0 %2762
      %2764 = vrot.lane.b32.xlu0 %v2739, 64
      %v2765 = vpop.permute.xlu0 %2764
      %2766 = vrot.lane.b32.xlu0 %v2740, 64
      %v2767 = vpop.permute.xlu0 %2766
      %2768 = vrot.lane.b32.xlu0 %v2741, 64
      %v2769 = vpop.permute.xlu0 %2768
      %2770 = vrot.lane.b32.xlu0 %v2742, 64
      %v2771 = vpop.permute.xlu0 %2770
      %2772 = vrot.lane.b32.xlu0 %v2743, 64
      %v2773 = vpop.permute.xlu0 %2772
      %2774 = vrot.lane.b32.xlu0 %v2744, 64
      %v2775 = vpop.permute.xlu0 %2774
      %2776 = vrot.lane.b32.xlu0 %v2745, 64
      %v2777 = vpop.permute.xlu0 %2776
      %v2794 = vunpack.c.l.b16 %v1754
      %v2795 = vunpack.c.l.b16 %v1755
      %v2796 = vunpack.c.l.b16 %v1756
      %v2797 = vunpack.c.l.b16 %v1757
      %v2798 = vunpack.c.l.b16 %v1758
      %v2799 = vunpack.c.l.b16 %v1759
      %v2800 = vunpack.c.l.b16 %v1760
      %v2801 = vunpack.c.l.b16 %v1761
      %v2802 = vunpack.c.l.b16 %v1762
      %v2803 = vunpack.c.l.b16 %v1763
      %v2804 = vunpack.c.l.b16 %v1764
      %v2805 = vunpack.c.l.b16 %v1765
      %v2806 = vunpack.c.l.b16 %v1766
      %v2807 = vunpack.c.l.b16 %v1767
      %v2808 = vunpack.c.l.b16 %v1768
      %v2809 = vunpack.c.l.b16 %v1769
      %v2810 = vunpack.c.l.b16 %v1770
      %v2811 = vunpack.c.l.b16 %v1771
      %v2812 = vunpack.c.l.b16 %v1772
      %v2813 = vunpack.c.l.b16 %v1773
      %v2814 = vunpack.c.l.b16 %v1774
      %v2815 = vunpack.c.l.b16 %v1775
      %v2816 = vunpack.c.l.b16 %v1776
      %v2817 = vunpack.c.l.b16 %v1777
      %v2818 = vunpack.c.l.b16 %v1778
      %v2819 = vunpack.c.l.b16 %v1779
      %v2820 = vunpack.c.l.b16 %v1780
      %v2821 = vunpack.c.l.b16 %v1781
      %v2822 = vunpack.c.l.b16 %v1782
      %v2823 = vunpack.c.l.b16 %v1783
      %v2824 = vunpack.c.l.b16 %v1784
      %v2825 = vunpack.c.l.b16 %v1785
      %v2826 = vpack.c.b16 %v2795, %v2794
      %v2827 = vpack.c.b16 %v2797, %v2796
      %v2828 = vpack.c.b16 %v2799, %v2798
      %v2829 = vpack.c.b16 %v2801, %v2800
      %v2830 = vpack.c.b16 %v2803, %v2802
      %v2831 = vpack.c.b16 %v2805, %v2804
      %v2832 = vpack.c.b16 %v2807, %v2806
      %v2833 = vpack.c.b16 %v2809, %v2808
      %v2834 = vpack.c.b16 %v2811, %v2810
      %v2835 = vpack.c.b16 %v2813, %v2812
      %v2836 = vpack.c.b16 %v2815, %v2814
      %v2837 = vpack.c.b16 %v2817, %v2816
      %v2838 = vpack.c.b16 %v2819, %v2818
      %v2839 = vpack.c.b16 %v2821, %v2820
      %v2840 = vpack.c.b16 %v2823, %v2822
      %v2841 = vpack.c.b16 %v2825, %v2824
      %v2842 = vunpack.c.l.b16 %v1815
      %v2843 = vunpack.c.l.b16 %v1825
      %v2844 = vunpack.c.l.b16 %v1839
      %v2845 = vunpack.c.l.b16 %v1849
      %v2846 = vunpack.c.l.b16 %v1863
      %v2847 = vunpack.c.l.b16 %v1873
      %v2848 = vunpack.c.l.b16 %v1887
      %v2849 = vunpack.c.l.b16 %v1897
      %v2850 = vunpack.c.l.b16 %v1911
      %v2851 = vunpack.c.l.b16 %v1921
      %v2852 = vunpack.c.l.b16 %v1935
      %v2853 = vunpack.c.l.b16 %v1945
      %v2854 = vunpack.c.l.b16 %v1959
      %v2855 = vunpack.c.l.b16 %v1969
      %v2856 = vunpack.c.l.b16 %v1983
      %v2857 = vunpack.c.l.b16 %v1993
      %v2858 = vunpack.c.l.b16 %v2007
      %v2859 = vunpack.c.l.b16 %v2017
      %v2860 = vunpack.c.l.b16 %v2031
      %v2861 = vunpack.c.l.b16 %v2041
      %v2862 = vunpack.c.l.b16 %v2055
      %v2863 = vunpack.c.l.b16 %v2065
      %v2864 = vunpack.c.l.b16 %v2079
      %v2865 = vunpack.c.l.b16 %v2089
      %v2866 = vunpack.c.l.b16 %v2103
      %v2867 = vunpack.c.l.b16 %v2113
      %v2868 = vunpack.c.l.b16 %v2127
      %v2869 = vunpack.c.l.b16 %v2137
      %v2870 = vunpack.c.l.b16 %v2151
      %v2871 = vunpack.c.l.b16 %v2161
      %v2872 = vunpack.c.l.b16 %v2175
      %v2873 = vunpack.c.l.b16 %v2185
      %v2874 = vpack.c.b16 %v2843, %v2842
      %v2875 = vpack.c.b16 %v2845, %v2844
      %v2876 = vpack.c.b16 %v2847, %v2846
      %v2877 = vpack.c.b16 %v2849, %v2848
      %v2878 = vpack.c.b16 %v2851, %v2850
      %v2879 = vpack.c.b16 %v2853, %v2852
      %v2880 = vpack.c.b16 %v2855, %v2854
      %v2881 = vpack.c.b16 %v2857, %v2856
      %v2882 = vpack.c.b16 %v2859, %v2858
      %v2883 = vpack.c.b16 %v2861, %v2860
      %v2884 = vpack.c.b16 %v2863, %v2862
      %v2885 = vpack.c.b16 %v2865, %v2864
      %v2886 = vpack.c.b16 %v2867, %v2866
      %v2887 = vpack.c.b16 %v2869, %v2868
      %v2888 = vpack.c.b16 %v2871, %v2870
      %v2889 = vpack.c.b16 %v2873, %v2872
      %2890 = vrot.lane.b32.xlu0 %v2874, 64
      %v2891 = vpop.permute.xlu0 %2890
      %2892 = vrot.lane.b32.xlu0 %v2875, 64
      %v2893 = vpop.permute.xlu0 %2892
      %2894 = vrot.lane.b32.xlu0 %v2876, 64
      %v2895 = vpop.permute.xlu0 %2894
      %2896 = vrot.lane.b32.xlu0 %v2877, 64
      %v2897 = vpop.permute.xlu0 %2896
      %2898 = vrot.lane.b32.xlu0 %v2878, 64
      %v2899 = vpop.permute.xlu0 %2898
      %2900 = vrot.lane.b32.xlu0 %v2879, 64
      %v2901 = vpop.permute.xlu0 %2900
      %2902 = vrot.lane.b32.xlu0 %v2880, 64
      %v2903 = vpop.permute.xlu0 %2902
      %2904 = vrot.lane.b32.xlu0 %v2881, 64
      %v2905 = vpop.permute.xlu0 %2904
      %2906 = vrot.lane.b32.xlu0 %v2882, 64
      %v2907 = vpop.permute.xlu0 %2906
      %2908 = vrot.lane.b32.xlu0 %v2883, 64
      %v2909 = vpop.permute.xlu0 %2908
      %2910 = vrot.lane.b32.xlu0 %v2884, 64
      %v2911 = vpop.permute.xlu0 %2910
      %2912 = vrot.lane.b32.xlu0 %v2885, 64
      %v2913 = vpop.permute.xlu0 %2912
      %2914 = vrot.lane.b32.xlu0 %v2886, 64
      %v2915 = vpop.permute.xlu0 %2914
      %2916 = vrot.lane.b32.xlu0 %v2887, 64
      %v2917 = vpop.permute.xlu0 %2916
      %2918 = vrot.lane.b32.xlu0 %v2888, 64
      %v2919 = vpop.permute.xlu0 %2918
      %2920 = vrot.lane.b32.xlu0 %v2889, 64
      %v2921 = vpop.permute.xlu0 %2920
      %v2922 = vunpack.c.l.b16 %v2253
      %v2923 = vunpack.c.l.b16 %v2256
      %v2924 = vunpack.c.l.b16 %v2260
      %v2925 = vunpack.c.l.b16 %v2263
      %v2926 = vunpack.c.l.b16 %v2267
      %v2927 = vunpack.c.l.b16 %v2270
      %v2928 = vunpack.c.l.b16 %v2274
      %v2929 = vunpack.c.l.b16 %v2277
      %v2930 = vunpack.c.l.b16 %v2281
      %v2931 = vunpack.c.l.b16 %v2284
      %v2932 = vunpack.c.l.b16 %v2288
      %v2933 = vunpack.c.l.b16 %v2291
      %v2934 = vunpack.c.l.b16 %v2295
      %v2935 = vunpack.c.l.b16 %v2298
      %v2936 = vunpack.c.l.b16 %v2302
      %v2937 = vunpack.c.l.b16 %v2305
      %v2938 = vunpack.c.l.b16 %v2309
      %v2939 = vunpack.c.l.b16 %v2312
      %v2940 = vunpack.c.l.b16 %v2316
      %v2941 = vunpack.c.l.b16 %v2319
      %v2942 = vunpack.c.l.b16 %v2323
      %v2943 = vunpack.c.l.b16 %v2326
      %v2944 = vunpack.c.l.b16 %v2330
      %v2945 = vunpack.c.l.b16 %v2333
      %v2946 = vunpack.c.l.b16 %v2337
      %v2947 = vunpack.c.l.b16 %v2340
      %v2948 = vunpack.c.l.b16 %v2344
      %v2949 = vunpack.c.l.b16 %v2347
      %v2950 = vunpack.c.l.b16 %v2351
      %v2951 = vunpack.c.l.b16 %v2354
      %v2952 = vunpack.c.l.b16 %v2358
      %v2953 = vunpack.c.l.b16 %v2361
      %v2954 = vpack.c.b16 %v2923, %v2922
      %v2955 = vpack.c.b16 %v2925, %v2924
      %v2956 = vpack.c.b16 %v2927, %v2926
      %v2957 = vpack.c.b16 %v2929, %v2928
      %v2958 = vpack.c.b16 %v2931, %v2930
      %v2959 = vpack.c.b16 %v2933, %v2932
      %v2960 = vpack.c.b16 %v2935, %v2934
      %v2961 = vpack.c.b16 %v2937, %v2936
      %v2962 = vpack.c.b16 %v2939, %v2938
      %v2963 = vpack.c.b16 %v2941, %v2940
      %v2964 = vpack.c.b16 %v2943, %v2942
      %v2965 = vpack.c.b16 %v2945, %v2944
      %v2966 = vpack.c.b16 %v2947, %v2946
      %v2967 = vpack.c.b16 %v2949, %v2948
      %v2968 = vpack.c.b16 %v2951, %v2950
      %v2969 = vpack.c.b16 %v2953, %v2952
      %vm2970 = vcmask 523264
      %v2973 = vsel %vm2970, %v2410, %v2475
      %v2977 = vsel %vm2970, %v2411, %v2477
      %v2981 = vsel %vm2970, %v2412, %v2479
      %v2985 = vsel %vm2970, %v2413, %v2481
      %v2989 = vsel %vm2970, %v2414, %v2483
      %v2993 = vsel %vm2970, %v2415, %v2485
      %v2997 = vsel %vm2970, %v2416, %v2487
      %v3001 = vsel %vm2970, %v2417, %v2489
      %v3005 = vsel %vm2970, %v2418, %v2491
      %v3009 = vsel %vm2970, %v2419, %v2493
      %v3013 = vsel %vm2970, %v2420, %v2495
      %v3017 = vsel %vm2970, %v2421, %v2497
      %v3021 = vsel %vm2970, %v2422, %v2499
      %v3025 = vsel %vm2970, %v2423, %v2501
      %v3029 = vsel %vm2970, %v2424, %v2503
      %v3033 = vsel %vm2970, %v2425, %v2505
      %v3037 = vsel %vm2970, %v2538, %v2619
      %v3041 = vsel %vm2970, %v2539, %v2621
      %v3045 = vsel %vm2970, %v2540, %v2623
      %v3049 = vsel %vm2970, %v2541, %v2625
      %v3053 = vsel %vm2970, %v2542, %v2627
      %v3057 = vsel %vm2970, %v2543, %v2629
      %v3061 = vsel %vm2970, %v2544, %v2631
      %v3065 = vsel %vm2970, %v2545, %v2633
      %v3069 = vsel %vm2970, %v2546, %v2635
      %v3073 = vsel %vm2970, %v2547, %v2637
      %v3077 = vsel %vm2970, %v2548, %v2639
      %v3081 = vsel %vm2970, %v2549, %v2641
      %v3085 = vsel %vm2970, %v2550, %v2643
      %v3089 = vsel %vm2970, %v2551, %v2645
      %v3093 = vsel %vm2970, %v2552, %v2647
      %v3097 = vsel %vm2970, %v2553, %v2649
      %v3101 = vsel %vm2970, %v2682, %v2747
      %v3105 = vsel %vm2970, %v2683, %v2749
      %v3109 = vsel %vm2970, %v2684, %v2751
      %v3113 = vsel %vm2970, %v2685, %v2753
      %v3117 = vsel %vm2970, %v2686, %v2755
      %v3121 = vsel %vm2970, %v2687, %v2757
      %v3125 = vsel %vm2970, %v2688, %v2759
      %v3129 = vsel %vm2970, %v2689, %v2761
      %v3133 = vsel %vm2970, %v2690, %v2763
      %v3137 = vsel %vm2970, %v2691, %v2765
      %v3141 = vsel %vm2970, %v2692, %v2767
      %v3145 = vsel %vm2970, %v2693, %v2769
      %v3149 = vsel %vm2970, %v2694, %v2771
      %v3153 = vsel %vm2970, %v2695, %v2773
      %v3157 = vsel %vm2970, %v2696, %v2775
      %v3161 = vsel %vm2970, %v2697, %v2777
      %v3165 = vsel %vm2970, %v2826, %v2891
      %v3169 = vsel %vm2970, %v2827, %v2893
      %v3173 = vsel %vm2970, %v2828, %v2895
      %v3177 = vsel %vm2970, %v2829, %v2897
      %v3181 = vsel %vm2970, %v2830, %v2899
      %v3185 = vsel %vm2970, %v2831, %v2901
      %v3189 = vsel %vm2970, %v2832, %v2903
      %v3193 = vsel %vm2970, %v2833, %v2905
      %v3197 = vsel %vm2970, %v2834, %v2907
      %v3201 = vsel %vm2970, %v2835, %v2909
      %v3205 = vsel %vm2970, %v2836, %v2911
      %v3209 = vsel %vm2970, %v2837, %v2913
      %v3213 = vsel %vm2970, %v2838, %v2915
      %v3217 = vsel %vm2970, %v2839, %v2917
      %v3221 = vsel %vm2970, %v2840, %v2919
      %v3225 = vsel %vm2970, %v2841, %v2921
      %v3227 = vld [vmem:[%s3] sm:$0xff]
      %v3228 = vld [vmem:[%s3 + $0x8] sm:$0xff]
      %v3229 = vld [vmem:[%s3 + $0x10] sm:$0xff]
      %v3230 = vld [vmem:[%s3 + $0x18] sm:$0xff]
      %v3231 = vld [vmem:[%s3 + $0x20] sm:$0xff]
      %v3232 = vld [vmem:[%s3 + $0x28] sm:$0xff]
      %v3233 = vld [vmem:[%s3 + $0x30] sm:$0xff]
      %v3234 = vld [vmem:[%s3 + $0x38] sm:$0xff]
      %v3235 = vld [vmem:[%s3 + $0x40] sm:$0xff]
      %v3236 = vld [vmem:[%s3 + $0x48] sm:$0xff]
      %v3237 = vld [vmem:[%s3 + $0x50] sm:$0xff]
      %v3238 = vld [vmem:[%s3 + $0x58] sm:$0xff]
      %v3239 = vld [vmem:[%s3 + $0x60] sm:$0xff]
      %v3240 = vld [vmem:[%s3 + $0x68] sm:$0xff]
      %v3241 = vld [vmem:[%s3 + $0x70] sm:$0xff]
      %v3242 = vld [vmem:[%s3 + $0x78] sm:$0xff]
      %v3243 = vld [vmem:[%s3 + $0x80] sm:$0xff]
      %v3244 = vld [vmem:[%s3 + $0x88] sm:$0xff]
      %v3245 = vld [vmem:[%s3 + $0x90] sm:$0xff]
      %v3246 = vld [vmem:[%s3 + $0x98] sm:$0xff]
      %v3247 = vld [vmem:[%s3 + $0xa0] sm:$0xff]
      %v3248 = vld [vmem:[%s3 + $0xa8] sm:$0xff]
      %v3249 = vld [vmem:[%s3 + $0xb0] sm:$0xff]
      %v3250 = vld [vmem:[%s3 + $0xb8] sm:$0xff]
      %v3251 = vld [vmem:[%s3 + $0xc0] sm:$0xff]
      %v3252 = vld [vmem:[%s3 + $0xc8] sm:$0xff]
      %v3253 = vld [vmem:[%s3 + $0xd0] sm:$0xff]
      %v3254 = vld [vmem:[%s3 + $0xd8] sm:$0xff]
      %v3255 = vld [vmem:[%s3 + $0xe0] sm:$0xff]
      %v3256 = vld [vmem:[%s3 + $0xe8] sm:$0xff]
      %v3257 = vld [vmem:[%s3 + $0xf0] sm:$0xff]
      %v3258 = vld [vmem:[%s3 + $0xf8] sm:$0xff]
      %v3259 = vld [vmem:[%s3 + $0x100] sm:$0xff]
      %v3260 = vld [vmem:[%s3 + $0x108] sm:$0xff]
      %v3261 = vld [vmem:[%s3 + $0x110] sm:$0xff]
      %v3262 = vld [vmem:[%s3 + $0x118] sm:$0xff]
      %v3263 = vld [vmem:[%s3 + $0x120] sm:$0xff]
      %v3264 = vld [vmem:[%s3 + $0x128] sm:$0xff]
      %v3265 = vld [vmem:[%s3 + $0x130] sm:$0xff]
      %v3266 = vld [vmem:[%s3 + $0x138] sm:$0xff]
      %v3267 = vld [vmem:[%s3 + $0x140] sm:$0xff]
      %v3268 = vld [vmem:[%s3 + $0x148] sm:$0xff]
      %v3269 = vld [vmem:[%s3 + $0x150] sm:$0xff]
      %v3270 = vld [vmem:[%s3 + $0x158] sm:$0xff]
      %v3271 = vld [vmem:[%s3 + $0x160] sm:$0xff]
      %v3272 = vld [vmem:[%s3 + $0x168] sm:$0xff]
      %v3273 = vld [vmem:[%s3 + $0x170] sm:$0xff]
      %v3274 = vld [vmem:[%s3 + $0x178] sm:$0xff]
      %v3275 = vld [vmem:[%s3 + $0x180] sm:$0xff]
      %v3276 = vld [vmem:[%s3 + $0x188] sm:$0xff]
      %v3277 = vld [vmem:[%s3 + $0x190] sm:$0xff]
      %v3278 = vld [vmem:[%s3 + $0x198] sm:$0xff]
      %v3279 = vld [vmem:[%s3 + $0x1a0] sm:$0xff]
      %v3280 = vld [vmem:[%s3 + $0x1a8] sm:$0xff]
      %v3281 = vld [vmem:[%s3 + $0x1b0] sm:$0xff]
      %v3282 = vld [vmem:[%s3 + $0x1b8] sm:$0xff]
      %v3283 = vld [vmem:[%s3 + $0x1c0] sm:$0xff]
      %v3284 = vld [vmem:[%s3 + $0x1c8] sm:$0xff]
      %v3285 = vld [vmem:[%s3 + $0x1d0] sm:$0xff]
      %v3286 = vld [vmem:[%s3 + $0x1d8] sm:$0xff]
      %v3287 = vld [vmem:[%s3 + $0x1e0] sm:$0xff]
      %v3288 = vld [vmem:[%s3 + $0x1e8] sm:$0xff]
      %v3289 = vld [vmem:[%s3 + $0x1f0] sm:$0xff]
      %v3290 = vld [vmem:[%s3 + $0x1f8] sm:$0xff]
      %v3291 = vld [vmem:[%s3 + $0x200] sm:$0xff]
      %v3292 = vld [vmem:[%s3 + $0x208] sm:$0xff]
      %v3293 = vld [vmem:[%s3 + $0x210] sm:$0xff]
      %v3294 = vld [vmem:[%s3 + $0x218] sm:$0xff]
      %v3295 = vld [vmem:[%s3 + $0x220] sm:$0xff]
      %v3296 = vld [vmem:[%s3 + $0x228] sm:$0xff]
      %v3297 = vld [vmem:[%s3 + $0x230] sm:$0xff]
      %v3298 = vld [vmem:[%s3 + $0x238] sm:$0xff]
      %v3371 = vunpack.c.l.b16 %v3227
      %v3372 = vunpack.c.h.b16 %v3227
      %v3373 = vunpack.c.l.b16 %v3228
      %v3374 = vunpack.c.h.b16 %v3228
      %v3375 = vunpack.c.l.b16 %v3229
      %v3376 = vunpack.c.h.b16 %v3229
      %v3377 = vunpack.c.l.b16 %v3230
      %v3378 = vunpack.c.h.b16 %v3230
      %v3379 = vunpack.c.l.b16 %v3231
      %v3380 = vunpack.c.h.b16 %v3231
      %v3381 = vunpack.c.l.b16 %v3232
      %v3382 = vunpack.c.h.b16 %v3232
      %v3383 = vunpack.c.l.b16 %v3233
      %v3384 = vunpack.c.h.b16 %v3233
      %v3385 = vunpack.c.l.b16 %v3234
      %v3386 = vunpack.c.h.b16 %v3234
      %v3387 = vunpack.c.l.b16 %v3235
      %v3388 = vunpack.c.h.b16 %v3235
      %v3389 = vunpack.c.l.b16 %v3236
      %v3390 = vunpack.c.h.b16 %v3236
      %v3391 = vunpack.c.l.b16 %v3237
      %v3392 = vunpack.c.h.b16 %v3237
      %v3393 = vunpack.c.l.b16 %v3238
      %v3394 = vunpack.c.h.b16 %v3238
      %v3395 = vunpack.c.l.b16 %v3239
      %v3396 = vunpack.c.h.b16 %v3239
      %v3397 = vunpack.c.l.b16 %v3240
      %v3398 = vunpack.c.h.b16 %v3240
      %v3399 = vunpack.c.l.b16 %v3241
      %v3400 = vunpack.c.h.b16 %v3241
      %v3401 = vunpack.c.l.b16 %v3242
      %v3402 = vunpack.c.h.b16 %v3242
      %v3403 = vunpack.c.l.b16 %v3243
      %v3404 = vunpack.c.h.b16 %v3243
      %v3405 = vunpack.c.l.b16 %v3244
      %v3406 = vunpack.c.h.b16 %v3244
      %v3407 = vunpack.c.l.b16 %v3245
      %v3408 = vunpack.c.h.b16 %v3245
      %v3409 = vunpack.c.l.b16 %v3246
      %v3410 = vunpack.c.h.b16 %v3246
      %v3411 = vunpack.c.l.b16 %v3247
      %v3412 = vunpack.c.h.b16 %v3247
      %v3413 = vunpack.c.l.b16 %v3248
      %v3414 = vunpack.c.h.b16 %v3248
      %v3415 = vunpack.c.l.b16 %v3249
      %v3416 = vunpack.c.h.b16 %v3249
      %v3417 = vunpack.c.l.b16 %v3250
      %v3418 = vunpack.c.h.b16 %v3250
      %v3419 = vunpack.c.l.b16 %v3251
      %v3420 = vunpack.c.h.b16 %v3251
      %v3421 = vunpack.c.l.b16 %v3252
      %v3422 = vunpack.c.h.b16 %v3252
      %v3423 = vunpack.c.l.b16 %v3253
      %v3424 = vunpack.c.h.b16 %v3253
      %v3425 = vunpack.c.l.b16 %v3254
      %v3426 = vunpack.c.h.b16 %v3254
      %v3427 = vunpack.c.l.b16 %v3255
      %v3428 = vunpack.c.h.b16 %v3255
      %v3429 = vunpack.c.l.b16 %v3256
      %v3430 = vunpack.c.h.b16 %v3256
      %v3431 = vunpack.c.l.b16 %v3257
      %v3432 = vunpack.c.h.b16 %v3257
      %v3433 = vunpack.c.l.b16 %v3258
      %v3434 = vunpack.c.h.b16 %v3258
      %v3435 = vunpack.c.l.b16 %v3259
      %v3436 = vunpack.c.h.b16 %v3259
      %v3437 = vunpack.c.l.b16 %v3260
      %v3438 = vunpack.c.h.b16 %v3260
      %v3439 = vunpack.c.l.b16 %v3261
      %v3440 = vunpack.c.h.b16 %v3261
      %v3441 = vunpack.c.l.b16 %v3262
      %v3442 = vunpack.c.h.b16 %v3262
      %v3443 = vunpack.c.l.b16 %v3263
      %v3444 = vunpack.c.h.b16 %v3263
      %v3445 = vunpack.c.l.b16 %v3264
      %v3446 = vunpack.c.h.b16 %v3264
      %v3447 = vunpack.c.l.b16 %v3265
      %v3448 = vunpack.c.h.b16 %v3265
      %v3449 = vunpack.c.l.b16 %v3266
      %v3450 = vunpack.c.h.b16 %v3266
      %v3451 = vunpack.c.l.b16 %v3267
      %v3452 = vunpack.c.h.b16 %v3267
      %v3453 = vunpack.c.l.b16 %v3268
      %v3454 = vunpack.c.h.b16 %v3268
      %v3455 = vunpack.c.l.b16 %v3269
      %v3456 = vunpack.c.h.b16 %v3269
      %v3457 = vunpack.c.l.b16 %v3270
      %v3458 = vunpack.c.h.b16 %v3270
      %v3459 = vunpack.c.l.b16 %v3271
      %v3460 = vunpack.c.h.b16 %v3271
      %v3461 = vunpack.c.l.b16 %v3272
      %v3462 = vunpack.c.h.b16 %v3272
      %v3463 = vunpack.c.l.b16 %v3273
      %v3464 = vunpack.c.h.b16 %v3273
      %v3465 = vunpack.c.l.b16 %v3274
      %v3466 = vunpack.c.h.b16 %v3274
      %v3467 = vunpack.c.l.b16 %v3275
      %v3468 = vunpack.c.h.b16 %v3275
      %v3469 = vunpack.c.l.b16 %v3276
      %v3470 = vunpack.c.h.b16 %v3276
      %v3471 = vunpack.c.l.b16 %v3277
      %v3472 = vunpack.c.h.b16 %v3277
      %v3473 = vunpack.c.l.b16 %v3278
      %v3474 = vunpack.c.h.b16 %v3278
      %v3475 = vunpack.c.l.b16 %v3279
      %v3476 = vunpack.c.h.b16 %v3279
      %v3477 = vunpack.c.l.b16 %v3280
      %v3478 = vunpack.c.h.b16 %v3280
      %v3479 = vunpack.c.l.b16 %v3281
      %v3480 = vunpack.c.h.b16 %v3281
      %v3481 = vunpack.c.l.b16 %v3282
      %v3482 = vunpack.c.h.b16 %v3282
      %v3483 = vunpack.c.l.b16 %v3283
      %v3484 = vunpack.c.h.b16 %v3283
      %v3485 = vunpack.c.l.b16 %v3284
      %v3486 = vunpack.c.h.b16 %v3284
      %v3487 = vunpack.c.l.b16 %v3285
      %v3488 = vunpack.c.h.b16 %v3285
      %v3489 = vunpack.c.l.b16 %v3286
      %v3490 = vunpack.c.h.b16 %v3286
      %v3491 = vunpack.c.l.b16 %v3287
      %v3492 = vunpack.c.h.b16 %v3287
      %v3493 = vunpack.c.l.b16 %v3288
      %v3494 = vunpack.c.h.b16 %v3288
      %v3495 = vunpack.c.l.b16 %v3289
      %v3496 = vunpack.c.h.b16 %v3289
      %v3497 = vunpack.c.l.b16 %v3290
      %v3498 = vunpack.c.h.b16 %v3290
      %v3499 = vunpack.c.l.b16 %v3291
      %v3500 = vunpack.c.h.b16 %v3291
      %v3501 = vunpack.c.l.b16 %v3292
      %v3502 = vunpack.c.h.b16 %v3292
      %v3503 = vunpack.c.l.b16 %v3293
      %v3504 = vunpack.c.h.b16 %v3293
      %v3505 = vunpack.c.l.b16 %v3294
      %v3506 = vunpack.c.h.b16 %v3294
      %v3507 = vunpack.c.l.b16 %v3295
      %v3508 = vunpack.c.h.b16 %v3295
      %v3509 = vunpack.c.l.b16 %v3296
      %v3510 = vunpack.c.h.b16 %v3296
      %v3511 = vunpack.c.l.b16 %v3297
      %v3512 = vunpack.c.h.b16 %v3297
      %v3513 = vunpack.c.l.b16 %v3298
      %v3514 = vunpack.c.h.b16 %v3298
      %v3515 = vpack.c.b16 %v3373, %v3371
      %v3516 = vpack.c.b16 %v3374, %v3372
      %v3517 = vpack.c.b16 %v3377, %v3375
      %v3518 = vpack.c.b16 %v3378, %v3376
      %v3519 = vpack.c.b16 %v3381, %v3379
      %v3520 = vpack.c.b16 %v3382, %v3380
      %v3521 = vpack.c.b16 %v3385, %v3383
      %v3522 = vpack.c.b16 %v3386, %v3384
      %v3523 = vpack.c.b16 %v3389, %v3387
      %v3524 = vpack.c.b16 %v3390, %v3388
      %v3525 = vpack.c.b16 %v3393, %v3391
      %v3526 = vpack.c.b16 %v3394, %v3392
      %v3527 = vpack.c.b16 %v3397, %v3395
      %v3528 = vpack.c.b16 %v3398, %v3396
      %v3529 = vpack.c.b16 %v3401, %v3399
      %v3530 = vpack.c.b16 %v3402, %v3400
      %v3531 = vpack.c.b16 %v3405, %v3403
      %v3532 = vpack.c.b16 %v3406, %v3404
      %v3533 = vpack.c.b16 %v3409, %v3407
      %v3534 = vpack.c.b16 %v3410, %v3408
      %v3535 = vpack.c.b16 %v3413, %v3411
      %v3536 = vpack.c.b16 %v3414, %v3412
      %v3537 = vpack.c.b16 %v3417, %v3415
      %v3538 = vpack.c.b16 %v3418, %v3416
      %v3539 = vpack.c.b16 %v3421, %v3419
      %v3540 = vpack.c.b16 %v3422, %v3420
      %v3541 = vpack.c.b16 %v3425, %v3423
      %v3542 = vpack.c.b16 %v3426, %v3424
      %v3543 = vpack.c.b16 %v3429, %v3427
      %v3544 = vpack.c.b16 %v3430, %v3428
      %v3545 = vpack.c.b16 %v3433, %v3431
      %v3546 = vpack.c.b16 %v3434, %v3432
      %v3547 = vpack.c.b16 %v3437, %v3435
      %v3548 = vpack.c.b16 %v3438, %v3436
      %v3549 = vpack.c.b16 %v3441, %v3439
      %v3550 = vpack.c.b16 %v3442, %v3440
      %v3551 = vpack.c.b16 %v3445, %v3443
      %v3552 = vpack.c.b16 %v3446, %v3444
      %v3553 = vpack.c.b16 %v3449, %v3447
      %v3554 = vpack.c.b16 %v3450, %v3448
      %v3555 = vpack.c.b16 %v3453, %v3451
      %v3556 = vpack.c.b16 %v3454, %v3452
      %v3557 = vpack.c.b16 %v3457, %v3455
      %v3558 = vpack.c.b16 %v3458, %v3456
      %v3559 = vpack.c.b16 %v3461, %v3459
      %v3560 = vpack.c.b16 %v3462, %v3460
      %v3561 = vpack.c.b16 %v3465, %v3463
      %v3562 = vpack.c.b16 %v3466, %v3464
      %v3563 = vpack.c.b16 %v3469, %v3467
      %v3564 = vpack.c.b16 %v3470, %v3468
      %v3565 = vpack.c.b16 %v3473, %v3471
      %v3566 = vpack.c.b16 %v3474, %v3472
      %v3567 = vpack.c.b16 %v3477, %v3475
      %v3568 = vpack.c.b16 %v3478, %v3476
      %v3569 = vpack.c.b16 %v3481, %v3479
      %v3570 = vpack.c.b16 %v3482, %v3480
      %v3571 = vpack.c.b16 %v3485, %v3483
      %v3572 = vpack.c.b16 %v3486, %v3484
      %v3573 = vpack.c.b16 %v3489, %v3487
      %v3574 = vpack.c.b16 %v3490, %v3488
      %v3575 = vpack.c.b16 %v3493, %v3491
      %v3576 = vpack.c.b16 %v3494, %v3492
      %v3577 = vpack.c.b16 %v3497, %v3495
      %v3578 = vpack.c.b16 %v3498, %v3496
      %v3579 = vpack.c.b16 %v3501, %v3499
      %v3580 = vpack.c.b16 %v3502, %v3500
      %v3581 = vpack.c.b16 %v3505, %v3503
      %v3582 = vpack.c.b16 %v3506, %v3504
      %v3583 = vpack.c.b16 %v3509, %v3507
      %v3584 = vpack.c.b16 %v3510, %v3508
      %v3585 = vpack.c.b16 %v3513, %v3511
      %v3586 = vpack.c.b16 %v3514, %v3512
      %v3660 = vsel %vm2970, %v2954, 0
      %v3663 = vsel %vm2970, %v2955, 0
      %v3666 = vsel %vm2970, %v2956, 0
      %v3669 = vsel %vm2970, %v2957, 0
      %v3672 = vsel %vm2970, %v2958, 0
      %v3675 = vsel %vm2970, %v2959, 0
      %v3678 = vsel %vm2970, %v2960, 0
      %v3681 = vsel %vm2970, %v2961, 0
      %v3684 = vsel %vm2970, %v2962, 0
      %v3687 = vsel %vm2970, %v2963, 0
      %v3690 = vsel %vm2970, %v2964, 0
      %v3693 = vsel %vm2970, %v2965, 0
      %v3696 = vsel %vm2970, %v2966, 0
      %v3699 = vsel %vm2970, %v2967, 0
      %v3702 = vsel %vm2970, %v2968, 0
      %v3705 = vsel %vm2970, %v2969, 0
      %3707 = vmatprep.subr.bf16.mxu0 %v3516
      %3708 = vmatpush1.bf16.msra.mxu0 %v3515
      %3709 = vmatprep.subr.bf16.mxu0 %v3518
      %3710 = vmatpush1.bf16.msra.mxu0 %v3517
      %3711 = vmatprep.subr.bf16.mxu0 %v3520
      %3712 = vmatpush1.bf16.msra.mxu0 %v3519
      %3713 = vmatprep.subr.bf16.mxu0 %v3522
      %3714 = vmatpush1.bf16.msra.mxu0 %v3521
      %3715 = vmatprep.subr.bf16.mxu0 %v3524
      %3716 = vmatpush1.bf16.msra.mxu0 %v3523
      %3717 = vmatprep.subr.bf16.mxu0 %v3526
      %3718 = vmatpush1.bf16.msra.mxu0 %v3525
      %3719 = vmatprep.subr.bf16.mxu0 %v3528
      %3720 = vmatpush1.bf16.msra.mxu0 %v3527
      %3721 = vmatprep.subr.bf16.mxu0 %v3530
      %3722 = vmatpush1.bf16.msra.mxu0 %v3529
      %3723 = vmatprep.subr.bf16.mxu0 %v3532
      %3724 = vmatpush1.bf16.msra.mxu0 %v3531
      %3725 = vmatprep.subr.bf16.mxu0 %v3534
      %3726 = vmatpush1.bf16.msra.mxu0 %v3533
      %3727 = vmatprep.subr.bf16.mxu0 %v3536
      %3728 = vmatpush1.bf16.msra.mxu0 %v3535
      %3729 = vmatprep.subr.bf16.mxu0 %v3538
      %3730 = vmatpush1.bf16.msra.mxu0 %v3537
      %3731 = vmatprep.subr.bf16.mxu0 %v3540
      %3732 = vmatpush1.bf16.msra.mxu0 %v3539
      %3733 = vmatprep.subr.bf16.mxu0 %v3542
      %3734 = vmatpush1.bf16.msra.mxu0 %v3541
      %3735 = vmatprep.subr.bf16.mxu0 %v3544
      %3736 = vmatpush1.bf16.msra.mxu0 %v3543
      %3737 = vmatprep.subr.bf16.mxu0 %v3546
      %3738 = vmatpush1.bf16.msra.mxu0 %v3545
      %3739 = vmatprep.mubr.bf16.mxu0 %v3037
      %3740 = vmatmul.mubr.bf16.gmra.mrb[0].mxu0 %v2973
      %v3741 = vpop.f32.mrb[0].mxu0
      %v3742 = vadd.f32 0.0, %v3741
      %v3743 = vpop.f32.mrb[0].mxu0
      %v3744 = vadd.f32 0.0, %v3743
      %v3745 = vpop.f32.mrb[0].mxu0
      %v3746 = vadd.f32 0.0, %v3745
      %v3747 = vpop.f32.mrb[0].mxu0
      %v3748 = vadd.f32 0.0, %v3747
      %3749 = vmatprep.mubr.bf16.mxu0 %v3041
      %3750 = vmatmul.mubr.bf16.gmra.mrb[0].mxu0 %v2977
      %v3751 = vpop.f32.mrb[0].mxu0
      %v3752 = vadd.f32 0.0, %v3751
      %v3753 = vpop.f32.mrb[0].mxu0
      %v3754 = vadd.f32 0.0, %v3753
      %v3755 = vpop.f32.mrb[0].mxu0
      %v3756 = vadd.f32 0.0, %v3755
      %v3757 = vpop.f32.mrb[0].mxu0
      %v3758 = vadd.f32 0.0, %v3757
      %3759 = vmatprep.mubr.bf16.mxu0 %v3045
      %3760 = vmatmul.mubr.bf16.gmra.mrb[0].mxu0 %v2981
      %v3761 = vpop.f32.mrb[0].mxu0
      %v3762 = vadd.f32 0.0, %v3761
      %v3763 = vpop.f32.mrb[0].mxu0
      %v3764 = vadd.f32 0.0, %v3763
      %v3765 = vpop.f32.mrb[0].mxu0
      %v3766 = vadd.f32 0.0, %v3765
      %v3767 = vpop.f32.mrb[0].mxu0
      %v3768 = vadd.f32 0.0, %v3767
      %3769 = vmatprep.mubr.bf16.mxu0 %v3049
      %3770 = vmatmul.mubr.bf16.gmra.mrb[0].mxu0 %v2985
      %v3771 = vpop.f32.mrb[0].mxu0
      %v3772 = vadd.f32 0.0, %v3771
      %v3773 = vpop.f32.mrb[0].mxu0
      %v3774 = vadd.f32 0.0, %v3773
      %v3775 = vpop.f32.mrb[0].mxu0
      %v3776 = vadd.f32 0.0, %v3775
      %v3777 = vpop.f32.mrb[0].mxu0
      %v3778 = vadd.f32 0.0, %v3777
      %3779 = vmatprep.mubr.bf16.mxu0 %v3053
      %3780 = vmatmul.mubr.bf16.gmra.mrb[0].mxu0 %v2989
      %v3781 = vpop.f32.mrb[0].mxu0
      %v3782 = vadd.f32 0.0, %v3781
      %v3783 = vpop.f32.mrb[0].mxu0
      %v3784 = vadd.f32 0.0, %v3783
      %v3785 = vpop.f32.mrb[0].mxu0
      %v3786 = vadd.f32 0.0, %v3785
      %v3787 = vpop.f32.mrb[0].mxu0
      %v3788 = vadd.f32 0.0, %v3787
      %3789 = vmatprep.mubr.bf16.mxu0 %v3057
      %3790 = vmatmul.mubr.bf16.gmra.mrb[0].mxu0 %v2993
      %v3791 = vpop.f32.mrb[0].mxu0
      %v3792 = vadd.f32 0.0, %v3791
      %v3793 = vpop.f32.mrb[0].mxu0
      %v3794 = vadd.f32 0.0, %v3793
      %v3795 = vpop.f32.mrb[0].mxu0
      %v3796 = vadd.f32 0.0, %v3795
      %v3797 = vpop.f32.mrb[0].mxu0
      %v3798 = vadd.f32 0.0, %v3797
      %3799 = vmatprep.mubr.bf16.mxu0 %v3061
      %3800 = vmatmul.mubr.bf16.gmra.mrb[0].mxu0 %v2997
      %v3801 = vpop.f32.mrb[0].mxu0
      %v3802 = vadd.f32 0.0, %v3801
      %v3803 = vpop.f32.mrb[0].mxu0
      %v3804 = vadd.f32 0.0, %v3803
      %v3805 = vpop.f32.mrb[0].mxu0
      %v3806 = vadd.f32 0.0, %v3805
      %v3807 = vpop.f32.mrb[0].mxu0
      %v3808 = vadd.f32 0.0, %v3807
      %3809 = vmatprep.mubr.bf16.mxu0 %v3065
      %3810 = vmatmul.mubr.bf16.gmra.mrb[0].mxu0 %v3001
      %v3811 = vpop.f32.mrb[0].mxu0
      %v3812 = vadd.f32 0.0, %v3811
      %v3813 = vpop.f32.mrb[0].mxu0
      %v3814 = vadd.f32 0.0, %v3813
      %v3815 = vpop.f32.mrb[0].mxu0
      %v3816 = vadd.f32 0.0, %v3815
      %v3817 = vpop.f32.mrb[0].mxu0
      %v3818 = vadd.f32 0.0, %v3817
      %3819 = vmatprep.mubr.bf16.mxu0 %v3069
      %3820 = vmatmul.mubr.bf16.gmra.mrb[0].mxu0 %v3005
      %v3821 = vpop.f32.mrb[0].mxu0
      %v3822 = vadd.f32 0.0, %v3821
      %v3823 = vpop.f32.mrb[0].mxu0
      %v3824 = vadd.f32 0.0, %v3823
      %v3825 = vpop.f32.mrb[0].mxu0
      %v3826 = vadd.f32 0.0, %v3825
      %v3827 = vpop.f32.mrb[0].mxu0
      %v3828 = vadd.f32 0.0, %v3827
      %3829 = vmatprep.mubr.bf16.mxu0 %v3073
      %3830 = vmatmul.mubr.bf16.gmra.mrb[0].mxu0 %v3009
      %v3831 = vpop.f32.mrb[0].mxu0
      %v3832 = vadd.f32 0.0, %v3831
      %v3833 = vpop.f32.mrb[0].mxu0
      %v3834 = vadd.f32 0.0, %v3833
      %v3835 = vpop.f32.mrb[0].mxu0
      %v3836 = vadd.f32 0.0, %v3835
      %v3837 = vpop.f32.mrb[0].mxu0
      %v3838 = vadd.f32 0.0, %v3837
      %3839 = vmatprep.mubr.bf16.mxu0 %v3077
      %3840 = vmatmul.mubr.bf16.gmra.mrb[0].mxu0 %v3013
      %v3841 = vpop.f32.mrb[0].mxu0
      %v3842 = vadd.f32 0.0, %v3841
      %v3843 = vpop.f32.mrb[0].mxu0
      %v3844 = vadd.f32 0.0, %v3843
      %v3845 = vpop.f32.mrb[0].mxu0
      %v3846 = vadd.f32 0.0, %v3845
      %v3847 = vpop.f32.mrb[0].mxu0
      %v3848 = vadd.f32 0.0, %v3847
      %3849 = vmatprep.mubr.bf16.mxu0 %v3081
      %3850 = vmatmul.mubr.bf16.gmra.mrb[0].mxu0 %v3017
      %v3851 = vpop.f32.mrb[0].mxu0
      %v3852 = vadd.f32 0.0, %v3851
      %v3853 = vpop.f32.mrb[0].mxu0
      %v3854 = vadd.f32 0.0, %v3853
      %v3855 = vpop.f32.mrb[0].mxu0
      %v3856 = vadd.f32 0.0, %v3855
      %v3857 = vpop.f32.mrb[0].mxu0
      %v3858 = vadd.f32 0.0, %v3857
      %3859 = vmatprep.mubr.bf16.mxu0 %v3085
      %3860 = vmatmul.mubr.bf16.gmra.mrb[0].mxu0 %v3021
      %v3861 = vpop.f32.mrb[0].mxu0
      %v3862 = vadd.f32 0.0, %v3861
      %v3863 = vpop.f32.mrb[0].mxu0
      %v3864 = vadd.f32 0.0, %v3863
      %v3865 = vpop.f32.mrb[0].mxu0
      %v3866 = vadd.f32 0.0, %v3865
      %v3867 = vpop.f32.mrb[0].mxu0
      %v3868 = vadd.f32 0.0, %v3867
      %3869 = vmatprep.mubr.bf16.mxu0 %v3089
      %3870 = vmatmul.mubr.bf16.gmra.mrb[0].mxu0 %v3025
      %v3871 = vpop.f32.mrb[0].mxu0
      %v3872 = vadd.f32 0.0, %v3871
      %v3873 = vpop.f32.mrb[0].mxu0
      %v3874 = vadd.f32 0.0, %v3873
      %v3875 = vpop.f32.mrb[0].mxu0
      %v3876 = vadd.f32 0.0, %v3875
      %v3877 = vpop.f32.mrb[0].mxu0
      %v3878 = vadd.f32 0.0, %v3877
      %3879 = vmatprep.mubr.bf16.mxu0 %v3093
      %3880 = vmatmul.mubr.bf16.gmra.mrb[0].mxu0 %v3029
      %v3881 = vpop.f32.mrb[0].mxu0
      %v3882 = vadd.f32 0.0, %v3881
      %v3883 = vpop.f32.mrb[0].mxu0
      %v3884 = vadd.f32 0.0, %v3883
      %v3885 = vpop.f32.mrb[0].mxu0
      %v3886 = vadd.f32 0.0, %v3885
      %v3887 = vpop.f32.mrb[0].mxu0
      %v3888 = vadd.f32 0.0, %v3887
      %3889 = vmatprep.mubr.bf16.mxu0 %v3097
      %3890 = vmatmul.mubr.bf16.gmra.mrb[0].mxu0 %v3033
      %v3891 = vpop.f32.mrb[0].mxu0
      %v3892 = vadd.f32 0.0, %v3891
      %v3893 = vpop.f32.mrb[0].mxu0
      %v3894 = vadd.f32 0.0, %v3893
      %v3895 = vpop.f32.mrb[0].mxu0
      %v3896 = vadd.f32 0.0, %v3895
      %v3897 = vpop.f32.mrb[0].mxu0
      %v3898 = vadd.f32 0.0, %v3897
      %3899 = vdwg.mxu0
      %3900 = vmatprep.subr.bf16.mxu0 %v3548
      %3901 = vmatpush1.bf16.msra.mxu0 %v3547
      %3902 = vmatprep.subr.bf16.mxu0 %v3550
      %3903 = vmatpush1.bf16.msra.mxu0 %v3549
      %3904 = vmatprep.subr.bf16.mxu0 %v3552
      %3905 = vmatpush1.bf16.msra.mxu0 %v3551
      %3906 = vmatprep.subr.bf16.mxu0 %v3554
      %3907 = vmatpush1.bf16.msra.mxu0 %v3553
      %3908 = vmatprep.subr.bf16.mxu0 %v3556
      %3909 = vmatpush1.bf16.msra.mxu0 %v3555
      %3910 = vmatprep.subr.bf16.mxu0 %v3558
      %3911 = vmatpush1.bf16.msra.mxu0 %v3557
      %3912 = vmatprep.subr.bf16.mxu0 %v3560
      %3913 = vmatpush1.bf16.msra.mxu0 %v3559
      %3914 = vmatprep.subr.bf16.mxu0 %v3562
      %3915 = vmatpush1.bf16.msra.mxu0 %v3561
      %3916 = vmatprep.subr.bf16.mxu0 %v3564
      %3917 = vmatpush1.bf16.msra.mxu0 %v3563
      %3918 = vmatprep.subr.bf16.mxu0 %v3566
      %3919 = vmatpush1.bf16.msra.mxu0 %v3565
      %3920 = vmatprep.subr.bf16.mxu0 %v3568
      %3921 = vmatpush1.bf16.msra.mxu0 %v3567
      %3922 = vmatprep.subr.bf16.mxu0 %v3570
      %3923 = vmatpush1.bf16.msra.mxu0 %v3569
      %3924 = vmatprep.subr.bf16.mxu0 %v3572
      %3925 = vmatpush1.bf16.msra.mxu0 %v3571
      %3926 = vmatprep.subr.bf16.mxu0 %v3574
      %3927 = vmatpush1.bf16.msra.mxu0 %v3573
      %3928 = vmatprep.subr.bf16.mxu0 %v3576
      %3929 = vmatpush1.bf16.msra.mxu0 %v3575
      %3930 = vmatprep.subr.bf16.mxu0 %v3578
      %3931 = vmatpush1.bf16.msra.mxu0 %v3577
      %3932 = vmatprep.mubr.bf16.mxu0 %v3165
      %3933 = vmatmul.mubr.bf16.gmra.mrb[0].mxu0 %v3101
      %v3934 = vpop.f32.mrb[0].mxu0
      %v3935 = vadd.f32 %v3742, %v3934
      %v3936 = vpop.f32.mrb[0].mxu0
      %v3937 = vadd.f32 %v3744, %v3936
      %v3938 = vpop.f32.mrb[0].mxu0
      %v3939 = vadd.f32 %v3746, %v3938
      %v3940 = vpop.f32.mrb[0].mxu0
      %v3941 = vadd.f32 %v3748, %v3940
      %3942 = vmatprep.mubr.bf16.mxu0 %v3169
      %3943 = vmatmul.mubr.bf16.gmra.mrb[0].mxu0 %v3105
      %v3944 = vpop.f32.mrb[0].mxu0
      %v3945 = vadd.f32 %v3752, %v3944
      %v3946 = vpop.f32.mrb[0].mxu0
      %v3947 = vadd.f32 %v3754, %v3946
      %v3948 = vpop.f32.mrb[0].mxu0
      %v3949 = vadd.f32 %v3756, %v3948
      %v3950 = vpop.f32.mrb[0].mxu0
      %v3951 = vadd.f32 %v3758, %v3950
      %3952 = vmatprep.mubr.bf16.mxu0 %v3173
      %3953 = vmatmul.mubr.bf16.gmra.mrb[0].mxu0 %v3109
      %v3954 = vpop.f32.mrb[0].mxu0
      %v3955 = vadd.f32 %v3762, %v3954
      %v3956 = vpop.f32.mrb[0].mxu0
      %v3957 = vadd.f32 %v3764, %v3956
      %v3958 = vpop.f32.mrb[0].mxu0
      %v3959 = vadd.f32 %v3766, %v3958
      %v3960 = vpop.f32.mrb[0].mxu0
      %v3961 = vadd.f32 %v3768, %v3960
      %3962 = vmatprep.mubr.bf16.mxu0 %v3177
      %3963 = vmatmul.mubr.bf16.gmra.mrb[0].mxu0 %v3113
      %v3964 = vpop.f32.mrb[0].mxu0
      %v3965 = vadd.f32 %v3772, %v3964
      %v3966 = vpop.f32.mrb[0].mxu0
      %v3967 = vadd.f32 %v3774, %v3966
      %v3968 = vpop.f32.mrb[0].mxu0
      %v3969 = vadd.f32 %v3776, %v3968
      %v3970 = vpop.f32.mrb[0].mxu0
      %v3971 = vadd.f32 %v3778, %v3970
      %3972 = vmatprep.mubr.bf16.mxu0 %v3181
      %3973 = vmatmul.mubr.bf16.gmra.mrb[0].mxu0 %v3117
      %v3974 = vpop.f32.mrb[0].mxu0
      %v3975 = vadd.f32 %v3782, %v3974
      %v3976 = vpop.f32.mrb[0].mxu0
      %v3977 = vadd.f32 %v3784, %v3976
      %v3978 = vpop.f32.mrb[0].mxu0
      %v3979 = vadd.f32 %v3786, %v3978
      %v3980 = vpop.f32.mrb[0].mxu0
      %v3981 = vadd.f32 %v3788, %v3980
      %3982 = vmatprep.mubr.bf16.mxu0 %v3185
      %3983 = vmatmul.mubr.bf16.gmra.mrb[0].mxu0 %v3121
      %v3984 = vpop.f32.mrb[0].mxu0
      %v3985 = vadd.f32 %v3792, %v3984
      %v3986 = vpop.f32.mrb[0].mxu0
      %v3987 = vadd.f32 %v3794, %v3986
      %v3988 = vpop.f32.mrb[0].mxu0
      %v3989 = vadd.f32 %v3796, %v3988
      %v3990 = vpop.f32.mrb[0].mxu0
      %v3991 = vadd.f32 %v3798, %v3990
      %3992 = vmatprep.mubr.bf16.mxu0 %v3189
      %3993 = vmatmul.mubr.bf16.gmra.mrb[0].mxu0 %v3125
      %v3994 = vpop.f32.mrb[0].mxu0
      %v3995 = vadd.f32 %v3802, %v3994
      %v3996 = vpop.f32.mrb[0].mxu0
      %v3997 = vadd.f32 %v3804, %v3996
      %v3998 = vpop.f32.mrb[0].mxu0
      %v3999 = vadd.f32 %v3806, %v3998
      %v4000 = vpop.f32.mrb[0].mxu0
      %v4001 = vadd.f32 %v3808, %v4000
      %4002 = vmatprep.mubr.bf16.mxu0 %v3193
      %4003 = vmatmul.mubr.bf16.gmra.mrb[0].mxu0 %v3129
      %v4004 = vpop.f32.mrb[0].mxu0
      %v4005 = vadd.f32 %v3812, %v4004
      %v4006 = vpop.f32.mrb[0].mxu0
      %v4007 = vadd.f32 %v3814, %v4006
      %v4008 = vpop.f32.mrb[0].mxu0
      %v4009 = vadd.f32 %v3816, %v4008
      %v4010 = vpop.f32.mrb[0].mxu0
      %v4011 = vadd.f32 %v3818, %v4010
      %4012 = vmatprep.mubr.bf16.mxu0 %v3197
      %4013 = vmatmul.mubr.bf16.gmra.mrb[0].mxu0 %v3133
      %v4014 = vpop.f32.mrb[0].mxu0
      %v4015 = vadd.f32 %v3822, %v4014
      %v4016 = vpop.f32.mrb[0].mxu0
      %v4017 = vadd.f32 %v3824, %v4016
      %v4018 = vpop.f32.mrb[0].mxu0
      %v4019 = vadd.f32 %v3826, %v4018
      %v4020 = vpop.f32.mrb[0].mxu0
      %v4021 = vadd.f32 %v3828, %v4020
      %4022 = vmatprep.mubr.bf16.mxu0 %v3201
      %4023 = vmatmul.mubr.bf16.gmra.mrb[0].mxu0 %v3137
      %v4024 = vpop.f32.mrb[0].mxu0
      %v4025 = vadd.f32 %v3832, %v4024
      %v4026 = vpop.f32.mrb[0].mxu0
      %v4027 = vadd.f32 %v3834, %v4026
      %v4028 = vpop.f32.mrb[0].mxu0
      %v4029 = vadd.f32 %v3836, %v4028
      %v4030 = vpop.f32.mrb[0].mxu0
      %v4031 = vadd.f32 %v3838, %v4030
      %4032 = vmatprep.mubr.bf16.mxu0 %v3205
      %4033 = vmatmul.mubr.bf16.gmra.mrb[0].mxu0 %v3141
      %v4034 = vpop.f32.mrb[0].mxu0
      %v4035 = vadd.f32 %v3842, %v4034
      %v4036 = vpop.f32.mrb[0].mxu0
      %v4037 = vadd.f32 %v3844, %v4036
      %v4038 = vpop.f32.mrb[0].mxu0
      %v4039 = vadd.f32 %v3846, %v4038
      %v4040 = vpop.f32.mrb[0].mxu0
      %v4041 = vadd.f32 %v3848, %v4040
      %4042 = vmatprep.mubr.bf16.mxu0 %v3209
      %4043 = vmatmul.mubr.bf16.gmra.mrb[0].mxu0 %v3145
      %v4044 = vpop.f32.mrb[0].mxu0
      %v4045 = vadd.f32 %v3852, %v4044
      %v4046 = vpop.f32.mrb[0].mxu0
      %v4047 = vadd.f32 %v3854, %v4046
      %v4048 = vpop.f32.mrb[0].mxu0
      %v4049 = vadd.f32 %v3856, %v4048
      %v4050 = vpop.f32.mrb[0].mxu0
      %v4051 = vadd.f32 %v3858, %v4050
      %4052 = vmatprep.mubr.bf16.mxu0 %v3213
      %4053 = vmatmul.mubr.bf16.gmra.mrb[0].mxu0 %v3149
      %v4054 = vpop.f32.mrb[0].mxu0
      %v4055 = vadd.f32 %v3862, %v4054
      %v4056 = vpop.f32.mrb[0].mxu0
      %v4057 = vadd.f32 %v3864, %v4056
      %v4058 = vpop.f32.mrb[0].mxu0
      %v4059 = vadd.f32 %v3866, %v4058
      %v4060 = vpop.f32.mrb[0].mxu0
      %v4061 = vadd.f32 %v3868, %v4060
      %4062 = vmatprep.mubr.bf16.mxu0 %v3217
      %4063 = vmatmul.mubr.bf16.gmra.mrb[0].mxu0 %v3153
      %v4064 = vpop.f32.mrb[0].mxu0
      %v4065 = vadd.f32 %v3872, %v4064
      %v4066 = vpop.f32.mrb[0].mxu0
      %v4067 = vadd.f32 %v3874, %v4066
      %v4068 = vpop.f32.mrb[0].mxu0
      %v4069 = vadd.f32 %v3876, %v4068
      %v4070 = vpop.f32.mrb[0].mxu0
      %v4071 = vadd.f32 %v3878, %v4070
      %4072 = vmatprep.mubr.bf16.mxu0 %v3221
      %4073 = vmatmul.mubr.bf16.gmra.mrb[0].mxu0 %v3157
      %v4074 = vpop.f32.mrb[0].mxu0
      %v4075 = vadd.f32 %v3882, %v4074
      %v4076 = vpop.f32.mrb[0].mxu0
      %v4077 = vadd.f32 %v3884, %v4076
      %v4078 = vpop.f32.mrb[0].mxu0
      %v4079 = vadd.f32 %v3886, %v4078
      %v4080 = vpop.f32.mrb[0].mxu0
      %v4081 = vadd.f32 %v3888, %v4080
      %4082 = vmatprep.mubr.bf16.mxu0 %v3225
      %4083 = vmatmul.mubr.bf16.gmra.mrb[0].mxu0 %v3161
      %v4084 = vpop.f32.mrb[0].mxu0
      %v4085 = vadd.f32 %v3892, %v4084
      %v4086 = vpop.f32.mrb[0].mxu0
      %v4087 = vadd.f32 %v3894, %v4086
      %v4088 = vpop.f32.mrb[0].mxu0
      %v4089 = vadd.f32 %v3896, %v4088
      %v4090 = vpop.f32.mrb[0].mxu0
      %v4091 = vadd.f32 %v3898, %v4090
      %4092 = vdwg.mxu0
      %4093 = vmatprep.subr.bf16.mxu0 %v3580
      %4094 = vmatpush1.bf16.msra.mxu0 %v3579
      %4095 = vmatprep.subr.bf16.mxu0 %v3582
      %4096 = vmatpush1.bf16.msra.mxu0 %v3581
      %4097 = vmatprep.subr.bf16.mxu0 %v3584
      %4098 = vmatpush1.bf16.msra.mxu0 %v3583
      %4099 = vmatprep.subr.bf16.mxu0 %v3586
      %4100 = vmatpush1.bf16.msra.mxu0 %v3585
      %4101 = vmatprep.subr.bf16.mxu0 0
      %4102 = vmatpush1.bf16.msra.mxu0 0
      %4103 = vmatprep.subr.bf16.mxu0 0
      %4104 = vmatpush1.bf16.msra.mxu0 0
      %4105 = vmatprep.subr.bf16.mxu0 0
      %4106 = vmatpush1.bf16.msra.mxu0 0
      %4107 = vmatprep.subr.bf16.mxu0 0
      %4108 = vmatpush1.bf16.msra.mxu0 0
      %4109 = vmatprep.subr.bf16.mxu0 0
      %4110 = vmatpush1.bf16.msra.mxu0 0
      %4111 = vmatprep.subr.bf16.mxu0 0
      %4112 = vmatpush1.bf16.msra.mxu0 0
      %4113 = vmatprep.subr.bf16.mxu0 0
      %4114 = vmatpush1.bf16.msra.mxu0 0
      %4115 = vmatprep.subr.bf16.mxu0 0
      %4116 = vmatpush1.bf16.msra.mxu0 0
      %4117 = vmatprep.subr.bf16.mxu0 0
      %4118 = vmatpush1.bf16.msra.mxu0 0
      %4119 = vmatprep.subr.bf16.mxu0 0
      %4120 = vmatpush1.bf16.msra.mxu0 0
      %4121 = vmatprep.subr.bf16.mxu0 0
      %4122 = vmatpush1.bf16.msra.mxu0 0
      %4123 = vmatprep.subr.bf16.mxu0 0
      %4124 = vmatpush1.bf16.msra.mxu0 0
      %4125 = vmatprep.mubr.bf16.mxu0 0
      %4126 = vmatmul.mubr.bf16.gmra.mrb[0].mxu0 %v3660
      %v4127 = vpop.f32.mrb[0].mxu0
      %v4128 = vadd.f32 %v3935, %v4127
      %v4129 = vpop.f32.mrb[0].mxu0
      %v4130 = vadd.f32 %v3937, %v4129
      %v4131 = vpop.f32.mrb[0].mxu0
      %v4132 = vadd.f32 %v3939, %v4131
      %v4133 = vpop.f32.mrb[0].mxu0
      %v4134 = vadd.f32 %v3941, %v4133
      %4135 = vmatprep.mubr.bf16.mxu0 0
      %4136 = vmatmul.mubr.bf16.gmra.mrb[0].mxu0 %v3663
      %v4137 = vpop.f32.mrb[0].mxu0
      %v4138 = vadd.f32 %v3945, %v4137
      %v4139 = vpop.f32.mrb[0].mxu0
      %v4140 = vadd.f32 %v3947, %v4139
      %v4141 = vpop.f32.mrb[0].mxu0
      %v4142 = vadd.f32 %v3949, %v4141
      %v4143 = vpop.f32.mrb[0].mxu0
      %v4144 = vadd.f32 %v3951, %v4143
      %4145 = vmatprep.mubr.bf16.mxu0 0
      %4146 = vmatmul.mubr.bf16.gmra.mrb[0].mxu0 %v3666
      %v4147 = vpop.f32.mrb[0].mxu0
      %v4148 = vadd.f32 %v3955, %v4147
      %v4149 = vpop.f32.mrb[0].mxu0
      %v4150 = vadd.f32 %v3957, %v4149
      %v4151 = vpop.f32.mrb[0].mxu0
      %v4152 = vadd.f32 %v3959, %v4151
      %v4153 = vpop.f32.mrb[0].mxu0
      %v4154 = vadd.f32 %v3961, %v4153
      %4155 = vmatprep.mubr.bf16.mxu0 0
      %4156 = vmatmul.mubr.bf16.gmra.mrb[0].mxu0 %v3669
      %v4157 = vpop.f32.mrb[0].mxu0
      %v4158 = vadd.f32 %v3965, %v4157
      %v4159 = vpop.f32.mrb[0].mxu0
      %v4160 = vadd.f32 %v3967, %v4159
      %v4161 = vpop.f32.mrb[0].mxu0
      %v4162 = vadd.f32 %v3969, %v4161
      %v4163 = vpop.f32.mrb[0].mxu0
      %v4164 = vadd.f32 %v3971, %v4163
      %4165 = vmatprep.mubr.bf16.mxu0 0
      %4166 = vmatmul.mubr.bf16.gmra.mrb[0].mxu0 %v3672
      %v4167 = vpop.f32.mrb[0].mxu0
      %v4168 = vadd.f32 %v3975, %v4167
      %v4169 = vpop.f32.mrb[0].mxu0
      %v4170 = vadd.f32 %v3977, %v4169
      %v4171 = vpop.f32.mrb[0].mxu0
      %v4172 = vadd.f32 %v3979, %v4171
      %v4173 = vpop.f32.mrb[0].mxu0
      %v4174 = vadd.f32 %v3981, %v4173
      %4175 = vmatprep.mubr.bf16.mxu0 0
      %4176 = vmatmul.mubr.bf16.gmra.mrb[0].mxu0 %v3675
      %v4177 = vpop.f32.mrb[0].mxu0
      %v4178 = vadd.f32 %v3985, %v4177
      %v4179 = vpop.f32.mrb[0].mxu0
      %v4180 = vadd.f32 %v3987, %v4179
      %v4181 = vpop.f32.mrb[0].mxu0
      %v4182 = vadd.f32 %v3989, %v4181
      %v4183 = vpop.f32.mrb[0].mxu0
      %v4184 = vadd.f32 %v3991, %v4183
      %4185 = vmatprep.mubr.bf16.mxu0 0
      %4186 = vmatmul.mubr.bf16.gmra.mrb[0].mxu0 %v3678
      %v4187 = vpop.f32.mrb[0].mxu0
      %v4188 = vadd.f32 %v3995, %v4187
      %v4189 = vpop.f32.mrb[0].mxu0
      %v4190 = vadd.f32 %v3997, %v4189
      %v4191 = vpop.f32.mrb[0].mxu0
      %v4192 = vadd.f32 %v3999, %v4191
      %v4193 = vpop.f32.mrb[0].mxu0
      %v4194 = vadd.f32 %v4001, %v4193
      %4195 = vmatprep.mubr.bf16.mxu0 0
      %4196 = vmatmul.mubr.bf16.gmra.mrb[0].mxu0 %v3681
      %v4197 = vpop.f32.mrb[0].mxu0
      %v4198 = vadd.f32 %v4005, %v4197
      %v4199 = vpop.f32.mrb[0].mxu0
      %v4200 = vadd.f32 %v4007, %v4199
      %v4201 = vpop.f32.mrb[0].mxu0
      %v4202 = vadd.f32 %v4009, %v4201
      %v4203 = vpop.f32.mrb[0].mxu0
      %v4204 = vadd.f32 %v4011, %v4203
      %4205 = vmatprep.mubr.bf16.mxu0 0
      %4206 = vmatmul.mubr.bf16.gmra.mrb[0].mxu0 %v3684
      %v4207 = vpop.f32.mrb[0].mxu0
      %v4208 = vadd.f32 %v4015, %v4207
      %v4209 = vpop.f32.mrb[0].mxu0
      %v4210 = vadd.f32 %v4017, %v4209
      %v4211 = vpop.f32.mrb[0].mxu0
      %v4212 = vadd.f32 %v4019, %v4211
      %v4213 = vpop.f32.mrb[0].mxu0
      %v4214 = vadd.f32 %v4021, %v4213
      %4215 = vmatprep.mubr.bf16.mxu0 0
      %4216 = vmatmul.mubr.bf16.gmra.mrb[0].mxu0 %v3687
      %v4217 = vpop.f32.mrb[0].mxu0
      %v4218 = vadd.f32 %v4025, %v4217
      %v4219 = vpop.f32.mrb[0].mxu0
      %v4220 = vadd.f32 %v4027, %v4219
      %v4221 = vpop.f32.mrb[0].mxu0
      %v4222 = vadd.f32 %v4029, %v4221
      %v4223 = vpop.f32.mrb[0].mxu0
      %v4224 = vadd.f32 %v4031, %v4223
      %4225 = vmatprep.mubr.bf16.mxu0 0
      %4226 = vmatmul.mubr.bf16.gmra.mrb[0].mxu0 %v3690
      %v4227 = vpop.f32.mrb[0].mxu0
      %v4228 = vadd.f32 %v4035, %v4227
      %v4229 = vpop.f32.mrb[0].mxu0
      %v4230 = vadd.f32 %v4037, %v4229
      %v4231 = vpop.f32.mrb[0].mxu0
      %v4232 = vadd.f32 %v4039, %v4231
      %v4233 = vpop.f32.mrb[0].mxu0
      %v4234 = vadd.f32 %v4041, %v4233
      %4235 = vmatprep.mubr.bf16.mxu0 0
      %4236 = vmatmul.mubr.bf16.gmra.mrb[0].mxu0 %v3693
      %v4237 = vpop.f32.mrb[0].mxu0
      %v4238 = vadd.f32 %v4045, %v4237
      %v4239 = vpop.f32.mrb[0].mxu0
      %v4240 = vadd.f32 %v4047, %v4239
      %v4241 = vpop.f32.mrb[0].mxu0
      %v4242 = vadd.f32 %v4049, %v4241
      %v4243 = vpop.f32.mrb[0].mxu0
      %v4244 = vadd.f32 %v4051, %v4243
      %4245 = vmatprep.mubr.bf16.mxu0 0
      %4246 = vmatmul.mubr.bf16.gmra.mrb[0].mxu0 %v3696
      %v4247 = vpop.f32.mrb[0].mxu0
      %v4248 = vadd.f32 %v4055, %v4247
      %v4249 = vpop.f32.mrb[0].mxu0
      %v4250 = vadd.f32 %v4057, %v4249
      %v4251 = vpop.f32.mrb[0].mxu0
      %v4252 = vadd.f32 %v4059, %v4251
      %v4253 = vpop.f32.mrb[0].mxu0
      %v4254 = vadd.f32 %v4061, %v4253
      %4255 = vmatprep.mubr.bf16.mxu0 0
      %4256 = vmatmul.mubr.bf16.gmra.mrb[0].mxu0 %v3699
      %v4257 = vpop.f32.mrb[0].mxu0
      %v4258 = vadd.f32 %v4065, %v4257
      %v4259 = vpop.f32.mrb[0].mxu0
      %v4260 = vadd.f32 %v4067, %v4259
      %v4261 = vpop.f32.mrb[0].mxu0
      %v4262 = vadd.f32 %v4069, %v4261
      %v4263 = vpop.f32.mrb[0].mxu0
      %v4264 = vadd.f32 %v4071, %v4263
      %4265 = vmatprep.mubr.bf16.mxu0 0
      %4266 = vmatmul.mubr.bf16.gmra.mrb[0].mxu0 %v3702
      %v4267 = vpop.f32.mrb[0].mxu0
      %v4268 = vadd.f32 %v4075, %v4267
      %v4269 = vpop.f32.mrb[0].mxu0
      %v4270 = vadd.f32 %v4077, %v4269
      %v4271 = vpop.f32.mrb[0].mxu0
      %v4272 = vadd.f32 %v4079, %v4271
      %v4273 = vpop.f32.mrb[0].mxu0
      %v4274 = vadd.f32 %v4081, %v4273
      %4275 = vmatprep.mubr.bf16.mxu0 0
      %4276 = vmatmul.mubr.bf16.gmra.mrb[0].mxu0 %v3705
      %v4277 = vpop.f32.mrb[0].mxu0
      %v4278 = vadd.f32 %v4085, %v4277
      %v4279 = vpop.f32.mrb[0].mxu0
      %v4280 = vadd.f32 %v4087, %v4279
      %v4281 = vpop.f32.mrb[0].mxu0
      %v4282 = vadd.f32 %v4089, %v4281
      %v4283 = vpop.f32.mrb[0].mxu0
      %v4284 = vadd.f32 %v4091, %v4283
      %4285 = vdwg.mxu0
      %v4286 = vpack.c.bf16 %v4132, %v4128
      %v4287 = vpack.c.bf16 %v4134, %v4130
      %v4288 = vpack.c.bf16 %v4142, %v4138
      %v4289 = vpack.c.bf16 %v4144, %v4140
      %v4290 = vpack.c.bf16 %v4152, %v4148
      %v4291 = vpack.c.bf16 %v4154, %v4150
      %v4292 = vpack.c.bf16 %v4162, %v4158
      %v4293 = vpack.c.bf16 %v4164, %v4160
      %v4294 = vpack.c.bf16 %v4172, %v4168
      %v4295 = vpack.c.bf16 %v4174, %v4170
      %v4296 = vpack.c.bf16 %v4182, %v4178
      %v4297 = vpack.c.bf16 %v4184, %v4180
      %v4298 = vpack.c.bf16 %v4192, %v4188
      %v4299 = vpack.c.bf16 %v4194, %v4190
      %v4300 = vpack.c.bf16 %v4202, %v4198
      %v4301 = vpack.c.bf16 %v4204, %v4200
      %v4302 = vpack.c.bf16 %v4212, %v4208
      %v4303 = vpack.c.bf16 %v4214, %v4210
      %v4304 = vpack.c.bf16 %v4222, %v4218
      %v4305 = vpack.c.bf16 %v4224, %v4220
      %v4306 = vpack.c.bf16 %v4232, %v4228
      %v4307 = vpack.c.bf16 %v4234, %v4230
      %v4308 = vpack.c.bf16 %v4242, %v4238
      %v4309 = vpack.c.bf16 %v4244, %v4240
      %v4310 = vpack.c.bf16 %v4252, %v4248
      %v4311 = vpack.c.bf16 %v4254, %v4250
      %v4312 = vpack.c.bf16 %v4262, %v4258
      %v4313 = vpack.c.bf16 %v4264, %v4260
      %v4314 = vpack.c.bf16 %v4272, %v4268
      %v4315 = vpack.c.bf16 %v4274, %v4270
      %v4316 = vpack.c.bf16 %v4282, %v4278
      %v4317 = vpack.c.bf16 %v4284, %v4280
      %v4350 = vunpack.c.l.b16 %v4286
      %v4351 = vunpack.c.l.b16 %v4287
      %v4352 = vunpack.c.h.b16 %v4286
      %v4353 = vunpack.c.h.b16 %v4287
      %v4354 = vunpack.c.l.b16 %v4288
      %v4355 = vunpack.c.l.b16 %v4289
      %v4356 = vunpack.c.h.b16 %v4288
      %v4357 = vunpack.c.h.b16 %v4289
      %v4358 = vunpack.c.l.b16 %v4290
      %v4359 = vunpack.c.l.b16 %v4291
      %v4360 = vunpack.c.h.b16 %v4290
      %v4361 = vunpack.c.h.b16 %v4291
      %v4362 = vunpack.c.l.b16 %v4292
      %v4363 = vunpack.c.l.b16 %v4293
      %v4364 = vunpack.c.h.b16 %v4292
      %v4365 = vunpack.c.h.b16 %v4293
      %v4366 = vunpack.c.l.b16 %v4294
      %v4367 = vunpack.c.l.b16 %v4295
      %v4368 = vunpack.c.h.b16 %v4294
      %v4369 = vunpack.c.h.b16 %v4295
      %v4370 = vunpack.c.l.b16 %v4296
      %v4371 = vunpack.c.l.b16 %v4297
      %v4372 = vunpack.c.h.b16 %v4296
      %v4373 = vunpack.c.h.b16 %v4297
      %v4374 = vunpack.c.l.b16 %v4298
      %v4375 = vunpack.c.l.b16 %v4299
      %v4376 = vunpack.c.h.b16 %v4298
      %v4377 = vunpack.c.h.b16 %v4299
      %v4378 = vunpack.c.l.b16 %v4300
      %v4379 = vunpack.c.l.b16 %v4301
      %v4380 = vunpack.c.h.b16 %v4300
      %v4381 = vunpack.c.h.b16 %v4301
      %v4382 = vunpack.c.l.b16 %v4302
      %v4383 = vunpack.c.l.b16 %v4303
      %v4384 = vunpack.c.h.b16 %v4302
      %v4385 = vunpack.c.h.b16 %v4303
      %v4386 = vunpack.c.l.b16 %v4304
      %v4387 = vunpack.c.l.b16 %v4305
      %v4388 = vunpack.c.h.b16 %v4304
      %v4389 = vunpack.c.h.b16 %v4305
      %v4390 = vunpack.c.l.b16 %v4306
      %v4391 = vunpack.c.l.b16 %v4307
      %v4392 = vunpack.c.h.b16 %v4306
      %v4393 = vunpack.c.h.b16 %v4307
      %v4394 = vunpack.c.l.b16 %v4308
      %v4395 = vunpack.c.l.b16 %v4309
      %v4396 = vunpack.c.h.b16 %v4308
      %v4397 = vunpack.c.h.b16 %v4309
      %v4398 = vunpack.c.l.b16 %v4310
      %v4399 = vunpack.c.l.b16 %v4311
      %v4400 = vunpack.c.h.b16 %v4310
      %v4401 = vunpack.c.h.b16 %v4311
      %v4402 = vunpack.c.l.b16 %v4312
      %v4403 = vunpack.c.l.b16 %v4313
      %v4404 = vunpack.c.h.b16 %v4312
      %v4405 = vunpack.c.h.b16 %v4313
      %v4406 = vunpack.c.l.b16 %v4314
      %v4407 = vunpack.c.l.b16 %v4315
      %v4408 = vunpack.c.h.b16 %v4314
      %v4409 = vunpack.c.h.b16 %v4315
      %v4410 = vunpack.c.l.b16 %v4316
      %v4411 = vunpack.c.l.b16 %v4317
      %v4412 = vunpack.c.h.b16 %v4316
      %v4413 = vunpack.c.h.b16 %v4317
      %v4414 = vpack.c.b16 %v4351, %v4350
      %v4415 = vpack.c.b16 %v4353, %v4352
      %v4416 = vpack.c.b16 %v4355, %v4354
      %v4417 = vpack.c.b16 %v4357, %v4356
      %v4418 = vpack.c.b16 %v4359, %v4358
      %v4419 = vpack.c.b16 %v4361, %v4360
      %v4420 = vpack.c.b16 %v4363, %v4362
      %v4421 = vpack.c.b16 %v4365, %v4364
      %v4422 = vpack.c.b16 %v4367, %v4366
      %v4423 = vpack.c.b16 %v4369, %v4368
      %v4424 = vpack.c.b16 %v4371, %v4370
      %v4425 = vpack.c.b16 %v4373, %v4372
      %v4426 = vpack.c.b16 %v4375, %v4374
      %v4427 = vpack.c.b16 %v4377, %v4376
      %v4428 = vpack.c.b16 %v4379, %v4378
      %v4429 = vpack.c.b16 %v4381, %v4380
      %v4430 = vpack.c.b16 %v4383, %v4382
      %v4431 = vpack.c.b16 %v4385, %v4384
      %v4432 = vpack.c.b16 %v4387, %v4386
      %v4433 = vpack.c.b16 %v4389, %v4388
      %v4434 = vpack.c.b16 %v4391, %v4390
      %v4435 = vpack.c.b16 %v4393, %v4392
      %v4436 = vpack.c.b16 %v4395, %v4394
      %v4437 = vpack.c.b16 %v4397, %v4396
      %v4438 = vpack.c.b16 %v4399, %v4398
      %v4439 = vpack.c.b16 %v4401, %v4400
      %v4440 = vpack.c.b16 %v4403, %v4402
      %v4441 = vpack.c.b16 %v4405, %v4404
      %v4442 = vpack.c.b16 %v4407, %v4406
      %v4443 = vpack.c.b16 %v4409, %v4408
      %v4444 = vpack.c.b16 %v4411, %v4410
      %v4445 = vpack.c.b16 %v4413, %v4412
      %vm4478 = vcmask 1043456
      %vm4479 = vcmask 523268
      %vm4480 = vmor %vm4479, %vm4478
      %4481 = vst.msk [vmem:[%s407] sm:$0xff] %vm4480, %v4414
      %4482 = vst.msk [vmem:[%s407 + $0x8] sm:$0xff] %vm4480, %v4415
      %4483 = vst.msk [vmem:[%s407 + $0x10] sm:$0xff] %vm4480, %v4416
      %4484 = vst.msk [vmem:[%s407 + $0x18] sm:$0xff] %vm4480, %v4417
      %4485 = vst.msk [vmem:[%s407 + $0x20] sm:$0xff] %vm4480, %v4418
      %4486 = vst.msk [vmem:[%s407 + $0x28] sm:$0xff] %vm4480, %v4419
      %4487 = vst.msk [vmem:[%s407 + $0x30] sm:$0xff] %vm4480, %v4420
      %4488 = vst.msk [vmem:[%s407 + $0x38] sm:$0xff] %vm4480, %v4421
      %4489 = vst.msk [vmem:[%s407 + $0x40] sm:$0xff] %vm4480, %v4422
      %4490 = vst.msk [vmem:[%s407 + $0x48] sm:$0xff] %vm4480, %v4423
      %4491 = vst.msk [vmem:[%s407 + $0x50] sm:$0xff] %vm4480, %v4424
      %4492 = vst.msk [vmem:[%s407 + $0x58] sm:$0xff] %vm4480, %v4425
      %4493 = vst.msk [vmem:[%s407 + $0x60] sm:$0xff] %vm4480, %v4426
      %4494 = vst.msk [vmem:[%s407 + $0x68] sm:$0xff] %vm4480, %v4427
      %4495 = vst.msk [vmem:[%s407 + $0x70] sm:$0xff] %vm4480, %v4428
      %4496 = vst.msk [vmem:[%s407 + $0x78] sm:$0xff] %vm4480, %v4429
      %4497 = vst.msk [vmem:[%s407 + $0x80] sm:$0xff] %vm4480, %v4430
      %4498 = vst.msk [vmem:[%s407 + $0x88] sm:$0xff] %vm4480, %v4431
      %4499 = vst.msk [vmem:[%s407 + $0x90] sm:$0xff] %vm4480, %v4432
      %4500 = vst.msk [vmem:[%s407 + $0x98] sm:$0xff] %vm4480, %v4433
      %4501 = vst.msk [vmem:[%s407 + $0xa0] sm:$0xff] %vm4480, %v4434
      %4502 = vst.msk [vmem:[%s407 + $0xa8] sm:$0xff] %vm4480, %v4435
      %4503 = vst.msk [vmem:[%s407 + $0xb0] sm:$0xff] %vm4480, %v4436
      %4504 = vst.msk [vmem:[%s407 + $0xb8] sm:$0xff] %vm4480, %v4437
      %4505 = vst.msk [vmem:[%s407 + $0xc0] sm:$0xff] %vm4480, %v4438
      %4506 = vst.msk [vmem:[%s407 + $0xc8] sm:$0xff] %vm4480, %v4439
      %4507 = vst.msk [vmem:[%s407 + $0xd0] sm:$0xff] %vm4480, %v4440
      %4508 = vst.msk [vmem:[%s407 + $0xd8] sm:$0xff] %vm4480, %v4441
      %4509 = vst.msk [vmem:[%s407 + $0xe0] sm:$0xff] %vm4480, %v4442
      %4510 = vst.msk [vmem:[%s407 + $0xe8] sm:$0xff] %vm4480, %v4443
      %4511 = vst.msk [vmem:[%s407 + $0xf0] sm:$0xff] %vm4480, %v4444
      %4512 = vst.msk [vmem:[%s407 + $0xf8] sm:$0xff] %vm4480, %v4445
      %v4513 = vadd.f32 %v4128, %v4132
      %v4514 = vadd.f32 %v4513, %v4138
      %v4515 = vadd.f32 %v4514, %v4142
      %v4516 = vadd.f32 %v4515, %v4148
      %v4517 = vadd.f32 %v4516, %v4152
      %v4518 = vadd.f32 %v4517, %v4158
      %v4519 = vadd.f32 %v4518, %v4162
      %v4520 = vadd.f32 %v4519, %v4168
      %v4521 = vadd.f32 %v4520, %v4172
      %v4522 = vadd.f32 %v4521, %v4178
      %v4523 = vadd.f32 %v4522, %v4182
      %v4524 = vadd.f32 %v4523, %v4188
      %v4525 = vadd.f32 %v4524, %v4192
      %v4526 = vadd.f32 %v4525, %v4198
      %v4527 = vadd.f32 %v4526, %v4202
      %v4528 = vadd.f32 %v4527, %v4208
      %v4529 = vadd.f32 %v4528, %v4212
      %v4530 = vadd.f32 %v4529, %v4218
      %v4531 = vadd.f32 %v4530, %v4222
      %v4532 = vadd.f32 %v4531, %v4228
      %v4533 = vadd.f32 %v4532, %v4232
      %v4534 = vadd.f32 %v4533, %v4238
      %v4535 = vadd.f32 %v4534, %v4242
      %v4536 = vadd.f32 %v4535, %v4248
      %v4537 = vadd.f32 %v4536, %v4252
      %v4538 = vadd.f32 %v4537, %v4258
      %v4539 = vadd.f32 %v4538, %v4262
      %v4540 = vadd.f32 %v4539, %v4268
      %v4541 = vadd.f32 %v4540, %v4272
      %v4542 = vadd.f32 %v4541, %v4278
      %v4543 = vadd.f32 %v4542, %v4282
      %v4544 = vrot.slane %v4543, 4
      %v4545 = vadd.f32 %v4543, %v4544
      %v4546 = vrot.slane %v4545, 2
      %v4547 = vadd.f32 %v4545, %v4546
      %v4548 = vrot.slane %v4547, 1
      %v4549 = vadd.f32 %v4547, %v4548
      %v4550 = vsel %vm2970, %v4130, 0.0
      %v4551 = vsel %vm2970, %v4134, 0.0
      %v4552 = vadd.f32 %v4550, %v4551
      %v4553 = vsel %vm2970, %v4140, 0.0
      %v4554 = vadd.f32 %v4552, %v4553
      %v4555 = vsel %vm2970, %v4144, 0.0
      %v4556 = vadd.f32 %v4554, %v4555
      %v4557 = vsel %vm2970, %v4150, 0.0
      %v4558 = vadd.f32 %v4556, %v4557
      %v4559 = vsel %vm2970, %v4154, 0.0
      %v4560 = vadd.f32 %v4558, %v4559
      %v4561 = vsel %vm2970, %v4160, 0.0
      %v4562 = vadd.f32 %v4560, %v4561
      %v4563 = vsel %vm2970, %v4164, 0.0
      %v4564 = vadd.f32 %v4562, %v4563
      %v4565 = vsel %vm2970, %v4170, 0.0
      %v4566 = vadd.f32 %v4564, %v4565
      %v4567 = vsel %vm2970, %v4174, 0.0
      %v4568 = vadd.f32 %v4566, %v4567
      %v4569 = vsel %vm2970, %v4180, 0.0
      %v4570 = vadd.f32 %v4568, %v4569
      %v4571 = vsel %vm2970, %v4184, 0.0
      %v4572 = vadd.f32 %v4570, %v4571
      %v4573 = vsel %vm2970, %v4190, 0.0
      %v4574 = vadd.f32 %v4572, %v4573
      %v4575 = vsel %vm2970, %v4194, 0.0
      %v4576 = vadd.f32 %v4574, %v4575
      %v4577 = vsel %vm2970, %v4200, 0.0
      %v4578 = vadd.f32 %v4576, %v4577
      %v4579 = vsel %vm2970, %v4204, 0.0
      %v4580 = vadd.f32 %v4578, %v4579
      %v4581 = vsel %vm2970, %v4210, 0.0
      %v4582 = vadd.f32 %v4580, %v4581
      %v4583 = vsel %vm2970, %v4214, 0.0
      %v4584 = vadd.f32 %v4582, %v4583
      %v4585 = vsel %vm2970, %v4220, 0.0
      %v4586 = vadd.f32 %v4584, %v4585
      %v4587 = vsel %vm2970, %v4224, 0.0
      %v4588 = vadd.f32 %v4586, %v4587
      %v4589 = vsel %vm2970, %v4230, 0.0
      %v4590 = vadd.f32 %v4588, %v4589
      %v4591 = vsel %vm2970, %v4234, 0.0
      %v4592 = vadd.f32 %v4590, %v4591
      %v4593 = vsel %vm2970, %v4240, 0.0
      %v4594 = vadd.f32 %v4592, %v4593
      %v4595 = vsel %vm2970, %v4244, 0.0
      %v4596 = vadd.f32 %v4594, %v4595
      %v4597 = vsel %vm2970, %v4250, 0.0
      %v4598 = vadd.f32 %v4596, %v4597
      %v4599 = vsel %vm2970, %v4254, 0.0
      %v4600 = vadd.f32 %v4598, %v4599
      %v4601 = vsel %vm2970, %v4260, 0.0
      %v4602 = vadd.f32 %v4600, %v4601
      %v4603 = vsel %vm2970, %v4264, 0.0
      %v4604 = vadd.f32 %v4602, %v4603
      %v4605 = vsel %vm2970, %v4270, 0.0
      %v4606 = vadd.f32 %v4604, %v4605
      %v4607 = vsel %vm2970, %v4274, 0.0
      %v4608 = vadd.f32 %v4606, %v4607
      %v4609 = vsel %vm2970, %v4280, 0.0
      %v4610 = vadd.f32 %v4608, %v4609
      %v4611 = vsel %vm2970, %v4284, 0.0
      %v4612 = vadd.f32 %v4610, %v4611
      %v4613 = vrot.slane %v4612, 4
      %v4614 = vadd.f32 %v4612, %v4613
      %v4615 = vrot.slane %v4614, 2
      %v4616 = vadd.f32 %v4614, %v4615
      %v4617 = vrot.slane %v4616, 1
      %v4618 = vadd.f32 %v4616, %v4617
      %v4619 = vmul.f32 %v4128, %v4128
      %v4620 = vmul.f32 %v4130, %v4130
      %v4621 = vmul.f32 %v4132, %v4132
      %v4622 = vmul.f32 %v4134, %v4134
      %v4623 = vmul.f32 %v4138, %v4138
      %v4624 = vmul.f32 %v4140, %v4140
      %v4625 = vmul.f32 %v4142, %v4142
      %v4626 = vmul.f32 %v4144, %v4144
      %v4627 = vmul.f32 %v4148, %v4148
      %v4628 = vmul.f32 %v4150, %v4150
      %v4629 = vmul.f32 %v4152, %v4152
      %v4630 = vmul.f32 %v4154, %v4154
      %v4631 = vmul.f32 %v4158, %v4158
      %v4632 = vmul.f32 %v4160, %v4160
      %v4633 = vmul.f32 %v4162, %v4162
      %v4634 = vmul.f32 %v4164, %v4164
      %v4635 = vmul.f32 %v4168, %v4168
      %v4636 = vmul.f32 %v4170, %v4170
      %v4637 = vmul.f32 %v4172, %v4172
      %v4638 = vmul.f32 %v4174, %v4174
      %v4639 = vmul.f32 %v4178, %v4178
      %v4640 = vmul.f32 %v4180, %v4180
      %v4641 = vmul.f32 %v4182, %v4182
      %v4642 = vmul.f32 %v4184, %v4184
      %v4643 = vmul.f32 %v4188, %v4188
      %v4644 = vmul.f32 %v4190, %v4190
      %v4645 = vmul.f32 %v4192, %v4192
      %v4646 = vmul.f32 %v4194, %v4194
      %v4647 = vmul.f32 %v4198, %v4198
      %v4648 = vmul.f32 %v4200, %v4200
      %v4649 = vmul.f32 %v4202, %v4202
      %v4650 = vmul.f32 %v4204, %v4204
      %v4651 = vmul.f32 %v4208, %v4208
      %v4652 = vmul.f32 %v4210, %v4210
      %v4653 = vmul.f32 %v4212, %v4212
      %v4654 = vmul.f32 %v4214, %v4214
      %v4655 = vmul.f32 %v4218, %v4218
      %v4656 = vmul.f32 %v4220, %v4220
      %v4657 = vmul.f32 %v4222, %v4222
      %v4658 = vmul.f32 %v4224, %v4224
      %v4659 = vmul.f32 %v4228, %v4228
      %v4660 = vmul.f32 %v4230, %v4230
      %v4661 = vmul.f32 %v4232, %v4232
      %v4662 = vmul.f32 %v4234, %v4234
      %v4663 = vmul.f32 %v4238, %v4238
      %v4664 = vmul.f32 %v4240, %v4240
      %v4665 = vmul.f32 %v4242, %v4242
      %v4666 = vmul.f32 %v4244, %v4244
      %v4667 = vmul.f32 %v4248, %v4248
      %v4668 = vmul.f32 %v4250, %v4250
      %v4669 = vmul.f32 %v4252, %v4252
      %v4670 = vmul.f32 %v4254, %v4254
      %v4671 = vmul.f32 %v4258, %v4258
      %v4672 = vmul.f32 %v4260, %v4260
      %v4673 = vmul.f32 %v4262, %v4262
      %v4674 = vmul.f32 %v4264, %v4264
      %v4675 = vmul.f32 %v4268, %v4268
      %v4676 = vmul.f32 %v4270, %v4270
      %v4677 = vmul.f32 %v4272, %v4272
      %v4678 = vmul.f32 %v4274, %v4274
      %v4679 = vmul.f32 %v4278, %v4278
      %v4680 = vmul.f32 %v4280, %v4280
      %v4681 = vmul.f32 %v4282, %v4282
      %v4682 = vmul.f32 %v4284, %v4284
      %v4683 = vadd.f32 %v4619, %v4621
      %v4684 = vadd.f32 %v4683, %v4623
      %v4685 = vadd.f32 %v4684, %v4625
      %v4686 = vadd.f32 %v4685, %v4627
      %v4687 = vadd.f32 %v4686, %v4629
      %v4688 = vadd.f32 %v4687, %v4631
      %v4689 = vadd.f32 %v4688, %v4633
      %v4690 = vadd.f32 %v4689, %v4635
      %v4691 = vadd.f32 %v4690, %v4637
      %v4692 = vadd.f32 %v4691, %v4639
      %v4693 = vadd.f32 %v4692, %v4641
      %v4694 = vadd.f32 %v4693, %v4643
      %v4695 = vadd.f32 %v4694, %v4645
      %v4696 = vadd.f32 %v4695, %v4647
      %v4697 = vadd.f32 %v4696, %v4649
      %v4698 = vadd.f32 %v4697, %v4651
      %v4699 = vadd.f32 %v4698, %v4653
      %v4700 = vadd.f32 %v4699, %v4655
      %v4701 = vadd.f32 %v4700, %v4657
      %v4702 = vadd.f32 %v4701, %v4659
      %v4703 = vadd.f32 %v4702, %v4661
      %v4704 = vadd.f32 %v4703, %v4663
      %v4705 = vadd.f32 %v4704, %v4665
      %v4706 = vadd.f32 %v4705, %v4667
      %v4707 = vadd.f32 %v4706, %v4669
      %v4708 = vadd.f32 %v4707, %v4671
      %v4709 = vadd.f32 %v4708, %v4673
      %v4710 = vadd.f32 %v4709, %v4675
      %v4711 = vadd.f32 %v4710, %v4677
      %v4712 = vadd.f32 %v4711, %v4679
      %v4713 = vadd.f32 %v4712, %v4681
      %v4714 = vrot.slane %v4713, 4
      %v4715 = vadd.f32 %v4713, %v4714
      %v4716 = vrot.slane %v4715, 2
      %v4717 = vadd.f32 %v4715, %v4716
      %v4718 = vrot.slane %v4717, 1
      %v4719 = vadd.f32 %v4717, %v4718
      %v4720 = vsel %vm2970, %v4620, 0.0
      %v4721 = vsel %vm2970, %v4622, 0.0
      %v4722 = vadd.f32 %v4720, %v4721
      %v4723 = vsel %vm2970, %v4624, 0.0
      %v4724 = vadd.f32 %v4722, %v4723
      %v4725 = vsel %vm2970, %v4626, 0.0
      %v4726 = vadd.f32 %v4724, %v4725
      %v4727 = vsel %vm2970, %v4628, 0.0
      %v4728 = vadd.f32 %v4726, %v4727
      %v4729 = vsel %vm2970, %v4630, 0.0
      %v4730 = vadd.f32 %v4728, %v4729
      %v4731 = vsel %vm2970, %v4632, 0.0
      %v4732 = vadd.f32 %v4730, %v4731
      %v4733 = vsel %vm2970, %v4634, 0.0
      %v4734 = vadd.f32 %v4732, %v4733
      %v4735 = vsel %vm2970, %v4636, 0.0
      %v4736 = vadd.f32 %v4734, %v4735
      %v4737 = vsel %vm2970, %v4638, 0.0
      %v4738 = vadd.f32 %v4736, %v4737
      %v4739 = vsel %vm2970, %v4640, 0.0
      %v4740 = vadd.f32 %v4738, %v4739
      %v4741 = vsel %vm2970, %v4642, 0.0
      %v4742 = vadd.f32 %v4740, %v4741
      %v4743 = vsel %vm2970, %v4644, 0.0
      %v4744 = vadd.f32 %v4742, %v4743
      %v4745 = vsel %vm2970, %v4646, 0.0
      %v4746 = vadd.f32 %v4744, %v4745
      %v4747 = vsel %vm2970, %v4648, 0.0
      %v4748 = vadd.f32 %v4746, %v4747
      %v4749 = vsel %vm2970, %v4650, 0.0
      %v4750 = vadd.f32 %v4748, %v4749
      %v4751 = vsel %vm2970, %v4652, 0.0
      %v4752 = vadd.f32 %v4750, %v4751
      %v4753 = vsel %vm2970, %v4654, 0.0
      %v4754 = vadd.f32 %v4752, %v4753
      %v4755 = vsel %vm2970, %v4656, 0.0
      %v4756 = vadd.f32 %v4754, %v4755
      %v4757 = vsel %vm2970, %v4658, 0.0
      %v4758 = vadd.f32 %v4756, %v4757
      %v4759 = vsel %vm2970, %v4660, 0.0
      %v4760 = vadd.f32 %v4758, %v4759
      %v4761 = vsel %vm2970, %v4662, 0.0
      %v4762 = vadd.f32 %v4760, %v4761
      %v4763 = vsel %vm2970, %v4664, 0.0
      %v4764 = vadd.f32 %v4762, %v4763
      %v4765 = vsel %vm2970, %v4666, 0.0
      %v4766 = vadd.f32 %v4764, %v4765
      %v4767 = vsel %vm2970, %v4668, 0.0
      %v4768 = vadd.f32 %v4766, %v4767
      %v4769 = vsel %vm2970, %v4670, 0.0
      %v4770 = vadd.f32 %v4768, %v4769
      %v4771 = vsel %vm2970, %v4672, 0.0
      %v4772 = vadd.f32 %v4770, %v4771
      %v4773 = vsel %vm2970, %v4674, 0.0
      %v4774 = vadd.f32 %v4772, %v4773
      %v4775 = vsel %vm2970, %v4676, 0.0
      %v4776 = vadd.f32 %v4774, %v4775
      %v4777 = vsel %vm2970, %v4678, 0.0
      %v4778 = vadd.f32 %v4776, %v4777
      %v4779 = vsel %vm2970, %v4680, 0.0
      %v4780 = vadd.f32 %v4778, %v4779
      %v4781 = vsel %vm2970, %v4682, 0.0
      %v4782 = vadd.f32 %v4780, %v4781
      %v4783 = vrot.slane %v4782, 4
      %v4784 = vadd.f32 %v4782, %v4783
      %v4785 = vrot.slane %v4784, 2
      %v4786 = vadd.f32 %v4784, %v4785
      %v4787 = vrot.slane %v4786, 1
      %v4788 = vadd.f32 %v4786, %v4787
      %vm4789 = vcmask 1040384
      %v4790 = vsel %vm4789, %v4549, %v4719
      %v4791 = vsel %vm4789, %v4618, %v4788
      %v4794 = vcombine.low %v4790, %v4791
      %v4796 = vunpack.c.l.s4 1983009808
      %v4797 = vunpack.c.0.s8 %v4796
      %v4798 = vlaneseq
      %v4799 = vshrl.u32 %v4798, 7
      %v4800 = vsub.s32 %v4797, %v4799
      %v4801 = vrot.slane %v4794, %v4800
      %vm4803 = vcmask 1041408
      %vm4804 = vcmask 519170
      %vm4805 = vmor %vm4804, %vm4803
      %4806 = vst.msk [vmem:[%s416] sm:$0xf] %vm4805, %v4801
      %p4807 = scmp.lt.s32.totalorder %s21, 1
      %s4808 = scalar_select %p4807, %s21, 1
      %p4809 = scmp.lt.s32.totalorder %s22, 0
      %s4810 = scalar_select %p4809, %s22, 0
      %s4811 = smul.addr %s4810, 64
      %s4812 = smul.addr %s4808, 64
      %s4813 = sadd.s32 %s4811, %s4812
      %s4814 = smul.addr %s4813, 4
      %s4815 = scalar_lea.vmem %s4, %s4814
      %p4816 = scmp.lt.s32.totalorder %s21, 1
      %s4817 = scalar_select %p4816, %s21, 1
      %p4818 = scmp.lt.s32.totalorder %s22, 0
      %s4819 = scalar_select %p4818, %s22, 0
      %s4820 = smul.addr %s4819, 2
      %s4821 = smul.addr %s4817, 2
      %s4822 = sadd.s32 %s4820, %s4821
      %s4823 = smul.addr %s4822, 2
      %s4824 = scalar_lea.vmem %s5, %s4823
      // Predicated region
      $region37: #{efficientnet_head_forward.2} parent=35 // pred_check
        %p4825 = pneg %p164
      $region38: #{efficientnet_head_forward.2} parent=35 // pred_check_branch
        %4827 = sbr.rel (%p4825) target = $region40
      $region39: #{efficientnet_head_forward.2} parent=35 // pred_region
        _
      $region40: #{efficientnet_head_forward.2} parent=35 // pred_fallthru
        _
      // Predicated region
      $region41: #{efficientnet_head_forward.2} parent=35 // pred_check
        %p4828 = pneg %p192
      $region42: #{efficientnet_head_forward.2} parent=35 // pred_check_branch
        %4830 = sbr.rel (%p4828) target = $region44
      $region43: #{efficientnet_head_forward.2} parent=35 // pred_region
        _
      $region44: #{efficientnet_head_forward.2} parent=35 // pred_fallthru
        _
    $region36: #{efficientnet_head_forward.2} parent=5 // pred_fallthru
      _
    %p4831 = scmp.le.s32.totalorder 2, %s12
    // Predicated region
    $region45: #{efficientnet_head_forward.2} parent=5 // pred_check
      %p4832 = pneg %p4831
    $region46: #{efficientnet_head_forward.2} parent=5 // pred_check_branch
      %4834 = sbr.rel (%p4832) target = $region48
    $region47: #{efficientnet_head_forward.2} parent=5 // pred_region
      %s4835 = ssub.s32 %s12, 2
      // Predicated region
      $region49: #{efficientnet_head_forward.2} parent=47 // pred_check
        %p4836 = pneg %p170
      $region50: #{efficientnet_head_forward.2} parent=47 // pred_check_branch
        %4838 = sbr.rel (%p4836) target = $region52
      $region51: #{efficientnet_head_forward.2} parent=47 // pred_region
        %p4839 = scmp.lt.s32.totalorder %s23, 1
        %s4840 = scalar_select %p4839, %s23, 1
        %p4841 = scmp.lt.s32.totalorder %s24, 0
        %s4842 = scalar_select %p4841, %s24, 0
        %s4843 = smul.addr %s4842, 64
        %s4844 = smul.addr %s4840, 64
        %s4845 = sadd.s32 %s4843, %s4844
        %s4846 = smul.addr %s4845, 4
        %s4847 = scalar_lea.vmem %s4, %s4846
      $region52: #{efficientnet_head_forward.2} parent=47 // pred_fallthru
        _
      // Predicated region
      $region53: #{efficientnet_head_forward.2} parent=47 // pred_check
        %p4848 = pneg %p198
      $region54: #{efficientnet_head_forward.2} parent=47 // pred_check_branch
        %4850 = sbr.rel (%p4848) target = $region56
      $region55: #{efficientnet_head_forward.2} parent=47 // pred_region
        %p4851 = scmp.lt.s32.totalorder %s23, 1
        %s4852 = scalar_select %p4851, %s23, 1
        %p4853 = scmp.lt.s32.totalorder %s24, 0
        %s4854 = scalar_select %p4853, %s24, 0
        %s4855 = smul.addr %s4854, 2
        %s4856 = smul.addr %s4852, 2
        %s4857 = sadd.s32 %s4855, %s4856
        %s4858 = smul.addr %s4857, 2
        %s4859 = scalar_lea.vmem %s5, %s4858
      $region56: #{efficientnet_head_forward.2} parent=47 // pred_fallthru
        _
    $region48: #{efficientnet_head_forward.2} parent=5 // pred_fallthru
      _
  $region6: #{efficientnet_head_forward.2} parent=0 // loop_footer
    %s16 = sadd.s32 1, %s12
  $region7: #{efficientnet_head_forward.2} parent=0 // loop_footer_branch
    %11 = sbr.rel target = $region3
  $region8: #{efficientnet_head_forward.2} parent=0 // loop_exit
    _

</llo_original>
